<compile_context>
chip_gen: v6e
topology: v6e:2x2x1
jax: 0.10.0
libtpu: 0.0.40
codegen_flags: <defaults>
</compile_context>

<pallas_src>
import math

import jax
import jax.numpy as jnp
from jax.experimental import pallas as pl
from jax.experimental.pallas import tpu as pltpu

# ----- module hyper-parameters (small, consistent with the PyTorch module) ---
BATCH     = 2
SEQ       = 8
D_MODEL   = 32
NUM_HEADS = 4
D_K       = D_MODEL // NUM_HEADS
SCALE     = 1.0 / math.sqrt(D_K)


# -----------------------------------------------------------------------------
# Pallas kernel: whole MHA forward in a single invocation (no grid).
# All batched tensors carry a leading group axis g = (batch, head),
# G = BATCH * NUM_HEADS, so every matmul is one batched contraction.
# -----------------------------------------------------------------------------
def mha_kernel(q_ref, k_ref, v_ref,
               wq_ref, bq_ref, wk_ref, bk_ref, wv_ref, bv_ref,
               wo_ref, bo_ref,
               o_ref):
    # Load every operand exactly once.
    qg, kg, vg = q_ref[...], k_ref[...], v_ref[...]          # (G, S, D)
    wq, wk, wv = wq_ref[...], wk_ref[...], wv_ref[...]       # (G, D, DK)
    bq, bk, bv = bq_ref[...], bk_ref[...], bv_ref[...]       # (G, 1, DK)
    wo, bo = wo_ref[...], bo_ref[...]                        # (G, DK, D), (1, 1, D)

    # Per-(batch, head) q/k/v projections — one batched contraction each.
    qh = jnp.einsum('gsd,gdk->gsk', qg, wq, preferred_element_type=jnp.float32) + bq
    kh = jnp.einsum('gsd,gdk->gsk', kg, wk, preferred_element_type=jnp.float32) + bk
    vh = jnp.einsum('gsd,gdk->gsk', vg, wv, preferred_element_type=jnp.float32) + bv

    # Scaled dot-product attention, batched over all (batch, head) groups.
    s = jnp.einsum('gqd,gkd->gqk', qh, kh, preferred_element_type=jnp.float32) * SCALE
    # TODO(synk): optional attention mask not implemented (mask=None path only).
    s = s - jnp.max(s, axis=-1, keepdims=True)
    e = jnp.exp(s)
    p = e * pl.reciprocal(jnp.sum(e, axis=-1, keepdims=True), approx=True)
    # TODO(synk): dropout on attention weights is identity (eval mode);
    #             self.attention_weights caching (side effect) not reproduced.
    ctx = jnp.einsum('gqk,gkd->gqd', p, vh, preferred_element_type=jnp.float32)  # (G,S,DK)

    # combine_heads + output_linear folded per head (no transpose / concat):
    #   out[b] = sum_h ctx[(b,h)] @ Wo.T[h*DK:(h+1)*DK, :] + bo
    out_g = jnp.einsum('gsd,gdn->gsn', ctx, wo, preferred_element_type=jnp.float32)
    G, S, _ = ctx.shape
    B, _, D = o_ref.shape
    H = G // B
    out = jnp.sum(out_g.reshape(B, H, S, D), axis=1) + bo     # (B, S, D)
    o_ref[...] = out.astype(o_ref.dtype)


# -----------------------------------------------------------------------------
# wrapper: host-side layout prep (free/tiny) + single pallas_call
# -----------------------------------------------------------------------------
def multi_head_attention(q, k, v, params):
    """q, k, v: (B, S, D) float32.  params: PyTorch-layout (out,in) weights."""
    wq, bq, wk, bk, wv, bv, wo, bo = params
    B, S, D = q.shape
    H, DK = NUM_HEADS, D_K
    G = B * H

    def tile_x(x):                       # (B,S,D) -> (G,S,D), replicate over heads
        return jnp.broadcast_to(x[:, None], (B, H, S, D)).reshape(G, S, D)

    def tile_w_in(w):                    # torch (out,in) -> per-head (G, D, DK)
        wh = w.T.reshape(D, H, DK).transpose(1, 0, 2)          # (H, D, DK)
        return jnp.broadcast_to(wh[None], (B, H, D, DK)).reshape(G, D, DK)

    def tile_b_in(b):                    # (D,) -> (G, 1, DK)
        bh = b.reshape(1, H, 1, DK)
        return jnp.broadcast_to(bh, (B, H, 1, DK)).reshape(G, 1, DK)

    wo_g = jnp.broadcast_to(wo.T.reshape(H, DK, D)[None],
                            (B, H, DK, D)).reshape(G, DK, D)   # (G, DK, D)
    bo_g = bo.reshape(1, 1, D)

    args = (tile_x(q), tile_x(k), tile_x(v),
            tile_w_in(wq), tile_b_in(bq),
            tile_w_in(wk), tile_b_in(bk),
            tile_w_in(wv), tile_b_in(bv),
            wo_g, bo_g)

    return pl.pallas_call(
        mha_kernel,
        out_shape=jax.ShapeDtypeStruct((B, S, D), q.dtype),
        in_specs=[pl.BlockSpec(memory_space=pltpu.MemorySpace.VMEM) for _ in args],
        out_specs=pl.BlockSpec(memory_space=pltpu.MemorySpace.VMEM),
    )(*args)


# -----------------------------------------------------------------------------
# deterministic parameter construction (mimics nn.Linear defaults)
# -----------------------------------------------------------------------------
def _linear_params(key, d_in, d_out):
    kw, kb = jax.random.split(key)
    bound = 1.0 / math.sqrt(d_in)
    w = jax.random.uniform(kw, (d_out, d_in), jnp.float32, -bound, bound)  # torch (out,in)
    b = jax.random.uniform(kb, (d_out,), jnp.float32, -bound, bound)
    return w, b


def make_params(key):
    kq, kk, kv, ko = jax.random.split(key, 4)
    wq, bq = _linear_params(kq, D_MODEL, D_MODEL)
    wk, bk = _linear_params(kk, D_MODEL, D_MODEL)
    wv, bv = _linear_params(kv, D_MODEL, D_MODEL)
    wo, bo = _linear_params(ko, D_MODEL, D_MODEL)
    return (wq, bq, wk, bk, wv, bv, wo, bo)


# -----------------------------------------------------------------------------
# pure-JAX reference (mirrors the PyTorch module, for correctness check)
# -----------------------------------------------------------------------------
def ref_mha(q, k, v, params):
    wq, bq, wk, bk, wv, bv, wo, bo = params
    B, S, D = q.shape
    H, DK = NUM_HEADS, D_K

    def split_heads(x):
        return x.reshape(B, S, H, DK).transpose(0, 2, 1, 3)

    qh = split_heads(q @ wq.T + bq)
    kh = split_heads(k @ wk.T + bk)
    vh = split_heads(v @ wv.T + bv)
    s = jnp.einsum('bhqd,bhkd->bhqk', qh, kh) / math.sqrt(DK)
    p = jax.nn.softmax(s, axis=-1)
    ctx = jnp.einsum('bhqk,bhkd->bhqd', p, vh)
    ctx = ctx.transpose(0, 2, 1, 3).reshape(B, S, D)
    return ctx @ wo.T + bo


# -----------------------------------------------------------------------------
if __name__ == "__main__":
    key = jax.random.PRNGKey(0)
    kq, kk, kv, kp = jax.random.split(key, 4)

    q = jax.random.normal(kq, (BATCH, SEQ, D_MODEL), jnp.float32)
    k = jax.random.normal(kk, (BATCH, SEQ, D_MODEL), jnp.float32)
    v = jax.random.normal(kv, (BATCH, SEQ, D_MODEL), jnp.float32)
    params = make_params(kp)

    out = multi_head_attention(q, k, v, params)
    out = jax.block_until_ready(out)

    ref = ref_mha(q, k, v, params)
    assert out.shape == (BATCH, SEQ, D_MODEL)
    assert jnp.allclose(out, ref, atol=2e-3, rtol=2e-3), "mismatch vs JAX reference"

    print("KERNEL_OK")
</pallas_src>

<mosaic_0001>
module attributes {stable_mosaic.version = 11 : i64} {
  func.func @mha_kernel(%arg0: memref<8x8x32xf32, #tpu.memory_space<vmem>>, %arg1: memref<8x8x32xf32, #tpu.memory_space<vmem>>, %arg2: memref<8x8x32xf32, #tpu.memory_space<vmem>>, %arg3: memref<8x32x8xf32, #tpu.memory_space<vmem>>, %arg4: memref<8x1x8xf32, #tpu.memory_space<vmem>>, %arg5: memref<8x32x8xf32, #tpu.memory_space<vmem>>, %arg6: memref<8x1x8xf32, #tpu.memory_space<vmem>>, %arg7: memref<8x32x8xf32, #tpu.memory_space<vmem>>, %arg8: memref<8x1x8xf32, #tpu.memory_space<vmem>>, %arg9: memref<8x8x32xf32, #tpu.memory_space<vmem>>, %arg10: memref<1x1x32xf32, #tpu.memory_space<vmem>>, %arg11: memref<2x8x32xf32, #tpu.memory_space<vmem>>) attributes {dimension_semantics = [], scalar_prefetch = 0 : i64, scratch_operands = 0 : i64, tpu.core_type = #tpu.core_type<tc>} {
    %c0 = arith.constant 0 : index
    %c0_0 = arith.constant 0 : index
    %c0_1 = arith.constant 0 : index
    %0 = vector.load %arg0[%c0, %c0_0, %c0_1] : memref<8x8x32xf32, #tpu.memory_space<vmem>>, vector<8x8x32xf32>
    %c0_2 = arith.constant 0 : index
    %c0_3 = arith.constant 0 : index
    %c0_4 = arith.constant 0 : index
    %1 = vector.load %arg1[%c0_2, %c0_3, %c0_4] : memref<8x8x32xf32, #tpu.memory_space<vmem>>, vector<8x8x32xf32>
    %c0_5 = arith.constant 0 : index
    %c0_6 = arith.constant 0 : index
    %c0_7 = arith.constant 0 : index
    %2 = vector.load %arg2[%c0_5, %c0_6, %c0_7] : memref<8x8x32xf32, #tpu.memory_space<vmem>>, vector<8x8x32xf32>
    %c0_8 = arith.constant 0 : index
    %c0_9 = arith.constant 0 : index
    %c0_10 = arith.constant 0 : index
    %3 = vector.load %arg3[%c0_8, %c0_9, %c0_10] : memref<8x32x8xf32, #tpu.memory_space<vmem>>, vector<8x32x8xf32>
    %c0_11 = arith.constant 0 : index
    %c0_12 = arith.constant 0 : index
    %c0_13 = arith.constant 0 : index
    %4 = vector.load %arg5[%c0_11, %c0_12, %c0_13] : memref<8x32x8xf32, #tpu.memory_space<vmem>>, vector<8x32x8xf32>
    %c0_14 = arith.constant 0 : index
    %c0_15 = arith.constant 0 : index
    %c0_16 = arith.constant 0 : index
    %5 = vector.load %arg7[%c0_14, %c0_15, %c0_16] : memref<8x32x8xf32, #tpu.memory_space<vmem>>, vector<8x32x8xf32>
    %c0_17 = arith.constant 0 : index
    %c0_18 = arith.constant 0 : index
    %c0_19 = arith.constant 0 : index
    %6 = vector.load %arg4[%c0_17, %c0_18, %c0_19] : memref<8x1x8xf32, #tpu.memory_space<vmem>>, vector<8x1x8xf32>
    %c0_20 = arith.constant 0 : index
    %c0_21 = arith.constant 0 : index
    %c0_22 = arith.constant 0 : index
    %7 = vector.load %arg6[%c0_20, %c0_21, %c0_22] : memref<8x1x8xf32, #tpu.memory_space<vmem>>, vector<8x1x8xf32>
    %c0_23 = arith.constant 0 : index
    %c0_24 = arith.constant 0 : index
    %c0_25 = arith.constant 0 : index
    %8 = vector.load %arg8[%c0_23, %c0_24, %c0_25] : memref<8x1x8xf32, #tpu.memory_space<vmem>>, vector<8x1x8xf32>
    %c0_26 = arith.constant 0 : index
    %c0_27 = arith.constant 0 : index
    %c0_28 = arith.constant 0 : index
    %9 = vector.load %arg9[%c0_26, %c0_27, %c0_28] : memref<8x8x32xf32, #tpu.memory_space<vmem>>, vector<8x8x32xf32>
    %c0_29 = arith.constant 0 : index
    %c0_30 = arith.constant 0 : index
    %c0_31 = arith.constant 0 : index
    %10 = vector.load %arg10[%c0_29, %c0_30, %c0_31] : memref<1x1x32xf32, #tpu.memory_space<vmem>>, vector<1x1x32xf32>
    "tpu.trace_start"() <{level = 10 : i32, message = "gsd,gdk->gsk"}> : () -> ()
    %cst = arith.constant dense<0.000000e+00> : vector<8x8x8xf32>
    %11 = tpu.matmul %0, %3, %cst {dimension_numbers = #tpu.dot_dimension_numbers<[2], [1], [1], [2], [0, 0, 0, 1, 1, 2], [0], [0]>} : vector<8x8x32xf32>, vector<8x32x8xf32>, vector<8x8x8xf32> -> vector<8x8x8xf32>
    "tpu.trace_stop"() : () -> ()
    %12 = vector.broadcast %6 : vector<8x1x8xf32> to vector<8x8x8xf32>
    %13 = arith.addf %11, %12 : vector<8x8x8xf32>
    "tpu.trace_start"() <{level = 10 : i32, message = "gsd,gdk->gsk"}> : () -> ()
    %cst_32 = arith.constant dense<0.000000e+00> : vector<8x8x8xf32>
    %14 = tpu.matmul %1, %4, %cst_32 {dimension_numbers = #tpu.dot_dimension_numbers<[2], [1], [1], [2], [0, 0, 0, 1, 1, 2], [0], [0]>} : vector<8x8x32xf32>, vector<8x32x8xf32>, vector<8x8x8xf32> -> vector<8x8x8xf32>
    "tpu.trace_stop"() : () -> ()
    %15 = vector.broadcast %7 : vector<8x1x8xf32> to vector<8x8x8xf32>
    %16 = arith.addf %14, %15 : vector<8x8x8xf32>
    "tpu.trace_start"() <{level = 10 : i32, message = "gsd,gdk->gsk"}> : () -> ()
    %cst_33 = arith.constant dense<0.000000e+00> : vector<8x8x8xf32>
    %17 = tpu.matmul %2, %5, %cst_33 {dimension_numbers = #tpu.dot_dimension_numbers<[2], [1], [1], [2], [0, 0, 0, 1, 1, 2], [0], [0]>} : vector<8x8x32xf32>, vector<8x32x8xf32>, vector<8x8x8xf32> -> vector<8x8x8xf32>
    "tpu.trace_stop"() : () -> ()
    %18 = vector.broadcast %8 : vector<8x1x8xf32> to vector<8x8x8xf32>
    %19 = arith.addf %17, %18 : vector<8x8x8xf32>
    "tpu.trace_start"() <{level = 10 : i32, message = "gqd,gkd->gqk"}> : () -> ()
    %cst_34 = arith.constant dense<0.000000e+00> : vector<8x8x8xf32>
    %20 = tpu.matmul %13, %16, %cst_34 {dimension_numbers = #tpu.dot_dimension_numbers<[2], [2], [1], [1], [0, 0, 0, 1, 1, 1], [0], [0]>} : vector<8x8x8xf32>, vector<8x8x8xf32>, vector<8x8x8xf32> -> vector<8x8x8xf32>
    "tpu.trace_stop"() : () -> ()
    %cst_35 = arith.constant 0.353553385 : f32
    %21 = vector.broadcast %cst_35 : f32 to vector<8x8x8xf32>
    %22 = arith.mulf %20, %21 : vector<8x8x8xf32>
    %cst_36 = arith.constant dense<0xFF800000> : vector<8x8xf32>
    %23 = vector.multi_reduction <maximumf>, %22, %cst_36 [2] : vector<8x8x8xf32> to vector<8x8xf32>
    %24 = vector.shape_cast %23 : vector<8x8xf32> to vector<8x8x1xf32>
    %25 = vector.broadcast %24 : vector<8x8x1xf32> to vector<8x8x8xf32>
    %26 = arith.subf %22, %25 : vector<8x8x8xf32>
    %27 = math.exp %26 : vector<8x8x8xf32>
    %cst_37 = arith.constant dense<0.000000e+00> : vector<8x8xf32>
    %28 = vector.multi_reduction <add>, %27, %cst_37 [2] : vector<8x8x8xf32> to vector<8x8xf32>
    %29 = vector.shape_cast %28 : vector<8x8xf32> to vector<8x8x1xf32>
    %30 = tpu.reciprocal %29 {approx = true} : vector<8x8x1xf32> -> vector<8x8x1xf32>
    %31 = vector.broadcast %30 : vector<8x8x1xf32> to vector<8x8x8xf32>
    %32 = arith.mulf %27, %31 : vector<8x8x8xf32>
    "tpu.trace_start"() <{level = 10 : i32, message = "gqk,gkd->gqd"}> : () -> ()
    %cst_38 = arith.constant dense<0.000000e+00> : vector<8x8x8xf32>
    %33 = tpu.matmul %32, %19, %cst_38 {dimension_numbers = #tpu.dot_dimension_numbers<[2], [1], [1], [2], [0, 0, 0, 1, 1, 2], [0], [0]>} : vector<8x8x8xf32>, vector<8x8x8xf32>, vector<8x8x8xf32> -> vector<8x8x8xf32>
    "tpu.trace_stop"() : () -> ()
    "tpu.trace_start"() <{level = 10 : i32, message = "gsd,gdn->gsn"}> : () -> ()
    %cst_39 = arith.constant dense<0.000000e+00> : vector<8x8x32xf32>
    %34 = tpu.matmul %33, %9, %cst_39 {dimension_numbers = #tpu.dot_dimension_numbers<[2], [1], [1], [2], [0, 0, 0, 1, 1, 2], [0], [0]>} : vector<8x8x8xf32>, vector<8x8x32xf32>, vector<8x8x32xf32> -> vector<8x8x32xf32>
    "tpu.trace_stop"() : () -> ()
    %35 = vector.shape_cast %34 : vector<8x8x32xf32> to vector<2x4x8x32xf32>
    %cst_40 = arith.constant dense<0.000000e+00> : vector<2x8x32xf32>
    %36 = vector.multi_reduction <add>, %35, %cst_40 [1] : vector<2x4x8x32xf32> to vector<2x8x32xf32>
    %37 = vector.broadcast %10 : vector<1x1x32xf32> to vector<2x8x32xf32>
    %38 = arith.addf %36, %37 : vector<2x8x32xf32>
    %c0_41 = arith.constant 0 : index
    %c0_42 = arith.constant 0 : index
    %c0_43 = arith.constant 0 : index
    %39 = vector.load %arg11[%c0_41, %c0_42, %c0_43] : memref<2x8x32xf32, #tpu.memory_space<vmem>>, vector<2x8x32xf32>
    tpu.vector_store %arg11[%c0_41, %c0_42, %c0_43], %38 {strides = array<i32>} : memref<2x8x32xf32, #tpu.memory_space<vmem>>, vector<2x8x32xf32>,
    return
  }
}

</mosaic_0001>

<llo_original>
// kernel: tpu_custom_call.1
$region0: #{tpu_custom_call.1}
  #allocation0 [shape = 'u32[]', space=smem, size = 0x4, offset = 0x4, fixed_abs, tag = 'smem constant byte address 0x4 - core index']
  #allocation1 [shape = 'u32[144,128]{1,0:T(1,128)}', space=vmem, size = 0x12000, scoped, tag = 'internal scratch']
  %s0 = inlined_call_operand.vmem [shape: f32[8,8,32], index: 0, kind: input, shape index: {}]
  %s1 = inlined_call_operand.vmem [shape: f32[8,8,32], index: 1, kind: input, shape index: {}]
  %s2 = inlined_call_operand.vmem [shape: f32[8,8,32], index: 2, kind: input, shape index: {}]
  %s3 = inlined_call_operand.vmem [shape: f32[8,32,8], index: 3, kind: input, shape index: {}]
  %s4 = inlined_call_operand.vmem [shape: f32[8,1,8], index: 4, kind: input, shape index: {}]
  %s5 = inlined_call_operand.vmem [shape: f32[8,32,8], index: 5, kind: input, shape index: {}]
  %s6 = inlined_call_operand.vmem [shape: f32[8,1,8], index: 6, kind: input, shape index: {}]
  %s7 = inlined_call_operand.vmem [shape: f32[8,32,8], index: 7, kind: input, shape index: {}]
  %s8 = inlined_call_operand.vmem [shape: f32[8,1,8], index: 8, kind: input, shape index: {}]
  %s9 = inlined_call_operand.vmem [shape: f32[8,8,32], index: 9, kind: input, shape index: {}]
  %s10 = inlined_call_operand.vmem [shape: f32[1,1,32], index: 10, kind: input, shape index: {}]
  %s11 = inlined_call_operand.hbm [shape: f32[2,8,32], index: 11, kind: output, shape index: {}]
  %s12 = sld [smem:[#allocation0]]
  $region54: #{tpu_custom_call.1} parent=0
    _
  %s14 = ssub.s32 1, %s12
  %s15 = scalar_select 0, %s14, %s12
  $region1: #{tpu_custom_call.1} parent=0
    #allocation2 [shape = 'u8[8192]{0}', space=vmem, size = 0x2000, scoped, tag = 'output window, operand 0, single buffered']
    #allocation3 [shape = 's32[1]{0}', space=sflag, size = 0x4, scoped, tag = 'scoped memory for tpu_custom_call.1']
    %16 = vsyncpa [#allocation3], 0
    // Predicated region
    $region2: #{tpu_custom_call.1} parent=1 // pred_check
      _
    $region3: #{tpu_custom_call.1} parent=1 // pred_check_branch
      %18 = sbr.rel (0) target = $region5
    $region4: #{tpu_custom_call.1} parent=1 // pred_region
      _
    $region5: #{tpu_custom_call.1} parent=1 // pred_fallthru
      _
    // Predicated region
    $region6: #{tpu_custom_call.1} parent=1 // pred_check
      _
    $region7: #{tpu_custom_call.1} parent=1 // pred_check_branch
      %20 = sbr.rel (0) target = $region9
    $region8: #{tpu_custom_call.1} parent=1 // pred_region
      _
    $region9: #{tpu_custom_call.1} parent=1 // pred_fallthru
      _
    // Predicated region
    $region10: #{tpu_custom_call.1} parent=1 // pred_check
      _
    $region11: #{tpu_custom_call.1} parent=1 // pred_check_branch
      %22 = sbr.rel (0) target = $region13
    $region12: #{tpu_custom_call.1} parent=1 // pred_region
      _
    $region13: #{tpu_custom_call.1} parent=1 // pred_fallthru
      _
    // Predicated region
    $region14: #{tpu_custom_call.1} parent=1 // pred_check
      _
    $region15: #{tpu_custom_call.1} parent=1 // pred_check_branch
      %24 = sbr.rel (0) target = $region17
    $region16: #{tpu_custom_call.1} parent=1 // pred_region
      _
    $region17: #{tpu_custom_call.1} parent=1 // pred_fallthru
      _
    // Predicated region
    $region18: #{tpu_custom_call.1} parent=1 // pred_check
      _
    $region19: #{tpu_custom_call.1} parent=1 // pred_check_branch
      %26 = sbr.rel (0) target = $region21
    $region20: #{tpu_custom_call.1} parent=1 // pred_region
      _
    $region21: #{tpu_custom_call.1} parent=1 // pred_fallthru
      _
    // Predicated region
    $region22: #{tpu_custom_call.1} parent=1 // pred_check
      _
    $region23: #{tpu_custom_call.1} parent=1 // pred_check_branch
      %28 = sbr.rel (0) target = $region25
    $region24: #{tpu_custom_call.1} parent=1 // pred_region
      _
    $region25: #{tpu_custom_call.1} parent=1 // pred_fallthru
      _
    // Predicated region
    $region26: #{tpu_custom_call.1} parent=1 // pred_check
      _
    $region27: #{tpu_custom_call.1} parent=1 // pred_check_branch
      %30 = sbr.rel (0) target = $region29
    $region28: #{tpu_custom_call.1} parent=1 // pred_region
      _
    $region29: #{tpu_custom_call.1} parent=1 // pred_fallthru
      _
    // Predicated region
    $region30: #{tpu_custom_call.1} parent=1 // pred_check
      _
    $region31: #{tpu_custom_call.1} parent=1 // pred_check_branch
      %32 = sbr.rel (0) target = $region33
    $region32: #{tpu_custom_call.1} parent=1 // pred_region
      _
    $region33: #{tpu_custom_call.1} parent=1 // pred_fallthru
      _
    // Predicated region
    $region34: #{tpu_custom_call.1} parent=1 // pred_check
      _
    $region35: #{tpu_custom_call.1} parent=1 // pred_check_branch
      %34 = sbr.rel (0) target = $region37
    $region36: #{tpu_custom_call.1} parent=1 // pred_region
      _
    $region37: #{tpu_custom_call.1} parent=1 // pred_fallthru
      _
    // Predicated region
    $region38: #{tpu_custom_call.1} parent=1 // pred_check
      _
    $region39: #{tpu_custom_call.1} parent=1 // pred_check_branch
      %36 = sbr.rel (0) target = $region41
    $region40: #{tpu_custom_call.1} parent=1 // pred_region
      _
    $region41: #{tpu_custom_call.1} parent=1 // pred_fallthru
      _
    // Predicated region
    $region42: #{tpu_custom_call.1} parent=1 // pred_check
      _
    $region43: #{tpu_custom_call.1} parent=1 // pred_check_branch
      %38 = sbr.rel (0) target = $region45
    $region44: #{tpu_custom_call.1} parent=1 // pred_region
      _
    $region45: #{tpu_custom_call.1} parent=1 // pred_fallthru
      _
    %v39 = vld [vmem:[%s0] sm:$0xff]
    %v40 = vld [vmem:[%s0 + $0x8] sm:$0xff]
    %v41 = vld [vmem:[%s0 + $0x10] sm:$0xff]
    %v42 = vld [vmem:[%s0 + $0x18] sm:$0xff]
    %v43 = vld [vmem:[%s0 + $0x20] sm:$0xff]
    %v44 = vld [vmem:[%s0 + $0x28] sm:$0xff]
    %v45 = vld [vmem:[%s0 + $0x30] sm:$0xff]
    %v46 = vld [vmem:[%s0 + $0x38] sm:$0xff]
    %v47 = vld [vmem:[%s1] sm:$0xff]
    %v48 = vld [vmem:[%s1 + $0x8] sm:$0xff]
    %v49 = vld [vmem:[%s1 + $0x10] sm:$0xff]
    %v50 = vld [vmem:[%s1 + $0x18] sm:$0xff]
    %v51 = vld [vmem:[%s1 + $0x20] sm:$0xff]
    %v52 = vld [vmem:[%s1 + $0x28] sm:$0xff]
    %v53 = vld [vmem:[%s1 + $0x30] sm:$0xff]
    %v54 = vld [vmem:[%s1 + $0x38] sm:$0xff]
    %v55 = vld [vmem:[%s2] sm:$0xff]
    %v56 = vld [vmem:[%s2 + $0x8] sm:$0xff]
    %v57 = vld [vmem:[%s2 + $0x10] sm:$0xff]
    %v58 = vld [vmem:[%s2 + $0x18] sm:$0xff]
    %v59 = vld [vmem:[%s2 + $0x20] sm:$0xff]
    %v60 = vld [vmem:[%s2 + $0x28] sm:$0xff]
    %v61 = vld [vmem:[%s2 + $0x30] sm:$0xff]
    %v62 = vld [vmem:[%s2 + $0x38] sm:$0xff]
    %v63 = vld [vmem:[%s3] sm:$0xff]
    %v64 = vld [vmem:[%s3 + $0x8] sm:$0xff]
    %v65 = vld [vmem:[%s3 + $0x10] sm:$0xff]
    %v66 = vld [vmem:[%s3 + $0x18] sm:$0xff]
    %v67 = vld [vmem:[%s3 + $0x20] sm:$0xff]
    %v68 = vld [vmem:[%s3 + $0x28] sm:$0xff]
    %v69 = vld [vmem:[%s3 + $0x30] sm:$0xff]
    %v70 = vld [vmem:[%s3 + $0x38] sm:$0xff]
    %v71 = vld [vmem:[%s3 + $0x40] sm:$0xff]
    %v72 = vld [vmem:[%s3 + $0x48] sm:$0xff]
    %v73 = vld [vmem:[%s3 + $0x50] sm:$0xff]
    %v74 = vld [vmem:[%s3 + $0x58] sm:$0xff]
    %v75 = vld [vmem:[%s3 + $0x60] sm:$0xff]
    %v76 = vld [vmem:[%s3 + $0x68] sm:$0xff]
    %v77 = vld [vmem:[%s3 + $0x70] sm:$0xff]
    %v78 = vld [vmem:[%s3 + $0x78] sm:$0xff]
    %v79 = vld [vmem:[%s3 + $0x80] sm:$0xff]
    %v80 = vld [vmem:[%s3 + $0x88] sm:$0xff]
    %v81 = vld [vmem:[%s3 + $0x90] sm:$0xff]
    %v82 = vld [vmem:[%s3 + $0x98] sm:$0xff]
    %v83 = vld [vmem:[%s3 + $0xa0] sm:$0xff]
    %v84 = vld [vmem:[%s3 + $0xa8] sm:$0xff]
    %v85 = vld [vmem:[%s3 + $0xb0] sm:$0xff]
    %v86 = vld [vmem:[%s3 + $0xb8] sm:$0xff]
    %v87 = vld [vmem:[%s3 + $0xc0] sm:$0xff]
    %v88 = vld [vmem:[%s3 + $0xc8] sm:$0xff]
    %v89 = vld [vmem:[%s3 + $0xd0] sm:$0xff]
    %v90 = vld [vmem:[%s3 + $0xd8] sm:$0xff]
    %v91 = vld [vmem:[%s3 + $0xe0] sm:$0xff]
    %v92 = vld [vmem:[%s3 + $0xe8] sm:$0xff]
    %v93 = vld [vmem:[%s3 + $0xf0] sm:$0xff]
    %v94 = vld [vmem:[%s3 + $0xf8] sm:$0xff]
    %v95 = vld [vmem:[%s5] sm:$0xff]
    %v96 = vld [vmem:[%s5 + $0x8] sm:$0xff]
    %v97 = vld [vmem:[%s5 + $0x10] sm:$0xff]
    %v98 = vld [vmem:[%s5 + $0x18] sm:$0xff]
    %v99 = vld [vmem:[%s5 + $0x20] sm:$0xff]
    %v100 = vld [vmem:[%s5 + $0x28] sm:$0xff]
    %v101 = vld [vmem:[%s5 + $0x30] sm:$0xff]
    %v102 = vld [vmem:[%s5 + $0x38] sm:$0xff]
    %v103 = vld [vmem:[%s5 + $0x40] sm:$0xff]
    %v104 = vld [vmem:[%s5 + $0x48] sm:$0xff]
    %v105 = vld [vmem:[%s5 + $0x50] sm:$0xff]
    %v106 = vld [vmem:[%s5 + $0x58] sm:$0xff]
    %v107 = vld [vmem:[%s5 + $0x60] sm:$0xff]
    %v108 = vld [vmem:[%s5 + $0x68] sm:$0xff]
    %v109 = vld [vmem:[%s5 + $0x70] sm:$0xff]
    %v110 = vld [vmem:[%s5 + $0x78] sm:$0xff]
    %v111 = vld [vmem:[%s5 + $0x80] sm:$0xff]
    %v112 = vld [vmem:[%s5 + $0x88] sm:$0xff]
    %v113 = vld [vmem:[%s5 + $0x90] sm:$0xff]
    %v114 = vld [vmem:[%s5 + $0x98] sm:$0xff]
    %v115 = vld [vmem:[%s5 + $0xa0] sm:$0xff]
    %v116 = vld [vmem:[%s5 + $0xa8] sm:$0xff]
    %v117 = vld [vmem:[%s5 + $0xb0] sm:$0xff]
    %v118 = vld [vmem:[%s5 + $0xb8] sm:$0xff]
    %v119 = vld [vmem:[%s5 + $0xc0] sm:$0xff]
    %v120 = vld [vmem:[%s5 + $0xc8] sm:$0xff]
    %v121 = vld [vmem:[%s5 + $0xd0] sm:$0xff]
    %v122 = vld [vmem:[%s5 + $0xd8] sm:$0xff]
    %v123 = vld [vmem:[%s5 + $0xe0] sm:$0xff]
    %v124 = vld [vmem:[%s5 + $0xe8] sm:$0xff]
    %v125 = vld [vmem:[%s5 + $0xf0] sm:$0xff]
    %v126 = vld [vmem:[%s5 + $0xf8] sm:$0xff]
    %v127 = vld [vmem:[%s7] sm:$0xff]
    %v128 = vld [vmem:[%s7 + $0x8] sm:$0xff]
    %v129 = vld [vmem:[%s7 + $0x10] sm:$0xff]
    %v130 = vld [vmem:[%s7 + $0x18] sm:$0xff]
    %v131 = vld [vmem:[%s7 + $0x20] sm:$0xff]
    %v132 = vld [vmem:[%s7 + $0x28] sm:$0xff]
    %v133 = vld [vmem:[%s7 + $0x30] sm:$0xff]
    %v134 = vld [vmem:[%s7 + $0x38] sm:$0xff]
    %v135 = vld [vmem:[%s7 + $0x40] sm:$0xff]
    %v136 = vld [vmem:[%s7 + $0x48] sm:$0xff]
    %v137 = vld [vmem:[%s7 + $0x50] sm:$0xff]
    %v138 = vld [vmem:[%s7 + $0x58] sm:$0xff]
    %v139 = vld [vmem:[%s7 + $0x60] sm:$0xff]
    %v140 = vld [vmem:[%s7 + $0x68] sm:$0xff]
    %v141 = vld [vmem:[%s7 + $0x70] sm:$0xff]
    %v142 = vld [vmem:[%s7 + $0x78] sm:$0xff]
    %v143 = vld [vmem:[%s7 + $0x80] sm:$0xff]
    %v144 = vld [vmem:[%s7 + $0x88] sm:$0xff]
    %v145 = vld [vmem:[%s7 + $0x90] sm:$0xff]
    %v146 = vld [vmem:[%s7 + $0x98] sm:$0xff]
    %v147 = vld [vmem:[%s7 + $0xa0] sm:$0xff]
    %v148 = vld [vmem:[%s7 + $0xa8] sm:$0xff]
    %v149 = vld [vmem:[%s7 + $0xb0] sm:$0xff]
    %v150 = vld [vmem:[%s7 + $0xb8] sm:$0xff]
    %v151 = vld [vmem:[%s7 + $0xc0] sm:$0xff]
    %v152 = vld [vmem:[%s7 + $0xc8] sm:$0xff]
    %v153 = vld [vmem:[%s7 + $0xd0] sm:$0xff]
    %v154 = vld [vmem:[%s7 + $0xd8] sm:$0xff]
    %v155 = vld [vmem:[%s7 + $0xe0] sm:$0xff]
    %v156 = vld [vmem:[%s7 + $0xe8] sm:$0xff]
    %v157 = vld [vmem:[%s7 + $0xf0] sm:$0xff]
    %v158 = vld [vmem:[%s7 + $0xf8] sm:$0xff]
    %v159 = vld [vmem:[%s4] sm:$0x1]
    %v160 = vld [vmem:[%s4 + $0x1] sm:$0x1]
    %v161 = vld [vmem:[%s4 + $0x2] sm:$0x1]
    %v162 = vld [vmem:[%s4 + $0x3] sm:$0x1]
    %v163 = vld [vmem:[%s4 + $0x4] sm:$0x1]
    %v164 = vld [vmem:[%s4 + $0x5] sm:$0x1]
    %v165 = vld [vmem:[%s4 + $0x6] sm:$0x1]
    %v166 = vld [vmem:[%s4 + $0x7] sm:$0x1]
    %v167 = vld [vmem:[%s6] sm:$0x1]
    %v168 = vld [vmem:[%s6 + $0x1] sm:$0x1]
    %v169 = vld [vmem:[%s6 + $0x2] sm:$0x1]
    %v170 = vld [vmem:[%s6 + $0x3] sm:$0x1]
    %v171 = vld [vmem:[%s6 + $0x4] sm:$0x1]
    %v172 = vld [vmem:[%s6 + $0x5] sm:$0x1]
    %v173 = vld [vmem:[%s6 + $0x6] sm:$0x1]
    %v174 = vld [vmem:[%s6 + $0x7] sm:$0x1]
    %v175 = vld [vmem:[%s8] sm:$0x1]
    %v176 = vld [vmem:[%s8 + $0x1] sm:$0x1]
    %v177 = vld [vmem:[%s8 + $0x2] sm:$0x1]
    %v178 = vld [vmem:[%s8 + $0x3] sm:$0x1]
    %v179 = vld [vmem:[%s8 + $0x4] sm:$0x1]
    %v180 = vld [vmem:[%s8 + $0x5] sm:$0x1]
    %v181 = vld [vmem:[%s8 + $0x6] sm:$0x1]
    %v182 = vld [vmem:[%s8 + $0x7] sm:$0x1]
    %v183 = vld [vmem:[%s9] sm:$0xff]
    %v184 = vld [vmem:[%s9 + $0x8] sm:$0xff]
    %v185 = vld [vmem:[%s9 + $0x10] sm:$0xff]
    %v186 = vld [vmem:[%s9 + $0x18] sm:$0xff]
    %v187 = vld [vmem:[%s9 + $0x20] sm:$0xff]
    %v188 = vld [vmem:[%s9 + $0x28] sm:$0xff]
    %v189 = vld [vmem:[%s9 + $0x30] sm:$0xff]
    %v190 = vld [vmem:[%s9 + $0x38] sm:$0xff]
    %v191 = vld [vmem:[%s10] sm:$0x1]
    %v200 = vlaneseq
    %v201 = vshrl.u32 %v200, 7
    %v202 = vsub.s32 0, %v201
    %v203 = vrot.slane %v159, %v202
    %v204 = vlaneseq
    %v205 = vshrl.u32 %v204, 7
    %v206 = vsub.s32 0, %v205
    %v207 = vrot.slane %v160, %v206
    %v208 = vlaneseq
    %v209 = vshrl.u32 %v208, 7
    %v210 = vsub.s32 0, %v209
    %v211 = vrot.slane %v161, %v210
    %v212 = vlaneseq
    %v213 = vshrl.u32 %v212, 7
    %v214 = vsub.s32 0, %v213
    %v215 = vrot.slane %v162, %v214
    %v216 = vlaneseq
    %v217 = vshrl.u32 %v216, 7
    %v218 = vsub.s32 0, %v217
    %v219 = vrot.slane %v163, %v218
    %v220 = vlaneseq
    %v221 = vshrl.u32 %v220, 7
    %v222 = vsub.s32 0, %v221
    %v223 = vrot.slane %v164, %v222
    %v224 = vlaneseq
    %v225 = vshrl.u32 %v224, 7
    %v226 = vsub.s32 0, %v225
    %v227 = vrot.slane %v165, %v226
    %v228 = vlaneseq
    %v229 = vshrl.u32 %v228, 7
    %v230 = vsub.s32 0, %v229
    %v231 = vrot.slane %v166, %v230
    %vm240 = vcmask 261120
    %v242 = vsel %vm240, %v39, 0
    %244 = vmatprep.subr.mxu0 0.0
    %245 = vmatpush1.msra.mxu0 0.0
    %246 = vmatprep.subr.mxu0 0.0
    %247 = vmatpush1.msra.mxu0 0.0
    %248 = vmatprep.subr.mxu0 0.0
    %249 = vmatpush1.msra.mxu0 0.0
    %250 = vmatprep.subr.mxu0 0.0
    %251 = vmatpush1.msra.mxu0 0.0
    %252 = vmatprep.subr.mxu0 0.0
    %253 = vmatpush1.msra.mxu0 0.0
    %254 = vmatprep.subr.mxu0 0.0
    %255 = vmatpush1.msra.mxu0 0.0
    %256 = vmatprep.subr.mxu0 0.0
    %257 = vmatpush1.msra.mxu0 0.0
    %258 = vmatprep.subr.mxu0 0.0
    %259 = vmatpush1.msra.mxu0 0.0
    %260 = vmatprep.subr.mxu0 0.0
    %261 = vmatpush1.msra.mxu0 0.0
    %262 = vmatprep.subr.mxu0 0.0
    %263 = vmatpush1.msra.mxu0 0.0
    %264 = vmatprep.subr.mxu0 0.0
    %265 = vmatpush1.msra.mxu0 0.0
    %266 = vmatprep.subr.mxu0 0.0
    %267 = vmatpush1.msra.mxu0 0.0
    %268 = vmatprep.subr.mxu0 0.0
    %269 = vmatpush1.msra.mxu0 %v66
    %270 = vmatprep.subr.mxu0 0.0
    %271 = vmatpush1.msra.mxu0 %v65
    %272 = vmatprep.subr.mxu0 0.0
    %273 = vmatpush1.msra.mxu0 %v64
    %274 = vmatprep.subr.mxu0 0.0
    %275 = vmatpush1.msra.mxu0 %v63
    %276 = vmatprep.subr.mxu0 0.0
    %277 = vmatpush2.msra.mxu0 0.0
    %278 = vmatprep.subr.mxu0 0.0
    %279 = vmatpush2.msra.mxu0 0.0
    %280 = vmatprep.subr.mxu0 0.0
    %281 = vmatpush2.msra.mxu0 0.0
    %282 = vmatprep.subr.mxu0 0.0
    %283 = vmatpush2.msra.mxu0 0.0
    %284 = vmatprep.subr.mxu0 0.0
    %285 = vmatpush2.msra.mxu0 0.0
    %286 = vmatprep.subr.mxu0 0.0
    %287 = vmatpush2.msra.mxu0 0.0
    %288 = vmatprep.subr.mxu0 0.0
    %289 = vmatpush2.msra.mxu0 0.0
    %290 = vmatprep.subr.mxu0 0.0
    %291 = vmatpush2.msra.mxu0 0.0
    %292 = vmatprep.subr.mxu0 0.0
    %293 = vmatpush2.msra.mxu0 0.0
    %294 = vmatprep.subr.mxu0 0.0
    %295 = vmatpush2.msra.mxu0 0.0
    %296 = vmatprep.subr.mxu0 0.0
    %297 = vmatpush2.msra.mxu0 0.0
    %298 = vmatprep.subr.mxu0 0.0
    %299 = vmatpush2.msra.mxu0 0.0
    %300 = vmatprep.subr.mxu0 0.0
    %301 = vmatpush2.msra.mxu0 0.0
    %302 = vmatprep.subr.mxu0 0.0
    %303 = vmatpush2.msra.mxu0 0.0
    %304 = vmatprep.subr.mxu0 0.0
    %305 = vmatpush2.msra.mxu0 0.0
    %306 = vmatprep.subr.mxu0 0.0
    %307 = vmatpush2.msra.mxu0 0.0
    %308 = vmatprep.mubr.f32.mxu0 0.0
    %309 = vmatmul.mubr.f32.gmra.mxu0 %v242
    %v310 = vpop.f32.mrf.mxu0
    %v311 = vadd.f32 %v203, %v310
    %v312 = vpop.f32.mrf.mxu0
    %313 = vdwg.mxu0
    %v315 = vsel %vm240, %v40, 0
    %317 = vmatprep.subr.mxu0 0.0
    %318 = vmatpush1.msra.mxu0 0.0
    %319 = vmatprep.subr.mxu0 0.0
    %320 = vmatpush1.msra.mxu0 0.0
    %321 = vmatprep.subr.mxu0 0.0
    %322 = vmatpush1.msra.mxu0 0.0
    %323 = vmatprep.subr.mxu0 0.0
    %324 = vmatpush1.msra.mxu0 0.0
    %325 = vmatprep.subr.mxu0 0.0
    %326 = vmatpush1.msra.mxu0 0.0
    %327 = vmatprep.subr.mxu0 0.0
    %328 = vmatpush1.msra.mxu0 0.0
    %329 = vmatprep.subr.mxu0 0.0
    %330 = vmatpush1.msra.mxu0 0.0
    %331 = vmatprep.subr.mxu0 0.0
    %332 = vmatpush1.msra.mxu0 0.0
    %333 = vmatprep.subr.mxu0 0.0
    %334 = vmatpush1.msra.mxu0 0.0
    %335 = vmatprep.subr.mxu0 0.0
    %336 = vmatpush1.msra.mxu0 0.0
    %337 = vmatprep.subr.mxu0 0.0
    %338 = vmatpush1.msra.mxu0 0.0
    %339 = vmatprep.subr.mxu0 0.0
    %340 = vmatpush1.msra.mxu0 0.0
    %341 = vmatprep.subr.mxu0 0.0
    %342 = vmatpush1.msra.mxu0 %v70
    %343 = vmatprep.subr.mxu0 0.0
    %344 = vmatpush1.msra.mxu0 %v69
    %345 = vmatprep.subr.mxu0 0.0
    %346 = vmatpush1.msra.mxu0 %v68
    %347 = vmatprep.subr.mxu0 0.0
    %348 = vmatpush1.msra.mxu0 %v67
    %349 = vmatprep.subr.mxu0 0.0
    %350 = vmatpush2.msra.mxu0 0.0
    %351 = vmatprep.subr.mxu0 0.0
    %352 = vmatpush2.msra.mxu0 0.0
    %353 = vmatprep.subr.mxu0 0.0
    %354 = vmatpush2.msra.mxu0 0.0
    %355 = vmatprep.subr.mxu0 0.0
    %356 = vmatpush2.msra.mxu0 0.0
    %357 = vmatprep.subr.mxu0 0.0
    %358 = vmatpush2.msra.mxu0 0.0
    %359 = vmatprep.subr.mxu0 0.0
    %360 = vmatpush2.msra.mxu0 0.0
    %361 = vmatprep.subr.mxu0 0.0
    %362 = vmatpush2.msra.mxu0 0.0
    %363 = vmatprep.subr.mxu0 0.0
    %364 = vmatpush2.msra.mxu0 0.0
    %365 = vmatprep.subr.mxu0 0.0
    %366 = vmatpush2.msra.mxu0 0.0
    %367 = vmatprep.subr.mxu0 0.0
    %368 = vmatpush2.msra.mxu0 0.0
    %369 = vmatprep.subr.mxu0 0.0
    %370 = vmatpush2.msra.mxu0 0.0
    %371 = vmatprep.subr.mxu0 0.0
    %372 = vmatpush2.msra.mxu0 0.0
    %373 = vmatprep.subr.mxu0 0.0
    %374 = vmatpush2.msra.mxu0 0.0
    %375 = vmatprep.subr.mxu0 0.0
    %376 = vmatpush2.msra.mxu0 0.0
    %377 = vmatprep.subr.mxu0 0.0
    %378 = vmatpush2.msra.mxu0 0.0
    %379 = vmatprep.subr.mxu0 0.0
    %380 = vmatpush2.msra.mxu0 0.0
    %381 = vmatprep.mubr.f32.mxu0 0.0
    %382 = vmatmul.mubr.f32.gmra.mxu0 %v315
    %v383 = vpop.f32.mrf.mxu0
    %v384 = vadd.f32 %v207, %v383
    %v385 = vpop.f32.mrf.mxu0
    %386 = vdwg.mxu0
    %v388 = vsel %vm240, %v41, 0
    %390 = vmatprep.subr.mxu0 0.0
    %391 = vmatpush1.msra.mxu0 0.0
    %392 = vmatprep.subr.mxu0 0.0
    %393 = vmatpush1.msra.mxu0 0.0
    %394 = vmatprep.subr.mxu0 0.0
    %395 = vmatpush1.msra.mxu0 0.0
    %396 = vmatprep.subr.mxu0 0.0
    %397 = vmatpush1.msra.mxu0 0.0
    %398 = vmatprep.subr.mxu0 0.0
    %399 = vmatpush1.msra.mxu0 0.0
    %400 = vmatprep.subr.mxu0 0.0
    %401 = vmatpush1.msra.mxu0 0.0
    %402 = vmatprep.subr.mxu0 0.0
    %403 = vmatpush1.msra.mxu0 0.0
    %404 = vmatprep.subr.mxu0 0.0
    %405 = vmatpush1.msra.mxu0 0.0
    %406 = vmatprep.subr.mxu0 0.0
    %407 = vmatpush1.msra.mxu0 0.0
    %408 = vmatprep.subr.mxu0 0.0
    %409 = vmatpush1.msra.mxu0 0.0
    %410 = vmatprep.subr.mxu0 0.0
    %411 = vmatpush1.msra.mxu0 0.0
    %412 = vmatprep.subr.mxu0 0.0
    %413 = vmatpush1.msra.mxu0 0.0
    %414 = vmatprep.subr.mxu0 0.0
    %415 = vmatpush1.msra.mxu0 %v74
    %416 = vmatprep.subr.mxu0 0.0
    %417 = vmatpush1.msra.mxu0 %v73
    %418 = vmatprep.subr.mxu0 0.0
    %419 = vmatpush1.msra.mxu0 %v72
    %420 = vmatprep.subr.mxu0 0.0
    %421 = vmatpush1.msra.mxu0 %v71
    %422 = vmatprep.subr.mxu0 0.0
    %423 = vmatpush2.msra.mxu0 0.0
    %424 = vmatprep.subr.mxu0 0.0
    %425 = vmatpush2.msra.mxu0 0.0
    %426 = vmatprep.subr.mxu0 0.0
    %427 = vmatpush2.msra.mxu0 0.0
    %428 = vmatprep.subr.mxu0 0.0
    %429 = vmatpush2.msra.mxu0 0.0
    %430 = vmatprep.subr.mxu0 0.0
    %431 = vmatpush2.msra.mxu0 0.0
    %432 = vmatprep.subr.mxu0 0.0
    %433 = vmatpush2.msra.mxu0 0.0
    %434 = vmatprep.subr.mxu0 0.0
    %435 = vmatpush2.msra.mxu0 0.0
    %436 = vmatprep.subr.mxu0 0.0
    %437 = vmatpush2.msra.mxu0 0.0
    %438 = vmatprep.subr.mxu0 0.0
    %439 = vmatpush2.msra.mxu0 0.0
    %440 = vmatprep.subr.mxu0 0.0
    %441 = vmatpush2.msra.mxu0 0.0
    %442 = vmatprep.subr.mxu0 0.0
    %443 = vmatpush2.msra.mxu0 0.0
    %444 = vmatprep.subr.mxu0 0.0
    %445 = vmatpush2.msra.mxu0 0.0
    %446 = vmatprep.subr.mxu0 0.0
    %447 = vmatpush2.msra.mxu0 0.0
    %448 = vmatprep.subr.mxu0 0.0
    %449 = vmatpush2.msra.mxu0 0.0
    %450 = vmatprep.subr.mxu0 0.0
    %451 = vmatpush2.msra.mxu0 0.0
    %452 = vmatprep.subr.mxu0 0.0
    %453 = vmatpush2.msra.mxu0 0.0
    %454 = vmatprep.mubr.f32.mxu0 0.0
    %455 = vmatmul.mubr.f32.gmra.mxu0 %v388
    %v456 = vpop.f32.mrf.mxu0
    %v457 = vadd.f32 %v211, %v456
    %v458 = vpop.f32.mrf.mxu0
    %459 = vdwg.mxu0
    %v461 = vsel %vm240, %v42, 0
    %463 = vmatprep.subr.mxu0 0.0
    %464 = vmatpush1.msra.mxu0 0.0
    %465 = vmatprep.subr.mxu0 0.0
    %466 = vmatpush1.msra.mxu0 0.0
    %467 = vmatprep.subr.mxu0 0.0
    %468 = vmatpush1.msra.mxu0 0.0
    %469 = vmatprep.subr.mxu0 0.0
    %470 = vmatpush1.msra.mxu0 0.0
    %471 = vmatprep.subr.mxu0 0.0
    %472 = vmatpush1.msra.mxu0 0.0
    %473 = vmatprep.subr.mxu0 0.0
    %474 = vmatpush1.msra.mxu0 0.0
    %475 = vmatprep.subr.mxu0 0.0
    %476 = vmatpush1.msra.mxu0 0.0
    %477 = vmatprep.subr.mxu0 0.0
    %478 = vmatpush1.msra.mxu0 0.0
    %479 = vmatprep.subr.mxu0 0.0
    %480 = vmatpush1.msra.mxu0 0.0
    %481 = vmatprep.subr.mxu0 0.0
    %482 = vmatpush1.msra.mxu0 0.0
    %483 = vmatprep.subr.mxu0 0.0
    %484 = vmatpush1.msra.mxu0 0.0
    %485 = vmatprep.subr.mxu0 0.0
    %486 = vmatpush1.msra.mxu0 0.0
    %487 = vmatprep.subr.mxu0 0.0
    %488 = vmatpush1.msra.mxu0 %v78
    %489 = vmatprep.subr.mxu0 0.0
    %490 = vmatpush1.msra.mxu0 %v77
    %491 = vmatprep.subr.mxu0 0.0
    %492 = vmatpush1.msra.mxu0 %v76
    %493 = vmatprep.subr.mxu0 0.0
    %494 = vmatpush1.msra.mxu0 %v75
    %495 = vmatprep.subr.mxu0 0.0
    %496 = vmatpush2.msra.mxu0 0.0
    %497 = vmatprep.subr.mxu0 0.0
    %498 = vmatpush2.msra.mxu0 0.0
    %499 = vmatprep.subr.mxu0 0.0
    %500 = vmatpush2.msra.mxu0 0.0
    %501 = vmatprep.subr.mxu0 0.0
    %502 = vmatpush2.msra.mxu0 0.0
    %503 = vmatprep.subr.mxu0 0.0
    %504 = vmatpush2.msra.mxu0 0.0
    %505 = vmatprep.subr.mxu0 0.0
    %506 = vmatpush2.msra.mxu0 0.0
    %507 = vmatprep.subr.mxu0 0.0
    %508 = vmatpush2.msra.mxu0 0.0
    %509 = vmatprep.subr.mxu0 0.0
    %510 = vmatpush2.msra.mxu0 0.0
    %511 = vmatprep.subr.mxu0 0.0
    %512 = vmatpush2.msra.mxu0 0.0
    %513 = vmatprep.subr.mxu0 0.0
    %514 = vmatpush2.msra.mxu0 0.0
    %515 = vmatprep.subr.mxu0 0.0
    %516 = vmatpush2.msra.mxu0 0.0
    %517 = vmatprep.subr.mxu0 0.0
    %518 = vmatpush2.msra.mxu0 0.0
    %519 = vmatprep.subr.mxu0 0.0
    %520 = vmatpush2.msra.mxu0 0.0
    %521 = vmatprep.subr.mxu0 0.0
    %522 = vmatpush2.msra.mxu0 0.0
    %523 = vmatprep.subr.mxu0 0.0
    %524 = vmatpush2.msra.mxu0 0.0
    %525 = vmatprep.subr.mxu0 0.0
    %526 = vmatpush2.msra.mxu0 0.0
    %527 = vmatprep.mubr.f32.mxu0 0.0
    %528 = vmatmul.mubr.f32.gmra.mxu0 %v461
    %v529 = vpop.f32.mrf.mxu0
    %v530 = vadd.f32 %v215, %v529
    %v531 = vpop.f32.mrf.mxu0
    %532 = vdwg.mxu0
    %v534 = vsel %vm240, %v43, 0
    %536 = vmatprep.subr.mxu0 0.0
    %537 = vmatpush1.msra.mxu0 0.0
    %538 = vmatprep.subr.mxu0 0.0
    %539 = vmatpush1.msra.mxu0 0.0
    %540 = vmatprep.subr.mxu0 0.0
    %541 = vmatpush1.msra.mxu0 0.0
    %542 = vmatprep.subr.mxu0 0.0
    %543 = vmatpush1.msra.mxu0 0.0
    %544 = vmatprep.subr.mxu0 0.0
    %545 = vmatpush1.msra.mxu0 0.0
    %546 = vmatprep.subr.mxu0 0.0
    %547 = vmatpush1.msra.mxu0 0.0
    %548 = vmatprep.subr.mxu0 0.0
    %549 = vmatpush1.msra.mxu0 0.0
    %550 = vmatprep.subr.mxu0 0.0
    %551 = vmatpush1.msra.mxu0 0.0
    %552 = vmatprep.subr.mxu0 0.0
    %553 = vmatpush1.msra.mxu0 0.0
    %554 = vmatprep.subr.mxu0 0.0
    %555 = vmatpush1.msra.mxu0 0.0
    %556 = vmatprep.subr.mxu0 0.0
    %557 = vmatpush1.msra.mxu0 0.0
    %558 = vmatprep.subr.mxu0 0.0
    %559 = vmatpush1.msra.mxu0 0.0
    %560 = vmatprep.subr.mxu0 0.0
    %561 = vmatpush1.msra.mxu0 %v82
    %562 = vmatprep.subr.mxu0 0.0
    %563 = vmatpush1.msra.mxu0 %v81
    %564 = vmatprep.subr.mxu0 0.0
    %565 = vmatpush1.msra.mxu0 %v80
    %566 = vmatprep.subr.mxu0 0.0
    %567 = vmatpush1.msra.mxu0 %v79
    %568 = vmatprep.subr.mxu0 0.0
    %569 = vmatpush2.msra.mxu0 0.0
    %570 = vmatprep.subr.mxu0 0.0
    %571 = vmatpush2.msra.mxu0 0.0
    %572 = vmatprep.subr.mxu0 0.0
    %573 = vmatpush2.msra.mxu0 0.0
    %574 = vmatprep.subr.mxu0 0.0
    %575 = vmatpush2.msra.mxu0 0.0
    %576 = vmatprep.subr.mxu0 0.0
    %577 = vmatpush2.msra.mxu0 0.0
    %578 = vmatprep.subr.mxu0 0.0
    %579 = vmatpush2.msra.mxu0 0.0
    %580 = vmatprep.subr.mxu0 0.0
    %581 = vmatpush2.msra.mxu0 0.0
    %582 = vmatprep.subr.mxu0 0.0
    %583 = vmatpush2.msra.mxu0 0.0
    %584 = vmatprep.subr.mxu0 0.0
    %585 = vmatpush2.msra.mxu0 0.0
    %586 = vmatprep.subr.mxu0 0.0
    %587 = vmatpush2.msra.mxu0 0.0
    %588 = vmatprep.subr.mxu0 0.0
    %589 = vmatpush2.msra.mxu0 0.0
    %590 = vmatprep.subr.mxu0 0.0
    %591 = vmatpush2.msra.mxu0 0.0
    %592 = vmatprep.subr.mxu0 0.0
    %593 = vmatpush2.msra.mxu0 0.0
    %594 = vmatprep.subr.mxu0 0.0
    %595 = vmatpush2.msra.mxu0 0.0
    %596 = vmatprep.subr.mxu0 0.0
    %597 = vmatpush2.msra.mxu0 0.0
    %598 = vmatprep.subr.mxu0 0.0
    %599 = vmatpush2.msra.mxu0 0.0
    %600 = vmatprep.mubr.f32.mxu0 0.0
    %601 = vmatmul.mubr.f32.gmra.mxu0 %v534
    %v602 = vpop.f32.mrf.mxu0
    %v603 = vadd.f32 %v219, %v602
    %v604 = vpop.f32.mrf.mxu0
    %605 = vdwg.mxu0
    %v607 = vsel %vm240, %v44, 0
    %609 = vmatprep.subr.mxu0 0.0
    %610 = vmatpush1.msra.mxu0 0.0
    %611 = vmatprep.subr.mxu0 0.0
    %612 = vmatpush1.msra.mxu0 0.0
    %613 = vmatprep.subr.mxu0 0.0
    %614 = vmatpush1.msra.mxu0 0.0
    %615 = vmatprep.subr.mxu0 0.0
    %616 = vmatpush1.msra.mxu0 0.0
    %617 = vmatprep.subr.mxu0 0.0
    %618 = vmatpush1.msra.mxu0 0.0
    %619 = vmatprep.subr.mxu0 0.0
    %620 = vmatpush1.msra.mxu0 0.0
    %621 = vmatprep.subr.mxu0 0.0
    %622 = vmatpush1.msra.mxu0 0.0
    %623 = vmatprep.subr.mxu0 0.0
    %624 = vmatpush1.msra.mxu0 0.0
    %625 = vmatprep.subr.mxu0 0.0
    %626 = vmatpush1.msra.mxu0 0.0
    %627 = vmatprep.subr.mxu0 0.0
    %628 = vmatpush1.msra.mxu0 0.0
    %629 = vmatprep.subr.mxu0 0.0
    %630 = vmatpush1.msra.mxu0 0.0
    %631 = vmatprep.subr.mxu0 0.0
    %632 = vmatpush1.msra.mxu0 0.0
    %633 = vmatprep.subr.mxu0 0.0
    %634 = vmatpush1.msra.mxu0 %v86
    %635 = vmatprep.subr.mxu0 0.0
    %636 = vmatpush1.msra.mxu0 %v85
    %637 = vmatprep.subr.mxu0 0.0
    %638 = vmatpush1.msra.mxu0 %v84
    %639 = vmatprep.subr.mxu0 0.0
    %640 = vmatpush1.msra.mxu0 %v83
    %641 = vmatprep.subr.mxu0 0.0
    %642 = vmatpush2.msra.mxu0 0.0
    %643 = vmatprep.subr.mxu0 0.0
    %644 = vmatpush2.msra.mxu0 0.0
    %645 = vmatprep.subr.mxu0 0.0
    %646 = vmatpush2.msra.mxu0 0.0
    %647 = vmatprep.subr.mxu0 0.0
    %648 = vmatpush2.msra.mxu0 0.0
    %649 = vmatprep.subr.mxu0 0.0
    %650 = vmatpush2.msra.mxu0 0.0
    %651 = vmatprep.subr.mxu0 0.0
    %652 = vmatpush2.msra.mxu0 0.0
    %653 = vmatprep.subr.mxu0 0.0
    %654 = vmatpush2.msra.mxu0 0.0
    %655 = vmatprep.subr.mxu0 0.0
    %656 = vmatpush2.msra.mxu0 0.0
    %657 = vmatprep.subr.mxu0 0.0
    %658 = vmatpush2.msra.mxu0 0.0
    %659 = vmatprep.subr.mxu0 0.0
    %660 = vmatpush2.msra.mxu0 0.0
    %661 = vmatprep.subr.mxu0 0.0
    %662 = vmatpush2.msra.mxu0 0.0
    %663 = vmatprep.subr.mxu0 0.0
    %664 = vmatpush2.msra.mxu0 0.0
    %665 = vmatprep.subr.mxu0 0.0
    %666 = vmatpush2.msra.mxu0 0.0
    %667 = vmatprep.subr.mxu0 0.0
    %668 = vmatpush2.msra.mxu0 0.0
    %669 = vmatprep.subr.mxu0 0.0
    %670 = vmatpush2.msra.mxu0 0.0
    %671 = vmatprep.subr.mxu0 0.0
    %672 = vmatpush2.msra.mxu0 0.0
    %673 = vmatprep.mubr.f32.mxu0 0.0
    %674 = vmatmul.mubr.f32.gmra.mxu0 %v607
    %v675 = vpop.f32.mrf.mxu0
    %v676 = vadd.f32 %v223, %v675
    %v677 = vpop.f32.mrf.mxu0
    %678 = vdwg.mxu0
    %v680 = vsel %vm240, %v45, 0
    %682 = vmatprep.subr.mxu0 0.0
    %683 = vmatpush1.msra.mxu0 0.0
    %684 = vmatprep.subr.mxu0 0.0
    %685 = vmatpush1.msra.mxu0 0.0
    %686 = vmatprep.subr.mxu0 0.0
    %687 = vmatpush1.msra.mxu0 0.0
    %688 = vmatprep.subr.mxu0 0.0
    %689 = vmatpush1.msra.mxu0 0.0
    %690 = vmatprep.subr.mxu0 0.0
    %691 = vmatpush1.msra.mxu0 0.0
    %692 = vmatprep.subr.mxu0 0.0
    %693 = vmatpush1.msra.mxu0 0.0
    %694 = vmatprep.subr.mxu0 0.0
    %695 = vmatpush1.msra.mxu0 0.0
    %696 = vmatprep.subr.mxu0 0.0
    %697 = vmatpush1.msra.mxu0 0.0
    %698 = vmatprep.subr.mxu0 0.0
    %699 = vmatpush1.msra.mxu0 0.0
    %700 = vmatprep.subr.mxu0 0.0
    %701 = vmatpush1.msra.mxu0 0.0
    %702 = vmatprep.subr.mxu0 0.0
    %703 = vmatpush1.msra.mxu0 0.0
    %704 = vmatprep.subr.mxu0 0.0
    %705 = vmatpush1.msra.mxu0 0.0
    %706 = vmatprep.subr.mxu0 0.0
    %707 = vmatpush1.msra.mxu0 %v90
    %708 = vmatprep.subr.mxu0 0.0
    %709 = vmatpush1.msra.mxu0 %v89
    %710 = vmatprep.subr.mxu0 0.0
    %711 = vmatpush1.msra.mxu0 %v88
    %712 = vmatprep.subr.mxu0 0.0
    %713 = vmatpush1.msra.mxu0 %v87
    %714 = vmatprep.subr.mxu0 0.0
    %715 = vmatpush2.msra.mxu0 0.0
    %716 = vmatprep.subr.mxu0 0.0
    %717 = vmatpush2.msra.mxu0 0.0
    %718 = vmatprep.subr.mxu0 0.0
    %719 = vmatpush2.msra.mxu0 0.0
    %720 = vmatprep.subr.mxu0 0.0
    %721 = vmatpush2.msra.mxu0 0.0
    %722 = vmatprep.subr.mxu0 0.0
    %723 = vmatpush2.msra.mxu0 0.0
    %724 = vmatprep.subr.mxu0 0.0
    %725 = vmatpush2.msra.mxu0 0.0
    %726 = vmatprep.subr.mxu0 0.0
    %727 = vmatpush2.msra.mxu0 0.0
    %728 = vmatprep.subr.mxu0 0.0
    %729 = vmatpush2.msra.mxu0 0.0
    %730 = vmatprep.subr.mxu0 0.0
    %731 = vmatpush2.msra.mxu0 0.0
    %732 = vmatprep.subr.mxu0 0.0
    %733 = vmatpush2.msra.mxu0 0.0
    %734 = vmatprep.subr.mxu0 0.0
    %735 = vmatpush2.msra.mxu0 0.0
    %736 = vmatprep.subr.mxu0 0.0
    %737 = vmatpush2.msra.mxu0 0.0
    %738 = vmatprep.subr.mxu0 0.0
    %739 = vmatpush2.msra.mxu0 0.0
    %740 = vmatprep.subr.mxu0 0.0
    %741 = vmatpush2.msra.mxu0 0.0
    %742 = vmatprep.subr.mxu0 0.0
    %743 = vmatpush2.msra.mxu0 0.0
    %744 = vmatprep.subr.mxu0 0.0
    %745 = vmatpush2.msra.mxu0 0.0
    %746 = vmatprep.mubr.f32.mxu0 0.0
    %747 = vmatmul.mubr.f32.gmra.mxu0 %v680
    %v748 = vpop.f32.mrf.mxu0
    %v749 = vadd.f32 %v227, %v748
    %v750 = vpop.f32.mrf.mxu0
    %751 = vdwg.mxu0
    %v753 = vsel %vm240, %v46, 0
    %755 = vmatprep.subr.mxu0 0.0
    %756 = vmatpush1.msra.mxu0 0.0
    %757 = vmatprep.subr.mxu0 0.0
    %758 = vmatpush1.msra.mxu0 0.0
    %759 = vmatprep.subr.mxu0 0.0
    %760 = vmatpush1.msra.mxu0 0.0
    %761 = vmatprep.subr.mxu0 0.0
    %762 = vmatpush1.msra.mxu0 0.0
    %763 = vmatprep.subr.mxu0 0.0
    %764 = vmatpush1.msra.mxu0 0.0
    %765 = vmatprep.subr.mxu0 0.0
    %766 = vmatpush1.msra.mxu0 0.0
    %767 = vmatprep.subr.mxu0 0.0
    %768 = vmatpush1.msra.mxu0 0.0
    %769 = vmatprep.subr.mxu0 0.0
    %770 = vmatpush1.msra.mxu0 0.0
    %771 = vmatprep.subr.mxu0 0.0
    %772 = vmatpush1.msra.mxu0 0.0
    %773 = vmatprep.subr.mxu0 0.0
    %774 = vmatpush1.msra.mxu0 0.0
    %775 = vmatprep.subr.mxu0 0.0
    %776 = vmatpush1.msra.mxu0 0.0
    %777 = vmatprep.subr.mxu0 0.0
    %778 = vmatpush1.msra.mxu0 0.0
    %779 = vmatprep.subr.mxu0 0.0
    %780 = vmatpush1.msra.mxu0 %v94
    %781 = vmatprep.subr.mxu0 0.0
    %782 = vmatpush1.msra.mxu0 %v93
    %783 = vmatprep.subr.mxu0 0.0
    %784 = vmatpush1.msra.mxu0 %v92
    %785 = vmatprep.subr.mxu0 0.0
    %786 = vmatpush1.msra.mxu0 %v91
    %787 = vmatprep.subr.mxu0 0.0
    %788 = vmatpush2.msra.mxu0 0.0
    %789 = vmatprep.subr.mxu0 0.0
    %790 = vmatpush2.msra.mxu0 0.0
    %791 = vmatprep.subr.mxu0 0.0
    %792 = vmatpush2.msra.mxu0 0.0
    %793 = vmatprep.subr.mxu0 0.0
    %794 = vmatpush2.msra.mxu0 0.0
    %795 = vmatprep.subr.mxu0 0.0
    %796 = vmatpush2.msra.mxu0 0.0
    %797 = vmatprep.subr.mxu0 0.0
    %798 = vmatpush2.msra.mxu0 0.0
    %799 = vmatprep.subr.mxu0 0.0
    %800 = vmatpush2.msra.mxu0 0.0
    %801 = vmatprep.subr.mxu0 0.0
    %802 = vmatpush2.msra.mxu0 0.0
    %803 = vmatprep.subr.mxu0 0.0
    %804 = vmatpush2.msra.mxu0 0.0
    %805 = vmatprep.subr.mxu0 0.0
    %806 = vmatpush2.msra.mxu0 0.0
    %807 = vmatprep.subr.mxu0 0.0
    %808 = vmatpush2.msra.mxu0 0.0
    %809 = vmatprep.subr.mxu0 0.0
    %810 = vmatpush2.msra.mxu0 0.0
    %811 = vmatprep.subr.mxu0 0.0
    %812 = vmatpush2.msra.mxu0 0.0
    %813 = vmatprep.subr.mxu0 0.0
    %814 = vmatpush2.msra.mxu0 0.0
    %815 = vmatprep.subr.mxu0 0.0
    %816 = vmatpush2.msra.mxu0 0.0
    %817 = vmatprep.subr.mxu0 0.0
    %818 = vmatpush2.msra.mxu0 0.0
    %819 = vmatprep.mubr.f32.mxu0 0.0
    %820 = vmatmul.mubr.f32.gmra.mxu0 %v753
    %v821 = vpop.f32.mrf.mxu0
    %v822 = vadd.f32 %v231, %v821
    %v823 = vpop.f32.mrf.mxu0
    %824 = vdwg.mxu0
    %v833 = vlaneseq
    %v834 = vshrl.u32 %v833, 7
    %v835 = vsub.s32 0, %v834
    %v836 = vrot.slane %v167, %v835
    %v837 = vlaneseq
    %v838 = vshrl.u32 %v837, 7
    %v839 = vsub.s32 0, %v838
    %v840 = vrot.slane %v168, %v839
    %v841 = vlaneseq
    %v842 = vshrl.u32 %v841, 7
    %v843 = vsub.s32 0, %v842
    %v844 = vrot.slane %v169, %v843
    %v845 = vlaneseq
    %v846 = vshrl.u32 %v845, 7
    %v847 = vsub.s32 0, %v846
    %v848 = vrot.slane %v170, %v847
    %v849 = vlaneseq
    %v850 = vshrl.u32 %v849, 7
    %v851 = vsub.s32 0, %v850
    %v852 = vrot.slane %v171, %v851
    %v853 = vlaneseq
    %v854 = vshrl.u32 %v853, 7
    %v855 = vsub.s32 0, %v854
    %v856 = vrot.slane %v172, %v855
    %v857 = vlaneseq
    %v858 = vshrl.u32 %v857, 7
    %v859 = vsub.s32 0, %v858
    %v860 = vrot.slane %v173, %v859
    %v861 = vlaneseq
    %v862 = vshrl.u32 %v861, 7
    %v863 = vsub.s32 0, %v862
    %v864 = vrot.slane %v174, %v863
    %v874 = vsel %vm240, %v47, 0
    %876 = vmatprep.subr.mxu0 0.0
    %877 = vmatpush1.msra.mxu0 0.0
    %878 = vmatprep.subr.mxu0 0.0
    %879 = vmatpush1.msra.mxu0 0.0
    %880 = vmatprep.subr.mxu0 0.0
    %881 = vmatpush1.msra.mxu0 0.0
    %882 = vmatprep.subr.mxu0 0.0
    %883 = vmatpush1.msra.mxu0 0.0
    %884 = vmatprep.subr.mxu0 0.0
    %885 = vmatpush1.msra.mxu0 0.0
    %886 = vmatprep.subr.mxu0 0.0
    %887 = vmatpush1.msra.mxu0 0.0
    %888 = vmatprep.subr.mxu0 0.0
    %889 = vmatpush1.msra.mxu0 0.0
    %890 = vmatprep.subr.mxu0 0.0
    %891 = vmatpush1.msra.mxu0 0.0
    %892 = vmatprep.subr.mxu0 0.0
    %893 = vmatpush1.msra.mxu0 0.0
    %894 = vmatprep.subr.mxu0 0.0
    %895 = vmatpush1.msra.mxu0 0.0
    %896 = vmatprep.subr.mxu0 0.0
    %897 = vmatpush1.msra.mxu0 0.0
    %898 = vmatprep.subr.mxu0 0.0
    %899 = vmatpush1.msra.mxu0 0.0
    %900 = vmatprep.subr.mxu0 0.0
    %901 = vmatpush1.msra.mxu0 %v98
    %902 = vmatprep.subr.mxu0 0.0
    %903 = vmatpush1.msra.mxu0 %v97
    %904 = vmatprep.subr.mxu0 0.0
    %905 = vmatpush1.msra.mxu0 %v96
    %906 = vmatprep.subr.mxu0 0.0
    %907 = vmatpush1.msra.mxu0 %v95
    %908 = vmatprep.subr.mxu0 0.0
    %909 = vmatpush2.msra.mxu0 0.0
    %910 = vmatprep.subr.mxu0 0.0
    %911 = vmatpush2.msra.mxu0 0.0
    %912 = vmatprep.subr.mxu0 0.0
    %913 = vmatpush2.msra.mxu0 0.0
    %914 = vmatprep.subr.mxu0 0.0
    %915 = vmatpush2.msra.mxu0 0.0
    %916 = vmatprep.subr.mxu0 0.0
    %917 = vmatpush2.msra.mxu0 0.0
    %918 = vmatprep.subr.mxu0 0.0
    %919 = vmatpush2.msra.mxu0 0.0
    %920 = vmatprep.subr.mxu0 0.0
    %921 = vmatpush2.msra.mxu0 0.0
    %922 = vmatprep.subr.mxu0 0.0
    %923 = vmatpush2.msra.mxu0 0.0
    %924 = vmatprep.subr.mxu0 0.0
    %925 = vmatpush2.msra.mxu0 0.0
    %926 = vmatprep.subr.mxu0 0.0
    %927 = vmatpush2.msra.mxu0 0.0
    %928 = vmatprep.subr.mxu0 0.0
    %929 = vmatpush2.msra.mxu0 0.0
    %930 = vmatprep.subr.mxu0 0.0
    %931 = vmatpush2.msra.mxu0 0.0
    %932 = vmatprep.subr.mxu0 0.0
    %933 = vmatpush2.msra.mxu0 0.0
    %934 = vmatprep.subr.mxu0 0.0
    %935 = vmatpush2.msra.mxu0 0.0
    %936 = vmatprep.subr.mxu0 0.0
    %937 = vmatpush2.msra.mxu0 0.0
    %938 = vmatprep.subr.mxu0 0.0
    %939 = vmatpush2.msra.mxu0 0.0
    %940 = vmatprep.mubr.f32.mxu0 0.0
    %941 = vmatmul.mubr.f32.gmra.mxu0 %v874
    %v942 = vpop.f32.mrf.mxu0
    %v943 = vadd.f32 %v836, %v942
    %v944 = vpop.f32.mrf.mxu0
    %945 = vdwg.mxu0
    %v947 = vsel %vm240, %v48, 0
    %949 = vmatprep.subr.mxu0 0.0
    %950 = vmatpush1.msra.mxu0 0.0
    %951 = vmatprep.subr.mxu0 0.0
    %952 = vmatpush1.msra.mxu0 0.0
    %953 = vmatprep.subr.mxu0 0.0
    %954 = vmatpush1.msra.mxu0 0.0
    %955 = vmatprep.subr.mxu0 0.0
    %956 = vmatpush1.msra.mxu0 0.0
    %957 = vmatprep.subr.mxu0 0.0
    %958 = vmatpush1.msra.mxu0 0.0
    %959 = vmatprep.subr.mxu0 0.0
    %960 = vmatpush1.msra.mxu0 0.0
    %961 = vmatprep.subr.mxu0 0.0
    %962 = vmatpush1.msra.mxu0 0.0
    %963 = vmatprep.subr.mxu0 0.0
    %964 = vmatpush1.msra.mxu0 0.0
    %965 = vmatprep.subr.mxu0 0.0
    %966 = vmatpush1.msra.mxu0 0.0
    %967 = vmatprep.subr.mxu0 0.0
    %968 = vmatpush1.msra.mxu0 0.0
    %969 = vmatprep.subr.mxu0 0.0
    %970 = vmatpush1.msra.mxu0 0.0
    %971 = vmatprep.subr.mxu0 0.0
    %972 = vmatpush1.msra.mxu0 0.0
    %973 = vmatprep.subr.mxu0 0.0
    %974 = vmatpush1.msra.mxu0 %v102
    %975 = vmatprep.subr.mxu0 0.0
    %976 = vmatpush1.msra.mxu0 %v101
    %977 = vmatprep.subr.mxu0 0.0
    %978 = vmatpush1.msra.mxu0 %v100
    %979 = vmatprep.subr.mxu0 0.0
    %980 = vmatpush1.msra.mxu0 %v99
    %981 = vmatprep.subr.mxu0 0.0
    %982 = vmatpush2.msra.mxu0 0.0
    %983 = vmatprep.subr.mxu0 0.0
    %984 = vmatpush2.msra.mxu0 0.0
    %985 = vmatprep.subr.mxu0 0.0
    %986 = vmatpush2.msra.mxu0 0.0
    %987 = vmatprep.subr.mxu0 0.0
    %988 = vmatpush2.msra.mxu0 0.0
    %989 = vmatprep.subr.mxu0 0.0
    %990 = vmatpush2.msra.mxu0 0.0
    %991 = vmatprep.subr.mxu0 0.0
    %992 = vmatpush2.msra.mxu0 0.0
    %993 = vmatprep.subr.mxu0 0.0
    %994 = vmatpush2.msra.mxu0 0.0
    %995 = vmatprep.subr.mxu0 0.0
    %996 = vmatpush2.msra.mxu0 0.0
    %997 = vmatprep.subr.mxu0 0.0
    %998 = vmatpush2.msra.mxu0 0.0
    %999 = vmatprep.subr.mxu0 0.0
    %1000 = vmatpush2.msra.mxu0 0.0
    %1001 = vmatprep.subr.mxu0 0.0
    %1002 = vmatpush2.msra.mxu0 0.0
    %1003 = vmatprep.subr.mxu0 0.0
    %1004 = vmatpush2.msra.mxu0 0.0
    %1005 = vmatprep.subr.mxu0 0.0
    %1006 = vmatpush2.msra.mxu0 0.0
    %1007 = vmatprep.subr.mxu0 0.0
    %1008 = vmatpush2.msra.mxu0 0.0
    %1009 = vmatprep.subr.mxu0 0.0
    %1010 = vmatpush2.msra.mxu0 0.0
    %1011 = vmatprep.subr.mxu0 0.0
    %1012 = vmatpush2.msra.mxu0 0.0
    %1013 = vmatprep.mubr.f32.mxu0 0.0
    %1014 = vmatmul.mubr.f32.gmra.mxu0 %v947
    %v1015 = vpop.f32.mrf.mxu0
    %v1016 = vadd.f32 %v840, %v1015
    %v1017 = vpop.f32.mrf.mxu0
    %1018 = vdwg.mxu0
    %v1020 = vsel %vm240, %v49, 0
    %1022 = vmatprep.subr.mxu0 0.0
    %1023 = vmatpush1.msra.mxu0 0.0
    %1024 = vmatprep.subr.mxu0 0.0
    %1025 = vmatpush1.msra.mxu0 0.0
    %1026 = vmatprep.subr.mxu0 0.0
    %1027 = vmatpush1.msra.mxu0 0.0
    %1028 = vmatprep.subr.mxu0 0.0
    %1029 = vmatpush1.msra.mxu0 0.0
    %1030 = vmatprep.subr.mxu0 0.0
    %1031 = vmatpush1.msra.mxu0 0.0
    %1032 = vmatprep.subr.mxu0 0.0
    %1033 = vmatpush1.msra.mxu0 0.0
    %1034 = vmatprep.subr.mxu0 0.0
    %1035 = vmatpush1.msra.mxu0 0.0
    %1036 = vmatprep.subr.mxu0 0.0
    %1037 = vmatpush1.msra.mxu0 0.0
    %1038 = vmatprep.subr.mxu0 0.0
    %1039 = vmatpush1.msra.mxu0 0.0
    %1040 = vmatprep.subr.mxu0 0.0
    %1041 = vmatpush1.msra.mxu0 0.0
    %1042 = vmatprep.subr.mxu0 0.0
    %1043 = vmatpush1.msra.mxu0 0.0
    %1044 = vmatprep.subr.mxu0 0.0
    %1045 = vmatpush1.msra.mxu0 0.0
    %1046 = vmatprep.subr.mxu0 0.0
    %1047 = vmatpush1.msra.mxu0 %v106
    %1048 = vmatprep.subr.mxu0 0.0
    %1049 = vmatpush1.msra.mxu0 %v105
    %1050 = vmatprep.subr.mxu0 0.0
    %1051 = vmatpush1.msra.mxu0 %v104
    %1052 = vmatprep.subr.mxu0 0.0
    %1053 = vmatpush1.msra.mxu0 %v103
    %1054 = vmatprep.subr.mxu0 0.0
    %1055 = vmatpush2.msra.mxu0 0.0
    %1056 = vmatprep.subr.mxu0 0.0
    %1057 = vmatpush2.msra.mxu0 0.0
    %1058 = vmatprep.subr.mxu0 0.0
    %1059 = vmatpush2.msra.mxu0 0.0
    %1060 = vmatprep.subr.mxu0 0.0
    %1061 = vmatpush2.msra.mxu0 0.0
    %1062 = vmatprep.subr.mxu0 0.0
    %1063 = vmatpush2.msra.mxu0 0.0
    %1064 = vmatprep.subr.mxu0 0.0
    %1065 = vmatpush2.msra.mxu0 0.0
    %1066 = vmatprep.subr.mxu0 0.0
    %1067 = vmatpush2.msra.mxu0 0.0
    %1068 = vmatprep.subr.mxu0 0.0
    %1069 = vmatpush2.msra.mxu0 0.0
    %1070 = vmatprep.subr.mxu0 0.0
    %1071 = vmatpush2.msra.mxu0 0.0
    %1072 = vmatprep.subr.mxu0 0.0
    %1073 = vmatpush2.msra.mxu0 0.0
    %1074 = vmatprep.subr.mxu0 0.0
    %1075 = vmatpush2.msra.mxu0 0.0
    %1076 = vmatprep.subr.mxu0 0.0
    %1077 = vmatpush2.msra.mxu0 0.0
    %1078 = vmatprep.subr.mxu0 0.0
    %1079 = vmatpush2.msra.mxu0 0.0
    %1080 = vmatprep.subr.mxu0 0.0
    %1081 = vmatpush2.msra.mxu0 0.0
    %1082 = vmatprep.subr.mxu0 0.0
    %1083 = vmatpush2.msra.mxu0 0.0
    %1084 = vmatprep.subr.mxu0 0.0
    %1085 = vmatpush2.msra.mxu0 0.0
    %1086 = vmatprep.mubr.f32.mxu0 0.0
    %1087 = vmatmul.mubr.f32.gmra.mxu0 %v1020
    %v1088 = vpop.f32.mrf.mxu0
    %v1089 = vadd.f32 %v844, %v1088
    %v1090 = vpop.f32.mrf.mxu0
    %1091 = vdwg.mxu0
    %v1093 = vsel %vm240, %v50, 0
    %1095 = vmatprep.subr.mxu0 0.0
    %1096 = vmatpush1.msra.mxu0 0.0
    %1097 = vmatprep.subr.mxu0 0.0
    %1098 = vmatpush1.msra.mxu0 0.0
    %1099 = vmatprep.subr.mxu0 0.0
    %1100 = vmatpush1.msra.mxu0 0.0
    %1101 = vmatprep.subr.mxu0 0.0
    %1102 = vmatpush1.msra.mxu0 0.0
    %1103 = vmatprep.subr.mxu0 0.0
    %1104 = vmatpush1.msra.mxu0 0.0
    %1105 = vmatprep.subr.mxu0 0.0
    %1106 = vmatpush1.msra.mxu0 0.0
    %1107 = vmatprep.subr.mxu0 0.0
    %1108 = vmatpush1.msra.mxu0 0.0
    %1109 = vmatprep.subr.mxu0 0.0
    %1110 = vmatpush1.msra.mxu0 0.0
    %1111 = vmatprep.subr.mxu0 0.0
    %1112 = vmatpush1.msra.mxu0 0.0
    %1113 = vmatprep.subr.mxu0 0.0
    %1114 = vmatpush1.msra.mxu0 0.0
    %1115 = vmatprep.subr.mxu0 0.0
    %1116 = vmatpush1.msra.mxu0 0.0
    %1117 = vmatprep.subr.mxu0 0.0
    %1118 = vmatpush1.msra.mxu0 0.0
    %1119 = vmatprep.subr.mxu0 0.0
    %1120 = vmatpush1.msra.mxu0 %v110
    %1121 = vmatprep.subr.mxu0 0.0
    %1122 = vmatpush1.msra.mxu0 %v109
    %1123 = vmatprep.subr.mxu0 0.0
    %1124 = vmatpush1.msra.mxu0 %v108
    %1125 = vmatprep.subr.mxu0 0.0
    %1126 = vmatpush1.msra.mxu0 %v107
    %1127 = vmatprep.subr.mxu0 0.0
    %1128 = vmatpush2.msra.mxu0 0.0
    %1129 = vmatprep.subr.mxu0 0.0
    %1130 = vmatpush2.msra.mxu0 0.0
    %1131 = vmatprep.subr.mxu0 0.0
    %1132 = vmatpush2.msra.mxu0 0.0
    %1133 = vmatprep.subr.mxu0 0.0
    %1134 = vmatpush2.msra.mxu0 0.0
    %1135 = vmatprep.subr.mxu0 0.0
    %1136 = vmatpush2.msra.mxu0 0.0
    %1137 = vmatprep.subr.mxu0 0.0
    %1138 = vmatpush2.msra.mxu0 0.0
    %1139 = vmatprep.subr.mxu0 0.0
    %1140 = vmatpush2.msra.mxu0 0.0
    %1141 = vmatprep.subr.mxu0 0.0
    %1142 = vmatpush2.msra.mxu0 0.0
    %1143 = vmatprep.subr.mxu0 0.0
    %1144 = vmatpush2.msra.mxu0 0.0
    %1145 = vmatprep.subr.mxu0 0.0
    %1146 = vmatpush2.msra.mxu0 0.0
    %1147 = vmatprep.subr.mxu0 0.0
    %1148 = vmatpush2.msra.mxu0 0.0
    %1149 = vmatprep.subr.mxu0 0.0
    %1150 = vmatpush2.msra.mxu0 0.0
    %1151 = vmatprep.subr.mxu0 0.0
    %1152 = vmatpush2.msra.mxu0 0.0
    %1153 = vmatprep.subr.mxu0 0.0
    %1154 = vmatpush2.msra.mxu0 0.0
    %1155 = vmatprep.subr.mxu0 0.0
    %1156 = vmatpush2.msra.mxu0 0.0
    %1157 = vmatprep.subr.mxu0 0.0
    %1158 = vmatpush2.msra.mxu0 0.0
    %1159 = vmatprep.mubr.f32.mxu0 0.0
    %1160 = vmatmul.mubr.f32.gmra.mxu0 %v1093
    %v1161 = vpop.f32.mrf.mxu0
    %v1162 = vadd.f32 %v848, %v1161
    %v1163 = vpop.f32.mrf.mxu0
    %1164 = vdwg.mxu0
    %v1166 = vsel %vm240, %v51, 0
    %1168 = vmatprep.subr.mxu0 0.0
    %1169 = vmatpush1.msra.mxu0 0.0
    %1170 = vmatprep.subr.mxu0 0.0
    %1171 = vmatpush1.msra.mxu0 0.0
    %1172 = vmatprep.subr.mxu0 0.0
    %1173 = vmatpush1.msra.mxu0 0.0
    %1174 = vmatprep.subr.mxu0 0.0
    %1175 = vmatpush1.msra.mxu0 0.0
    %1176 = vmatprep.subr.mxu0 0.0
    %1177 = vmatpush1.msra.mxu0 0.0
    %1178 = vmatprep.subr.mxu0 0.0
    %1179 = vmatpush1.msra.mxu0 0.0
    %1180 = vmatprep.subr.mxu0 0.0
    %1181 = vmatpush1.msra.mxu0 0.0
    %1182 = vmatprep.subr.mxu0 0.0
    %1183 = vmatpush1.msra.mxu0 0.0
    %1184 = vmatprep.subr.mxu0 0.0
    %1185 = vmatpush1.msra.mxu0 0.0
    %1186 = vmatprep.subr.mxu0 0.0
    %1187 = vmatpush1.msra.mxu0 0.0
    %1188 = vmatprep.subr.mxu0 0.0
    %1189 = vmatpush1.msra.mxu0 0.0
    %1190 = vmatprep.subr.mxu0 0.0
    %1191 = vmatpush1.msra.mxu0 0.0
    %1192 = vmatprep.subr.mxu0 0.0
    %1193 = vmatpush1.msra.mxu0 %v114
    %1194 = vmatprep.subr.mxu0 0.0
    %1195 = vmatpush1.msra.mxu0 %v113
    %1196 = vmatprep.subr.mxu0 0.0
    %1197 = vmatpush1.msra.mxu0 %v112
    %1198 = vmatprep.subr.mxu0 0.0
    %1199 = vmatpush1.msra.mxu0 %v111
    %1200 = vmatprep.subr.mxu0 0.0
    %1201 = vmatpush2.msra.mxu0 0.0
    %1202 = vmatprep.subr.mxu0 0.0
    %1203 = vmatpush2.msra.mxu0 0.0
    %1204 = vmatprep.subr.mxu0 0.0
    %1205 = vmatpush2.msra.mxu0 0.0
    %1206 = vmatprep.subr.mxu0 0.0
    %1207 = vmatpush2.msra.mxu0 0.0
    %1208 = vmatprep.subr.mxu0 0.0
    %1209 = vmatpush2.msra.mxu0 0.0
    %1210 = vmatprep.subr.mxu0 0.0
    %1211 = vmatpush2.msra.mxu0 0.0
    %1212 = vmatprep.subr.mxu0 0.0
    %1213 = vmatpush2.msra.mxu0 0.0
    %1214 = vmatprep.subr.mxu0 0.0
    %1215 = vmatpush2.msra.mxu0 0.0
    %1216 = vmatprep.subr.mxu0 0.0
    %1217 = vmatpush2.msra.mxu0 0.0
    %1218 = vmatprep.subr.mxu0 0.0
    %1219 = vmatpush2.msra.mxu0 0.0
    %1220 = vmatprep.subr.mxu0 0.0
    %1221 = vmatpush2.msra.mxu0 0.0
    %1222 = vmatprep.subr.mxu0 0.0
    %1223 = vmatpush2.msra.mxu0 0.0
    %1224 = vmatprep.subr.mxu0 0.0
    %1225 = vmatpush2.msra.mxu0 0.0
    %1226 = vmatprep.subr.mxu0 0.0
    %1227 = vmatpush2.msra.mxu0 0.0
    %1228 = vmatprep.subr.mxu0 0.0
    %1229 = vmatpush2.msra.mxu0 0.0
    %1230 = vmatprep.subr.mxu0 0.0
    %1231 = vmatpush2.msra.mxu0 0.0
    %1232 = vmatprep.mubr.f32.mxu0 0.0
    %1233 = vmatmul.mubr.f32.gmra.mxu0 %v1166
    %v1234 = vpop.f32.mrf.mxu0
    %v1235 = vadd.f32 %v852, %v1234
    %v1236 = vpop.f32.mrf.mxu0
    %1237 = vdwg.mxu0
    %v1239 = vsel %vm240, %v52, 0
    %1241 = vmatprep.subr.mxu0 0.0
    %1242 = vmatpush1.msra.mxu0 0.0
    %1243 = vmatprep.subr.mxu0 0.0
    %1244 = vmatpush1.msra.mxu0 0.0
    %1245 = vmatprep.subr.mxu0 0.0
    %1246 = vmatpush1.msra.mxu0 0.0
    %1247 = vmatprep.subr.mxu0 0.0
    %1248 = vmatpush1.msra.mxu0 0.0
    %1249 = vmatprep.subr.mxu0 0.0
    %1250 = vmatpush1.msra.mxu0 0.0
    %1251 = vmatprep.subr.mxu0 0.0
    %1252 = vmatpush1.msra.mxu0 0.0
    %1253 = vmatprep.subr.mxu0 0.0
    %1254 = vmatpush1.msra.mxu0 0.0
    %1255 = vmatprep.subr.mxu0 0.0
    %1256 = vmatpush1.msra.mxu0 0.0
    %1257 = vmatprep.subr.mxu0 0.0
    %1258 = vmatpush1.msra.mxu0 0.0
    %1259 = vmatprep.subr.mxu0 0.0
    %1260 = vmatpush1.msra.mxu0 0.0
    %1261 = vmatprep.subr.mxu0 0.0
    %1262 = vmatpush1.msra.mxu0 0.0
    %1263 = vmatprep.subr.mxu0 0.0
    %1264 = vmatpush1.msra.mxu0 0.0
    %1265 = vmatprep.subr.mxu0 0.0
    %1266 = vmatpush1.msra.mxu0 %v118
    %1267 = vmatprep.subr.mxu0 0.0
    %1268 = vmatpush1.msra.mxu0 %v117
    %1269 = vmatprep.subr.mxu0 0.0
    %1270 = vmatpush1.msra.mxu0 %v116
    %1271 = vmatprep.subr.mxu0 0.0
    %1272 = vmatpush1.msra.mxu0 %v115
    %1273 = vmatprep.subr.mxu0 0.0
    %1274 = vmatpush2.msra.mxu0 0.0
    %1275 = vmatprep.subr.mxu0 0.0
    %1276 = vmatpush2.msra.mxu0 0.0
    %1277 = vmatprep.subr.mxu0 0.0
    %1278 = vmatpush2.msra.mxu0 0.0
    %1279 = vmatprep.subr.mxu0 0.0
    %1280 = vmatpush2.msra.mxu0 0.0
    %1281 = vmatprep.subr.mxu0 0.0
    %1282 = vmatpush2.msra.mxu0 0.0
    %1283 = vmatprep.subr.mxu0 0.0
    %1284 = vmatpush2.msra.mxu0 0.0
    %1285 = vmatprep.subr.mxu0 0.0
    %1286 = vmatpush2.msra.mxu0 0.0
    %1287 = vmatprep.subr.mxu0 0.0
    %1288 = vmatpush2.msra.mxu0 0.0
    %1289 = vmatprep.subr.mxu0 0.0
    %1290 = vmatpush2.msra.mxu0 0.0
    %1291 = vmatprep.subr.mxu0 0.0
    %1292 = vmatpush2.msra.mxu0 0.0
    %1293 = vmatprep.subr.mxu0 0.0
    %1294 = vmatpush2.msra.mxu0 0.0
    %1295 = vmatprep.subr.mxu0 0.0
    %1296 = vmatpush2.msra.mxu0 0.0
    %1297 = vmatprep.subr.mxu0 0.0
    %1298 = vmatpush2.msra.mxu0 0.0
    %1299 = vmatprep.subr.mxu0 0.0
    %1300 = vmatpush2.msra.mxu0 0.0
    %1301 = vmatprep.subr.mxu0 0.0
    %1302 = vmatpush2.msra.mxu0 0.0
    %1303 = vmatprep.subr.mxu0 0.0
    %1304 = vmatpush2.msra.mxu0 0.0
    %1305 = vmatprep.mubr.f32.mxu0 0.0
    %1306 = vmatmul.mubr.f32.gmra.mxu0 %v1239
    %v1307 = vpop.f32.mrf.mxu0
    %v1308 = vadd.f32 %v856, %v1307
    %v1309 = vpop.f32.mrf.mxu0
    %1310 = vdwg.mxu0
    %v1312 = vsel %vm240, %v53, 0
    %1314 = vmatprep.subr.mxu0 0.0
    %1315 = vmatpush1.msra.mxu0 0.0
    %1316 = vmatprep.subr.mxu0 0.0
    %1317 = vmatpush1.msra.mxu0 0.0
    %1318 = vmatprep.subr.mxu0 0.0
    %1319 = vmatpush1.msra.mxu0 0.0
    %1320 = vmatprep.subr.mxu0 0.0
    %1321 = vmatpush1.msra.mxu0 0.0
    %1322 = vmatprep.subr.mxu0 0.0
    %1323 = vmatpush1.msra.mxu0 0.0
    %1324 = vmatprep.subr.mxu0 0.0
    %1325 = vmatpush1.msra.mxu0 0.0
    %1326 = vmatprep.subr.mxu0 0.0
    %1327 = vmatpush1.msra.mxu0 0.0
    %1328 = vmatprep.subr.mxu0 0.0
    %1329 = vmatpush1.msra.mxu0 0.0
    %1330 = vmatprep.subr.mxu0 0.0
    %1331 = vmatpush1.msra.mxu0 0.0
    %1332 = vmatprep.subr.mxu0 0.0
    %1333 = vmatpush1.msra.mxu0 0.0
    %1334 = vmatprep.subr.mxu0 0.0
    %1335 = vmatpush1.msra.mxu0 0.0
    %1336 = vmatprep.subr.mxu0 0.0
    %1337 = vmatpush1.msra.mxu0 0.0
    %1338 = vmatprep.subr.mxu0 0.0
    %1339 = vmatpush1.msra.mxu0 %v122
    %1340 = vmatprep.subr.mxu0 0.0
    %1341 = vmatpush1.msra.mxu0 %v121
    %1342 = vmatprep.subr.mxu0 0.0
    %1343 = vmatpush1.msra.mxu0 %v120
    %1344 = vmatprep.subr.mxu0 0.0
    %1345 = vmatpush1.msra.mxu0 %v119
    %1346 = vmatprep.subr.mxu0 0.0
    %1347 = vmatpush2.msra.mxu0 0.0
    %1348 = vmatprep.subr.mxu0 0.0
    %1349 = vmatpush2.msra.mxu0 0.0
    %1350 = vmatprep.subr.mxu0 0.0
    %1351 = vmatpush2.msra.mxu0 0.0
    %1352 = vmatprep.subr.mxu0 0.0
    %1353 = vmatpush2.msra.mxu0 0.0
    %1354 = vmatprep.subr.mxu0 0.0
    %1355 = vmatpush2.msra.mxu0 0.0
    %1356 = vmatprep.subr.mxu0 0.0
    %1357 = vmatpush2.msra.mxu0 0.0
    %1358 = vmatprep.subr.mxu0 0.0
    %1359 = vmatpush2.msra.mxu0 0.0
    %1360 = vmatprep.subr.mxu0 0.0
    %1361 = vmatpush2.msra.mxu0 0.0
    %1362 = vmatprep.subr.mxu0 0.0
    %1363 = vmatpush2.msra.mxu0 0.0
    %1364 = vmatprep.subr.mxu0 0.0
    %1365 = vmatpush2.msra.mxu0 0.0
    %1366 = vmatprep.subr.mxu0 0.0
    %1367 = vmatpush2.msra.mxu0 0.0
    %1368 = vmatprep.subr.mxu0 0.0
    %1369 = vmatpush2.msra.mxu0 0.0
    %1370 = vmatprep.subr.mxu0 0.0
    %1371 = vmatpush2.msra.mxu0 0.0
    %1372 = vmatprep.subr.mxu0 0.0
    %1373 = vmatpush2.msra.mxu0 0.0
    %1374 = vmatprep.subr.mxu0 0.0
    %1375 = vmatpush2.msra.mxu0 0.0
    %1376 = vmatprep.subr.mxu0 0.0
    %1377 = vmatpush2.msra.mxu0 0.0
    %1378 = vmatprep.mubr.f32.mxu0 0.0
    %1379 = vmatmul.mubr.f32.gmra.mxu0 %v1312
    %v1380 = vpop.f32.mrf.mxu0
    %v1381 = vadd.f32 %v860, %v1380
    %v1382 = vpop.f32.mrf.mxu0
    %1383 = vdwg.mxu0
    %v1385 = vsel %vm240, %v54, 0
    %1387 = vmatprep.subr.mxu0 0.0
    %1388 = vmatpush1.msra.mxu0 0.0
    %1389 = vmatprep.subr.mxu0 0.0
    %1390 = vmatpush1.msra.mxu0 0.0
    %1391 = vmatprep.subr.mxu0 0.0
    %1392 = vmatpush1.msra.mxu0 0.0
    %1393 = vmatprep.subr.mxu0 0.0
    %1394 = vmatpush1.msra.mxu0 0.0
    %1395 = vmatprep.subr.mxu0 0.0
    %1396 = vmatpush1.msra.mxu0 0.0
    %1397 = vmatprep.subr.mxu0 0.0
    %1398 = vmatpush1.msra.mxu0 0.0
    %1399 = vmatprep.subr.mxu0 0.0
    %1400 = vmatpush1.msra.mxu0 0.0
    %1401 = vmatprep.subr.mxu0 0.0
    %1402 = vmatpush1.msra.mxu0 0.0
    %1403 = vmatprep.subr.mxu0 0.0
    %1404 = vmatpush1.msra.mxu0 0.0
    %1405 = vmatprep.subr.mxu0 0.0
    %1406 = vmatpush1.msra.mxu0 0.0
    %1407 = vmatprep.subr.mxu0 0.0
    %1408 = vmatpush1.msra.mxu0 0.0
    %1409 = vmatprep.subr.mxu0 0.0
    %1410 = vmatpush1.msra.mxu0 0.0
    %1411 = vmatprep.subr.mxu0 0.0
    %1412 = vmatpush1.msra.mxu0 %v126
    %1413 = vmatprep.subr.mxu0 0.0
    %1414 = vmatpush1.msra.mxu0 %v125
    %1415 = vmatprep.subr.mxu0 0.0
    %1416 = vmatpush1.msra.mxu0 %v124
    %1417 = vmatprep.subr.mxu0 0.0
    %1418 = vmatpush1.msra.mxu0 %v123
    %1419 = vmatprep.subr.mxu0 0.0
    %1420 = vmatpush2.msra.mxu0 0.0
    %1421 = vmatprep.subr.mxu0 0.0
    %1422 = vmatpush2.msra.mxu0 0.0
    %1423 = vmatprep.subr.mxu0 0.0
    %1424 = vmatpush2.msra.mxu0 0.0
    %1425 = vmatprep.subr.mxu0 0.0
    %1426 = vmatpush2.msra.mxu0 0.0
    %1427 = vmatprep.subr.mxu0 0.0
    %1428 = vmatpush2.msra.mxu0 0.0
    %1429 = vmatprep.subr.mxu0 0.0
    %1430 = vmatpush2.msra.mxu0 0.0
    %1431 = vmatprep.subr.mxu0 0.0
    %1432 = vmatpush2.msra.mxu0 0.0
    %1433 = vmatprep.subr.mxu0 0.0
    %1434 = vmatpush2.msra.mxu0 0.0
    %1435 = vmatprep.subr.mxu0 0.0
    %1436 = vmatpush2.msra.mxu0 0.0
    %1437 = vmatprep.subr.mxu0 0.0
    %1438 = vmatpush2.msra.mxu0 0.0
    %1439 = vmatprep.subr.mxu0 0.0
    %1440 = vmatpush2.msra.mxu0 0.0
    %1441 = vmatprep.subr.mxu0 0.0
    %1442 = vmatpush2.msra.mxu0 0.0
    %1443 = vmatprep.subr.mxu0 0.0
    %1444 = vmatpush2.msra.mxu0 0.0
    %1445 = vmatprep.subr.mxu0 0.0
    %1446 = vmatpush2.msra.mxu0 0.0
    %1447 = vmatprep.subr.mxu0 0.0
    %1448 = vmatpush2.msra.mxu0 0.0
    %1449 = vmatprep.subr.mxu0 0.0
    %1450 = vmatpush2.msra.mxu0 0.0
    %1451 = vmatprep.mubr.f32.mxu0 0.0
    %1452 = vmatmul.mubr.f32.gmra.mxu0 %v1385
    %v1453 = vpop.f32.mrf.mxu0
    %v1454 = vadd.f32 %v864, %v1453
    %v1455 = vpop.f32.mrf.mxu0
    %1456 = vdwg.mxu0
    %v1465 = vlaneseq
    %v1466 = vshrl.u32 %v1465, 7
    %v1467 = vsub.s32 0, %v1466
    %v1468 = vrot.slane %v175, %v1467
    %v1469 = vlaneseq
    %v1470 = vshrl.u32 %v1469, 7
    %v1471 = vsub.s32 0, %v1470
    %v1472 = vrot.slane %v176, %v1471
    %v1473 = vlaneseq
    %v1474 = vshrl.u32 %v1473, 7
    %v1475 = vsub.s32 0, %v1474
    %v1476 = vrot.slane %v177, %v1475
    %v1477 = vlaneseq
    %v1478 = vshrl.u32 %v1477, 7
    %v1479 = vsub.s32 0, %v1478
    %v1480 = vrot.slane %v178, %v1479
    %v1481 = vlaneseq
    %v1482 = vshrl.u32 %v1481, 7
    %v1483 = vsub.s32 0, %v1482
    %v1484 = vrot.slane %v179, %v1483
    %v1485 = vlaneseq
    %v1486 = vshrl.u32 %v1485, 7
    %v1487 = vsub.s32 0, %v1486
    %v1488 = vrot.slane %v180, %v1487
    %v1489 = vlaneseq
    %v1490 = vshrl.u32 %v1489, 7
    %v1491 = vsub.s32 0, %v1490
    %v1492 = vrot.slane %v181, %v1491
    %v1493 = vlaneseq
    %v1494 = vshrl.u32 %v1493, 7
    %v1495 = vsub.s32 0, %v1494
    %v1496 = vrot.slane %v182, %v1495
    %v1506 = vsel %vm240, %v55, 0
    %1508 = vmatprep.subr.mxu0 0.0
    %1509 = vmatpush1.msra.mxu0 0.0
    %1510 = vmatprep.subr.mxu0 0.0
    %1511 = vmatpush1.msra.mxu0 0.0
    %1512 = vmatprep.subr.mxu0 0.0
    %1513 = vmatpush1.msra.mxu0 0.0
    %1514 = vmatprep.subr.mxu0 0.0
    %1515 = vmatpush1.msra.mxu0 0.0
    %1516 = vmatprep.subr.mxu0 0.0
    %1517 = vmatpush1.msra.mxu0 0.0
    %1518 = vmatprep.subr.mxu0 0.0
    %1519 = vmatpush1.msra.mxu0 0.0
    %1520 = vmatprep.subr.mxu0 0.0
    %1521 = vmatpush1.msra.mxu0 0.0
    %1522 = vmatprep.subr.mxu0 0.0
    %1523 = vmatpush1.msra.mxu0 0.0
    %1524 = vmatprep.subr.mxu0 0.0
    %1525 = vmatpush1.msra.mxu0 0.0
    %1526 = vmatprep.subr.mxu0 0.0
    %1527 = vmatpush1.msra.mxu0 0.0
    %1528 = vmatprep.subr.mxu0 0.0
    %1529 = vmatpush1.msra.mxu0 0.0
    %1530 = vmatprep.subr.mxu0 0.0
    %1531 = vmatpush1.msra.mxu0 0.0
    %1532 = vmatprep.subr.mxu0 0.0
    %1533 = vmatpush1.msra.mxu0 %v130
    %1534 = vmatprep.subr.mxu0 0.0
    %1535 = vmatpush1.msra.mxu0 %v129
    %1536 = vmatprep.subr.mxu0 0.0
    %1537 = vmatpush1.msra.mxu0 %v128
    %1538 = vmatprep.subr.mxu0 0.0
    %1539 = vmatpush1.msra.mxu0 %v127
    %1540 = vmatprep.subr.mxu0 0.0
    %1541 = vmatpush2.msra.mxu0 0.0
    %1542 = vmatprep.subr.mxu0 0.0
    %1543 = vmatpush2.msra.mxu0 0.0
    %1544 = vmatprep.subr.mxu0 0.0
    %1545 = vmatpush2.msra.mxu0 0.0
    %1546 = vmatprep.subr.mxu0 0.0
    %1547 = vmatpush2.msra.mxu0 0.0
    %1548 = vmatprep.subr.mxu0 0.0
    %1549 = vmatpush2.msra.mxu0 0.0
    %1550 = vmatprep.subr.mxu0 0.0
    %1551 = vmatpush2.msra.mxu0 0.0
    %1552 = vmatprep.subr.mxu0 0.0
    %1553 = vmatpush2.msra.mxu0 0.0
    %1554 = vmatprep.subr.mxu0 0.0
    %1555 = vmatpush2.msra.mxu0 0.0
    %1556 = vmatprep.subr.mxu0 0.0
    %1557 = vmatpush2.msra.mxu0 0.0
    %1558 = vmatprep.subr.mxu0 0.0
    %1559 = vmatpush2.msra.mxu0 0.0
    %1560 = vmatprep.subr.mxu0 0.0
    %1561 = vmatpush2.msra.mxu0 0.0
    %1562 = vmatprep.subr.mxu0 0.0
    %1563 = vmatpush2.msra.mxu0 0.0
    %1564 = vmatprep.subr.mxu0 0.0
    %1565 = vmatpush2.msra.mxu0 0.0
    %1566 = vmatprep.subr.mxu0 0.0
    %1567 = vmatpush2.msra.mxu0 0.0
    %1568 = vmatprep.subr.mxu0 0.0
    %1569 = vmatpush2.msra.mxu0 0.0
    %1570 = vmatprep.subr.mxu0 0.0
    %1571 = vmatpush2.msra.mxu0 0.0
    %1572 = vmatprep.mubr.f32.mxu0 0.0
    %1573 = vmatmul.mubr.f32.gmra.mxu0 %v1506
    %v1574 = vpop.f32.mrf.mxu0
    %v1575 = vadd.f32 %v1468, %v1574
    %v1576 = vpop.f32.mrf.mxu0
    %1577 = vdwg.mxu0
    %v1579 = vsel %vm240, %v56, 0
    %1581 = vmatprep.subr.mxu0 0.0
    %1582 = vmatpush1.msra.mxu0 0.0
    %1583 = vmatprep.subr.mxu0 0.0
    %1584 = vmatpush1.msra.mxu0 0.0
    %1585 = vmatprep.subr.mxu0 0.0
    %1586 = vmatpush1.msra.mxu0 0.0
    %1587 = vmatprep.subr.mxu0 0.0
    %1588 = vmatpush1.msra.mxu0 0.0
    %1589 = vmatprep.subr.mxu0 0.0
    %1590 = vmatpush1.msra.mxu0 0.0
    %1591 = vmatprep.subr.mxu0 0.0
    %1592 = vmatpush1.msra.mxu0 0.0
    %1593 = vmatprep.subr.mxu0 0.0
    %1594 = vmatpush1.msra.mxu0 0.0
    %1595 = vmatprep.subr.mxu0 0.0
    %1596 = vmatpush1.msra.mxu0 0.0
    %1597 = vmatprep.subr.mxu0 0.0
    %1598 = vmatpush1.msra.mxu0 0.0
    %1599 = vmatprep.subr.mxu0 0.0
    %1600 = vmatpush1.msra.mxu0 0.0
    %1601 = vmatprep.subr.mxu0 0.0
    %1602 = vmatpush1.msra.mxu0 0.0
    %1603 = vmatprep.subr.mxu0 0.0
    %1604 = vmatpush1.msra.mxu0 0.0
    %1605 = vmatprep.subr.mxu0 0.0
    %1606 = vmatpush1.msra.mxu0 %v134
    %1607 = vmatprep.subr.mxu0 0.0
    %1608 = vmatpush1.msra.mxu0 %v133
    %1609 = vmatprep.subr.mxu0 0.0
    %1610 = vmatpush1.msra.mxu0 %v132
    %1611 = vmatprep.subr.mxu0 0.0
    %1612 = vmatpush1.msra.mxu0 %v131
    %1613 = vmatprep.subr.mxu0 0.0
    %1614 = vmatpush2.msra.mxu0 0.0
    %1615 = vmatprep.subr.mxu0 0.0
    %1616 = vmatpush2.msra.mxu0 0.0
    %1617 = vmatprep.subr.mxu0 0.0
    %1618 = vmatpush2.msra.mxu0 0.0
    %1619 = vmatprep.subr.mxu0 0.0
    %1620 = vmatpush2.msra.mxu0 0.0
    %1621 = vmatprep.subr.mxu0 0.0
    %1622 = vmatpush2.msra.mxu0 0.0
    %1623 = vmatprep.subr.mxu0 0.0
    %1624 = vmatpush2.msra.mxu0 0.0
    %1625 = vmatprep.subr.mxu0 0.0
    %1626 = vmatpush2.msra.mxu0 0.0
    %1627 = vmatprep.subr.mxu0 0.0
    %1628 = vmatpush2.msra.mxu0 0.0
    %1629 = vmatprep.subr.mxu0 0.0
    %1630 = vmatpush2.msra.mxu0 0.0
    %1631 = vmatprep.subr.mxu0 0.0
    %1632 = vmatpush2.msra.mxu0 0.0
    %1633 = vmatprep.subr.mxu0 0.0
    %1634 = vmatpush2.msra.mxu0 0.0
    %1635 = vmatprep.subr.mxu0 0.0
    %1636 = vmatpush2.msra.mxu0 0.0
    %1637 = vmatprep.subr.mxu0 0.0
    %1638 = vmatpush2.msra.mxu0 0.0
    %1639 = vmatprep.subr.mxu0 0.0
    %1640 = vmatpush2.msra.mxu0 0.0
    %1641 = vmatprep.subr.mxu0 0.0
    %1642 = vmatpush2.msra.mxu0 0.0
    %1643 = vmatprep.subr.mxu0 0.0
    %1644 = vmatpush2.msra.mxu0 0.0
    %1645 = vmatprep.mubr.f32.mxu0 0.0
    %1646 = vmatmul.mubr.f32.gmra.mxu0 %v1579
    %v1647 = vpop.f32.mrf.mxu0
    %v1648 = vadd.f32 %v1472, %v1647
    %v1649 = vpop.f32.mrf.mxu0
    %1650 = vdwg.mxu0
    %v1652 = vsel %vm240, %v57, 0
    %1654 = vmatprep.subr.mxu0 0.0
    %1655 = vmatpush1.msra.mxu0 0.0
    %1656 = vmatprep.subr.mxu0 0.0
    %1657 = vmatpush1.msra.mxu0 0.0
    %1658 = vmatprep.subr.mxu0 0.0
    %1659 = vmatpush1.msra.mxu0 0.0
    %1660 = vmatprep.subr.mxu0 0.0
    %1661 = vmatpush1.msra.mxu0 0.0
    %1662 = vmatprep.subr.mxu0 0.0
    %1663 = vmatpush1.msra.mxu0 0.0
    %1664 = vmatprep.subr.mxu0 0.0
    %1665 = vmatpush1.msra.mxu0 0.0
    %1666 = vmatprep.subr.mxu0 0.0
    %1667 = vmatpush1.msra.mxu0 0.0
    %1668 = vmatprep.subr.mxu0 0.0
    %1669 = vmatpush1.msra.mxu0 0.0
    %1670 = vmatprep.subr.mxu0 0.0
    %1671 = vmatpush1.msra.mxu0 0.0
    %1672 = vmatprep.subr.mxu0 0.0
    %1673 = vmatpush1.msra.mxu0 0.0
    %1674 = vmatprep.subr.mxu0 0.0
    %1675 = vmatpush1.msra.mxu0 0.0
    %1676 = vmatprep.subr.mxu0 0.0
    %1677 = vmatpush1.msra.mxu0 0.0
    %1678 = vmatprep.subr.mxu0 0.0
    %1679 = vmatpush1.msra.mxu0 %v138
    %1680 = vmatprep.subr.mxu0 0.0
    %1681 = vmatpush1.msra.mxu0 %v137
    %1682 = vmatprep.subr.mxu0 0.0
    %1683 = vmatpush1.msra.mxu0 %v136
    %1684 = vmatprep.subr.mxu0 0.0
    %1685 = vmatpush1.msra.mxu0 %v135
    %1686 = vmatprep.subr.mxu0 0.0
    %1687 = vmatpush2.msra.mxu0 0.0
    %1688 = vmatprep.subr.mxu0 0.0
    %1689 = vmatpush2.msra.mxu0 0.0
    %1690 = vmatprep.subr.mxu0 0.0
    %1691 = vmatpush2.msra.mxu0 0.0
    %1692 = vmatprep.subr.mxu0 0.0
    %1693 = vmatpush2.msra.mxu0 0.0
    %1694 = vmatprep.subr.mxu0 0.0
    %1695 = vmatpush2.msra.mxu0 0.0
    %1696 = vmatprep.subr.mxu0 0.0
    %1697 = vmatpush2.msra.mxu0 0.0
    %1698 = vmatprep.subr.mxu0 0.0
    %1699 = vmatpush2.msra.mxu0 0.0
    %1700 = vmatprep.subr.mxu0 0.0
    %1701 = vmatpush2.msra.mxu0 0.0
    %1702 = vmatprep.subr.mxu0 0.0
    %1703 = vmatpush2.msra.mxu0 0.0
    %1704 = vmatprep.subr.mxu0 0.0
    %1705 = vmatpush2.msra.mxu0 0.0
    %1706 = vmatprep.subr.mxu0 0.0
    %1707 = vmatpush2.msra.mxu0 0.0
    %1708 = vmatprep.subr.mxu0 0.0
    %1709 = vmatpush2.msra.mxu0 0.0
    %1710 = vmatprep.subr.mxu0 0.0
    %1711 = vmatpush2.msra.mxu0 0.0
    %1712 = vmatprep.subr.mxu0 0.0
    %1713 = vmatpush2.msra.mxu0 0.0
    %1714 = vmatprep.subr.mxu0 0.0
    %1715 = vmatpush2.msra.mxu0 0.0
    %1716 = vmatprep.subr.mxu0 0.0
    %1717 = vmatpush2.msra.mxu0 0.0
    %1718 = vmatprep.mubr.f32.mxu0 0.0
    %1719 = vmatmul.mubr.f32.gmra.mxu0 %v1652
    %v1720 = vpop.f32.mrf.mxu0
    %v1721 = vadd.f32 %v1476, %v1720
    %v1722 = vpop.f32.mrf.mxu0
    %1723 = vdwg.mxu0
    %v1725 = vsel %vm240, %v58, 0
    %1727 = vmatprep.subr.mxu0 0.0
    %1728 = vmatpush1.msra.mxu0 0.0
    %1729 = vmatprep.subr.mxu0 0.0
    %1730 = vmatpush1.msra.mxu0 0.0
    %1731 = vmatprep.subr.mxu0 0.0
    %1732 = vmatpush1.msra.mxu0 0.0
    %1733 = vmatprep.subr.mxu0 0.0
    %1734 = vmatpush1.msra.mxu0 0.0
    %1735 = vmatprep.subr.mxu0 0.0
    %1736 = vmatpush1.msra.mxu0 0.0
    %1737 = vmatprep.subr.mxu0 0.0
    %1738 = vmatpush1.msra.mxu0 0.0
    %1739 = vmatprep.subr.mxu0 0.0
    %1740 = vmatpush1.msra.mxu0 0.0
    %1741 = vmatprep.subr.mxu0 0.0
    %1742 = vmatpush1.msra.mxu0 0.0
    %1743 = vmatprep.subr.mxu0 0.0
    %1744 = vmatpush1.msra.mxu0 0.0
    %1745 = vmatprep.subr.mxu0 0.0
    %1746 = vmatpush1.msra.mxu0 0.0
    %1747 = vmatprep.subr.mxu0 0.0
    %1748 = vmatpush1.msra.mxu0 0.0
    %1749 = vmatprep.subr.mxu0 0.0
    %1750 = vmatpush1.msra.mxu0 0.0
    %1751 = vmatprep.subr.mxu0 0.0
    %1752 = vmatpush1.msra.mxu0 %v142
    %1753 = vmatprep.subr.mxu0 0.0
    %1754 = vmatpush1.msra.mxu0 %v141
    %1755 = vmatprep.subr.mxu0 0.0
    %1756 = vmatpush1.msra.mxu0 %v140
    %1757 = vmatprep.subr.mxu0 0.0
    %1758 = vmatpush1.msra.mxu0 %v139
    %1759 = vmatprep.subr.mxu0 0.0
    %1760 = vmatpush2.msra.mxu0 0.0
    %1761 = vmatprep.subr.mxu0 0.0
    %1762 = vmatpush2.msra.mxu0 0.0
    %1763 = vmatprep.subr.mxu0 0.0
    %1764 = vmatpush2.msra.mxu0 0.0
    %1765 = vmatprep.subr.mxu0 0.0
    %1766 = vmatpush2.msra.mxu0 0.0
    %1767 = vmatprep.subr.mxu0 0.0
    %1768 = vmatpush2.msra.mxu0 0.0
    %1769 = vmatprep.subr.mxu0 0.0
    %1770 = vmatpush2.msra.mxu0 0.0
    %1771 = vmatprep.subr.mxu0 0.0
    %1772 = vmatpush2.msra.mxu0 0.0
    %1773 = vmatprep.subr.mxu0 0.0
    %1774 = vmatpush2.msra.mxu0 0.0
    %1775 = vmatprep.subr.mxu0 0.0
    %1776 = vmatpush2.msra.mxu0 0.0
    %1777 = vmatprep.subr.mxu0 0.0
    %1778 = vmatpush2.msra.mxu0 0.0
    %1779 = vmatprep.subr.mxu0 0.0
    %1780 = vmatpush2.msra.mxu0 0.0
    %1781 = vmatprep.subr.mxu0 0.0
    %1782 = vmatpush2.msra.mxu0 0.0
    %1783 = vmatprep.subr.mxu0 0.0
    %1784 = vmatpush2.msra.mxu0 0.0
    %1785 = vmatprep.subr.mxu0 0.0
    %1786 = vmatpush2.msra.mxu0 0.0
    %1787 = vmatprep.subr.mxu0 0.0
    %1788 = vmatpush2.msra.mxu0 0.0
    %1789 = vmatprep.subr.mxu0 0.0
    %1790 = vmatpush2.msra.mxu0 0.0
    %1791 = vmatprep.mubr.f32.mxu0 0.0
    %1792 = vmatmul.mubr.f32.gmra.mxu0 %v1725
    %v1793 = vpop.f32.mrf.mxu0
    %v1794 = vadd.f32 %v1480, %v1793
    %v1795 = vpop.f32.mrf.mxu0
    %1796 = vdwg.mxu0
    %v1798 = vsel %vm240, %v59, 0
    %1800 = vmatprep.subr.mxu0 0.0
    %1801 = vmatpush1.msra.mxu0 0.0
    %1802 = vmatprep.subr.mxu0 0.0
    %1803 = vmatpush1.msra.mxu0 0.0
    %1804 = vmatprep.subr.mxu0 0.0
    %1805 = vmatpush1.msra.mxu0 0.0
    %1806 = vmatprep.subr.mxu0 0.0
    %1807 = vmatpush1.msra.mxu0 0.0
    %1808 = vmatprep.subr.mxu0 0.0
    %1809 = vmatpush1.msra.mxu0 0.0
    %1810 = vmatprep.subr.mxu0 0.0
    %1811 = vmatpush1.msra.mxu0 0.0
    %1812 = vmatprep.subr.mxu0 0.0
    %1813 = vmatpush1.msra.mxu0 0.0
    %1814 = vmatprep.subr.mxu0 0.0
    %1815 = vmatpush1.msra.mxu0 0.0
    %1816 = vmatprep.subr.mxu0 0.0
    %1817 = vmatpush1.msra.mxu0 0.0
    %1818 = vmatprep.subr.mxu0 0.0
    %1819 = vmatpush1.msra.mxu0 0.0
    %1820 = vmatprep.subr.mxu0 0.0
    %1821 = vmatpush1.msra.mxu0 0.0
    %1822 = vmatprep.subr.mxu0 0.0
    %1823 = vmatpush1.msra.mxu0 0.0
    %1824 = vmatprep.subr.mxu0 0.0
    %1825 = vmatpush1.msra.mxu0 %v146
    %1826 = vmatprep.subr.mxu0 0.0
    %1827 = vmatpush1.msra.mxu0 %v145
    %1828 = vmatprep.subr.mxu0 0.0
    %1829 = vmatpush1.msra.mxu0 %v144
    %1830 = vmatprep.subr.mxu0 0.0
    %1831 = vmatpush1.msra.mxu0 %v143
    %1832 = vmatprep.subr.mxu0 0.0
    %1833 = vmatpush2.msra.mxu0 0.0
    %1834 = vmatprep.subr.mxu0 0.0
    %1835 = vmatpush2.msra.mxu0 0.0
    %1836 = vmatprep.subr.mxu0 0.0
    %1837 = vmatpush2.msra.mxu0 0.0
    %1838 = vmatprep.subr.mxu0 0.0
    %1839 = vmatpush2.msra.mxu0 0.0
    %1840 = vmatprep.subr.mxu0 0.0
    %1841 = vmatpush2.msra.mxu0 0.0
    %1842 = vmatprep.subr.mxu0 0.0
    %1843 = vmatpush2.msra.mxu0 0.0
    %1844 = vmatprep.subr.mxu0 0.0
    %1845 = vmatpush2.msra.mxu0 0.0
    %1846 = vmatprep.subr.mxu0 0.0
    %1847 = vmatpush2.msra.mxu0 0.0
    %1848 = vmatprep.subr.mxu0 0.0
    %1849 = vmatpush2.msra.mxu0 0.0
    %1850 = vmatprep.subr.mxu0 0.0
    %1851 = vmatpush2.msra.mxu0 0.0
    %1852 = vmatprep.subr.mxu0 0.0
    %1853 = vmatpush2.msra.mxu0 0.0
    %1854 = vmatprep.subr.mxu0 0.0
    %1855 = vmatpush2.msra.mxu0 0.0
    %1856 = vmatprep.subr.mxu0 0.0
    %1857 = vmatpush2.msra.mxu0 0.0
    %1858 = vmatprep.subr.mxu0 0.0
    %1859 = vmatpush2.msra.mxu0 0.0
    %1860 = vmatprep.subr.mxu0 0.0
    %1861 = vmatpush2.msra.mxu0 0.0
    %1862 = vmatprep.subr.mxu0 0.0
    %1863 = vmatpush2.msra.mxu0 0.0
    %1864 = vmatprep.mubr.f32.mxu0 0.0
    %1865 = vmatmul.mubr.f32.gmra.mxu0 %v1798
    %v1866 = vpop.f32.mrf.mxu0
    %v1867 = vadd.f32 %v1484, %v1866
    %v1868 = vpop.f32.mrf.mxu0
    %1869 = vdwg.mxu0
    %v1871 = vsel %vm240, %v60, 0
    %1873 = vmatprep.subr.mxu0 0.0
    %1874 = vmatpush1.msra.mxu0 0.0
    %1875 = vmatprep.subr.mxu0 0.0
    %1876 = vmatpush1.msra.mxu0 0.0
    %1877 = vmatprep.subr.mxu0 0.0
    %1878 = vmatpush1.msra.mxu0 0.0
    %1879 = vmatprep.subr.mxu0 0.0
    %1880 = vmatpush1.msra.mxu0 0.0
    %1881 = vmatprep.subr.mxu0 0.0
    %1882 = vmatpush1.msra.mxu0 0.0
    %1883 = vmatprep.subr.mxu0 0.0
    %1884 = vmatpush1.msra.mxu0 0.0
    %1885 = vmatprep.subr.mxu0 0.0
    %1886 = vmatpush1.msra.mxu0 0.0
    %1887 = vmatprep.subr.mxu0 0.0
    %1888 = vmatpush1.msra.mxu0 0.0
    %1889 = vmatprep.subr.mxu0 0.0
    %1890 = vmatpush1.msra.mxu0 0.0
    %1891 = vmatprep.subr.mxu0 0.0
    %1892 = vmatpush1.msra.mxu0 0.0
    %1893 = vmatprep.subr.mxu0 0.0
    %1894 = vmatpush1.msra.mxu0 0.0
    %1895 = vmatprep.subr.mxu0 0.0
    %1896 = vmatpush1.msra.mxu0 0.0
    %1897 = vmatprep.subr.mxu0 0.0
    %1898 = vmatpush1.msra.mxu0 %v150
    %1899 = vmatprep.subr.mxu0 0.0
    %1900 = vmatpush1.msra.mxu0 %v149
    %1901 = vmatprep.subr.mxu0 0.0
    %1902 = vmatpush1.msra.mxu0 %v148
    %1903 = vmatprep.subr.mxu0 0.0
    %1904 = vmatpush1.msra.mxu0 %v147
    %1905 = vmatprep.subr.mxu0 0.0
    %1906 = vmatpush2.msra.mxu0 0.0
    %1907 = vmatprep.subr.mxu0 0.0
    %1908 = vmatpush2.msra.mxu0 0.0
    %1909 = vmatprep.subr.mxu0 0.0
    %1910 = vmatpush2.msra.mxu0 0.0
    %1911 = vmatprep.subr.mxu0 0.0
    %1912 = vmatpush2.msra.mxu0 0.0
    %1913 = vmatprep.subr.mxu0 0.0
    %1914 = vmatpush2.msra.mxu0 0.0
    %1915 = vmatprep.subr.mxu0 0.0
    %1916 = vmatpush2.msra.mxu0 0.0
    %1917 = vmatprep.subr.mxu0 0.0
    %1918 = vmatpush2.msra.mxu0 0.0
    %1919 = vmatprep.subr.mxu0 0.0
    %1920 = vmatpush2.msra.mxu0 0.0
    %1921 = vmatprep.subr.mxu0 0.0
    %1922 = vmatpush2.msra.mxu0 0.0
    %1923 = vmatprep.subr.mxu0 0.0
    %1924 = vmatpush2.msra.mxu0 0.0
    %1925 = vmatprep.subr.mxu0 0.0
    %1926 = vmatpush2.msra.mxu0 0.0
    %1927 = vmatprep.subr.mxu0 0.0
    %1928 = vmatpush2.msra.mxu0 0.0
    %1929 = vmatprep.subr.mxu0 0.0
    %1930 = vmatpush2.msra.mxu0 0.0
    %1931 = vmatprep.subr.mxu0 0.0
    %1932 = vmatpush2.msra.mxu0 0.0
    %1933 = vmatprep.subr.mxu0 0.0
    %1934 = vmatpush2.msra.mxu0 0.0
    %1935 = vmatprep.subr.mxu0 0.0
    %1936 = vmatpush2.msra.mxu0 0.0
    %1937 = vmatprep.mubr.f32.mxu0 0.0
    %1938 = vmatmul.mubr.f32.gmra.mxu0 %v1871
    %v1939 = vpop.f32.mrf.mxu0
    %v1940 = vadd.f32 %v1488, %v1939
    %v1941 = vpop.f32.mrf.mxu0
    %1942 = vdwg.mxu0
    %v1944 = vsel %vm240, %v61, 0
    %1946 = vmatprep.subr.mxu0 0.0
    %1947 = vmatpush1.msra.mxu0 0.0
    %1948 = vmatprep.subr.mxu0 0.0
    %1949 = vmatpush1.msra.mxu0 0.0
    %1950 = vmatprep.subr.mxu0 0.0
    %1951 = vmatpush1.msra.mxu0 0.0
    %1952 = vmatprep.subr.mxu0 0.0
    %1953 = vmatpush1.msra.mxu0 0.0
    %1954 = vmatprep.subr.mxu0 0.0
    %1955 = vmatpush1.msra.mxu0 0.0
    %1956 = vmatprep.subr.mxu0 0.0
    %1957 = vmatpush1.msra.mxu0 0.0
    %1958 = vmatprep.subr.mxu0 0.0
    %1959 = vmatpush1.msra.mxu0 0.0
    %1960 = vmatprep.subr.mxu0 0.0
    %1961 = vmatpush1.msra.mxu0 0.0
    %1962 = vmatprep.subr.mxu0 0.0
    %1963 = vmatpush1.msra.mxu0 0.0
    %1964 = vmatprep.subr.mxu0 0.0
    %1965 = vmatpush1.msra.mxu0 0.0
    %1966 = vmatprep.subr.mxu0 0.0
    %1967 = vmatpush1.msra.mxu0 0.0
    %1968 = vmatprep.subr.mxu0 0.0
    %1969 = vmatpush1.msra.mxu0 0.0
    %1970 = vmatprep.subr.mxu0 0.0
    %1971 = vmatpush1.msra.mxu0 %v154
    %1972 = vmatprep.subr.mxu0 0.0
    %1973 = vmatpush1.msra.mxu0 %v153
    %1974 = vmatprep.subr.mxu0 0.0
    %1975 = vmatpush1.msra.mxu0 %v152
    %1976 = vmatprep.subr.mxu0 0.0
    %1977 = vmatpush1.msra.mxu0 %v151
    %1978 = vmatprep.subr.mxu0 0.0
    %1979 = vmatpush2.msra.mxu0 0.0
    %1980 = vmatprep.subr.mxu0 0.0
    %1981 = vmatpush2.msra.mxu0 0.0
    %1982 = vmatprep.subr.mxu0 0.0
    %1983 = vmatpush2.msra.mxu0 0.0
    %1984 = vmatprep.subr.mxu0 0.0
    %1985 = vmatpush2.msra.mxu0 0.0
    %1986 = vmatprep.subr.mxu0 0.0
    %1987 = vmatpush2.msra.mxu0 0.0
    %1988 = vmatprep.subr.mxu0 0.0
    %1989 = vmatpush2.msra.mxu0 0.0
    %1990 = vmatprep.subr.mxu0 0.0
    %1991 = vmatpush2.msra.mxu0 0.0
    %1992 = vmatprep.subr.mxu0 0.0
    %1993 = vmatpush2.msra.mxu0 0.0
    %1994 = vmatprep.subr.mxu0 0.0
    %1995 = vmatpush2.msra.mxu0 0.0
    %1996 = vmatprep.subr.mxu0 0.0
    %1997 = vmatpush2.msra.mxu0 0.0
    %1998 = vmatprep.subr.mxu0 0.0
    %1999 = vmatpush2.msra.mxu0 0.0
    %2000 = vmatprep.subr.mxu0 0.0
    %2001 = vmatpush2.msra.mxu0 0.0
    %2002 = vmatprep.subr.mxu0 0.0
    %2003 = vmatpush2.msra.mxu0 0.0
    %2004 = vmatprep.subr.mxu0 0.0
    %2005 = vmatpush2.msra.mxu0 0.0
    %2006 = vmatprep.subr.mxu0 0.0
    %2007 = vmatpush2.msra.mxu0 0.0
    %2008 = vmatprep.subr.mxu0 0.0
    %2009 = vmatpush2.msra.mxu0 0.0
    %2010 = vmatprep.mubr.f32.mxu0 0.0
    %2011 = vmatmul.mubr.f32.gmra.mxu0 %v1944
    %v2012 = vpop.f32.mrf.mxu0
    %v2013 = vadd.f32 %v1492, %v2012
    %v2014 = vpop.f32.mrf.mxu0
    %2015 = vdwg.mxu0
    %v2017 = vsel %vm240, %v62, 0
    %2019 = vmatprep.subr.mxu0 0.0
    %2020 = vmatpush1.msra.mxu0 0.0
    %2021 = vmatprep.subr.mxu0 0.0
    %2022 = vmatpush1.msra.mxu0 0.0
    %2023 = vmatprep.subr.mxu0 0.0
    %2024 = vmatpush1.msra.mxu0 0.0
    %2025 = vmatprep.subr.mxu0 0.0
    %2026 = vmatpush1.msra.mxu0 0.0
    %2027 = vmatprep.subr.mxu0 0.0
    %2028 = vmatpush1.msra.mxu0 0.0
    %2029 = vmatprep.subr.mxu0 0.0
    %2030 = vmatpush1.msra.mxu0 0.0
    %2031 = vmatprep.subr.mxu0 0.0
    %2032 = vmatpush1.msra.mxu0 0.0
    %2033 = vmatprep.subr.mxu0 0.0
    %2034 = vmatpush1.msra.mxu0 0.0
    %2035 = vmatprep.subr.mxu0 0.0
    %2036 = vmatpush1.msra.mxu0 0.0
    %2037 = vmatprep.subr.mxu0 0.0
    %2038 = vmatpush1.msra.mxu0 0.0
    %2039 = vmatprep.subr.mxu0 0.0
    %2040 = vmatpush1.msra.mxu0 0.0
    %2041 = vmatprep.subr.mxu0 0.0
    %2042 = vmatpush1.msra.mxu0 0.0
    %2043 = vmatprep.subr.mxu0 0.0
    %2044 = vmatpush1.msra.mxu0 %v158
    %2045 = vmatprep.subr.mxu0 0.0
    %2046 = vmatpush1.msra.mxu0 %v157
    %2047 = vmatprep.subr.mxu0 0.0
    %2048 = vmatpush1.msra.mxu0 %v156
    %2049 = vmatprep.subr.mxu0 0.0
    %2050 = vmatpush1.msra.mxu0 %v155
    %2051 = vmatprep.subr.mxu0 0.0
    %2052 = vmatpush2.msra.mxu0 0.0
    %2053 = vmatprep.subr.mxu0 0.0
    %2054 = vmatpush2.msra.mxu0 0.0
    %2055 = vmatprep.subr.mxu0 0.0
    %2056 = vmatpush2.msra.mxu0 0.0
    %2057 = vmatprep.subr.mxu0 0.0
    %2058 = vmatpush2.msra.mxu0 0.0
    %2059 = vmatprep.subr.mxu0 0.0
    %2060 = vmatpush2.msra.mxu0 0.0
    %2061 = vmatprep.subr.mxu0 0.0
    %2062 = vmatpush2.msra.mxu0 0.0
    %2063 = vmatprep.subr.mxu0 0.0
    %2064 = vmatpush2.msra.mxu0 0.0
    %2065 = vmatprep.subr.mxu0 0.0
    %2066 = vmatpush2.msra.mxu0 0.0
    %2067 = vmatprep.subr.mxu0 0.0
    %2068 = vmatpush2.msra.mxu0 0.0
    %2069 = vmatprep.subr.mxu0 0.0
    %2070 = vmatpush2.msra.mxu0 0.0
    %2071 = vmatprep.subr.mxu0 0.0
    %2072 = vmatpush2.msra.mxu0 0.0
    %2073 = vmatprep.subr.mxu0 0.0
    %2074 = vmatpush2.msra.mxu0 0.0
    %2075 = vmatprep.subr.mxu0 0.0
    %2076 = vmatpush2.msra.mxu0 0.0
    %2077 = vmatprep.subr.mxu0 0.0
    %2078 = vmatpush2.msra.mxu0 0.0
    %2079 = vmatprep.subr.mxu0 0.0
    %2080 = vmatpush2.msra.mxu0 0.0
    %2081 = vmatprep.subr.mxu0 0.0
    %2082 = vmatpush2.msra.mxu0 0.0
    %2083 = vmatprep.mubr.f32.mxu0 0.0
    %2084 = vmatmul.mubr.f32.gmra.mxu0 %v2017
    %v2085 = vpop.f32.mrf.mxu0
    %v2086 = vadd.f32 %v1496, %v2085
    %v2087 = vpop.f32.mrf.mxu0
    %2088 = vdwg.mxu0
    %vm2089 = vcmask 64512
    %v2091 = vsel %vm2089, %v311, 0
    %v2094 = vsel %vm2089, %v943, 0
    %2096 = vmatprep.subr.mxu0 0.0
    %2097 = vmatpush1.xpose.msra.mxu0 0.0
    %2098 = vmatprep.subr.mxu0 0.0
    %2099 = vmatpush1.xpose.msra.mxu0 0.0
    %2100 = vmatprep.subr.mxu0 0.0
    %2101 = vmatpush1.xpose.msra.mxu0 0.0
    %2102 = vmatprep.subr.mxu0 0.0
    %2103 = vmatpush1.xpose.msra.mxu0 0.0
    %2104 = vmatprep.subr.mxu0 0.0
    %2105 = vmatpush1.xpose.msra.mxu0 0.0
    %2106 = vmatprep.subr.mxu0 0.0
    %2107 = vmatpush1.xpose.msra.mxu0 0.0
    %2108 = vmatprep.subr.mxu0 0.0
    %2109 = vmatpush1.xpose.msra.mxu0 0.0
    %2110 = vmatprep.subr.mxu0 0.0
    %2111 = vmatpush1.xpose.msra.mxu0 0.0
    %2112 = vmatprep.subr.mxu0 0.0
    %2113 = vmatpush1.xpose.msra.mxu0 0.0
    %2114 = vmatprep.subr.mxu0 0.0
    %2115 = vmatpush1.xpose.msra.mxu0 0.0
    %2116 = vmatprep.subr.mxu0 0.0
    %2117 = vmatpush1.xpose.msra.mxu0 0.0
    %2118 = vmatprep.subr.mxu0 0.0
    %2119 = vmatpush1.xpose.msra.mxu0 0.0
    %2120 = vmatprep.subr.mxu0 0.0
    %2121 = vmatpush1.xpose.msra.mxu0 0.0
    %2122 = vmatprep.subr.mxu0 0.0
    %2123 = vmatpush1.xpose.msra.mxu0 0.0
    %2124 = vmatprep.subr.mxu0 0.0
    %2125 = vmatpush1.xpose.msra.mxu0 0.0
    %2126 = vmatprep.subr.mxu0 0.0
    %2127 = vmatpush1.xpose.msra.mxu0 %v2094
    %2128 = vmatprep.subr.mxu0 0.0
    %2129 = vmatpush2.xpose.msra.mxu0 0.0
    %2130 = vmatprep.subr.mxu0 0.0
    %2131 = vmatpush2.xpose.msra.mxu0 0.0
    %2132 = vmatprep.subr.mxu0 0.0
    %2133 = vmatpush2.xpose.msra.mxu0 0.0
    %2134 = vmatprep.subr.mxu0 0.0
    %2135 = vmatpush2.xpose.msra.mxu0 0.0
    %2136 = vmatprep.subr.mxu0 0.0
    %2137 = vmatpush2.xpose.msra.mxu0 0.0
    %2138 = vmatprep.subr.mxu0 0.0
    %2139 = vmatpush2.xpose.msra.mxu0 0.0
    %2140 = vmatprep.subr.mxu0 0.0
    %2141 = vmatpush2.xpose.msra.mxu0 0.0
    %2142 = vmatprep.subr.mxu0 0.0
    %2143 = vmatpush2.xpose.msra.mxu0 0.0
    %2144 = vmatprep.subr.mxu0 0.0
    %2145 = vmatpush2.xpose.msra.mxu0 0.0
    %2146 = vmatprep.subr.mxu0 0.0
    %2147 = vmatpush2.xpose.msra.mxu0 0.0
    %2148 = vmatprep.subr.mxu0 0.0
    %2149 = vmatpush2.xpose.msra.mxu0 0.0
    %2150 = vmatprep.subr.mxu0 0.0
    %2151 = vmatpush2.xpose.msra.mxu0 0.0
    %2152 = vmatprep.subr.mxu0 0.0
    %2153 = vmatpush2.xpose.msra.mxu0 0.0
    %2154 = vmatprep.subr.mxu0 0.0
    %2155 = vmatpush2.xpose.msra.mxu0 0.0
    %2156 = vmatprep.subr.mxu0 0.0
    %2157 = vmatpush2.xpose.msra.mxu0 0.0
    %2158 = vmatprep.subr.mxu0 0.0
    %2159 = vmatpush2.xpose.msra.mxu0 0.0
    %2160 = vmatprep.mubr.f32.mxu0 0.0
    %2161 = vmatmul.mubr.f32.gmra.mxu0 %v2091
    %v2162 = vpop.f32.mrf.mxu0
    %v2163 = vadd.f32 0.0, %v2162
    %v2164 = vpop.f32.mrf.mxu0
    %2165 = vdwg.mxu0
    %v2167 = vsel %vm2089, %v384, 0
    %v2170 = vsel %vm2089, %v1016, 0
    %2172 = vmatprep.subr.mxu0 0.0
    %2173 = vmatpush1.xpose.msra.mxu0 0.0
    %2174 = vmatprep.subr.mxu0 0.0
    %2175 = vmatpush1.xpose.msra.mxu0 0.0
    %2176 = vmatprep.subr.mxu0 0.0
    %2177 = vmatpush1.xpose.msra.mxu0 0.0
    %2178 = vmatprep.subr.mxu0 0.0
    %2179 = vmatpush1.xpose.msra.mxu0 0.0
    %2180 = vmatprep.subr.mxu0 0.0
    %2181 = vmatpush1.xpose.msra.mxu0 0.0
    %2182 = vmatprep.subr.mxu0 0.0
    %2183 = vmatpush1.xpose.msra.mxu0 0.0
    %2184 = vmatprep.subr.mxu0 0.0
    %2185 = vmatpush1.xpose.msra.mxu0 0.0
    %2186 = vmatprep.subr.mxu0 0.0
    %2187 = vmatpush1.xpose.msra.mxu0 0.0
    %2188 = vmatprep.subr.mxu0 0.0
    %2189 = vmatpush1.xpose.msra.mxu0 0.0
    %2190 = vmatprep.subr.mxu0 0.0
    %2191 = vmatpush1.xpose.msra.mxu0 0.0
    %2192 = vmatprep.subr.mxu0 0.0
    %2193 = vmatpush1.xpose.msra.mxu0 0.0
    %2194 = vmatprep.subr.mxu0 0.0
    %2195 = vmatpush1.xpose.msra.mxu0 0.0
    %2196 = vmatprep.subr.mxu0 0.0
    %2197 = vmatpush1.xpose.msra.mxu0 0.0
    %2198 = vmatprep.subr.mxu0 0.0
    %2199 = vmatpush1.xpose.msra.mxu0 0.0
    %2200 = vmatprep.subr.mxu0 0.0
    %2201 = vmatpush1.xpose.msra.mxu0 0.0
    %2202 = vmatprep.subr.mxu0 0.0
    %2203 = vmatpush1.xpose.msra.mxu0 %v2170
    %2204 = vmatprep.subr.mxu0 0.0
    %2205 = vmatpush2.xpose.msra.mxu0 0.0
    %2206 = vmatprep.subr.mxu0 0.0
    %2207 = vmatpush2.xpose.msra.mxu0 0.0
    %2208 = vmatprep.subr.mxu0 0.0
    %2209 = vmatpush2.xpose.msra.mxu0 0.0
    %2210 = vmatprep.subr.mxu0 0.0
    %2211 = vmatpush2.xpose.msra.mxu0 0.0
    %2212 = vmatprep.subr.mxu0 0.0
    %2213 = vmatpush2.xpose.msra.mxu0 0.0
    %2214 = vmatprep.subr.mxu0 0.0
    %2215 = vmatpush2.xpose.msra.mxu0 0.0
    %2216 = vmatprep.subr.mxu0 0.0
    %2217 = vmatpush2.xpose.msra.mxu0 0.0
    %2218 = vmatprep.subr.mxu0 0.0
    %2219 = vmatpush2.xpose.msra.mxu0 0.0
    %2220 = vmatprep.subr.mxu0 0.0
    %2221 = vmatpush2.xpose.msra.mxu0 0.0
    %2222 = vmatprep.subr.mxu0 0.0
    %2223 = vmatpush2.xpose.msra.mxu0 0.0
    %2224 = vmatprep.subr.mxu0 0.0
    %2225 = vmatpush2.xpose.msra.mxu0 0.0
    %2226 = vmatprep.subr.mxu0 0.0
    %2227 = vmatpush2.xpose.msra.mxu0 0.0
    %2228 = vmatprep.subr.mxu0 0.0
    %2229 = vmatpush2.xpose.msra.mxu0 0.0
    %2230 = vmatprep.subr.mxu0 0.0
    %2231 = vmatpush2.xpose.msra.mxu0 0.0
    %2232 = vmatprep.subr.mxu0 0.0
    %2233 = vmatpush2.xpose.msra.mxu0 0.0
    %2234 = vmatprep.subr.mxu0 0.0
    %2235 = vmatpush2.xpose.msra.mxu0 0.0
    %2236 = vmatprep.mubr.f32.mxu0 0.0
    %2237 = vmatmul.mubr.f32.gmra.mxu0 %v2167
    %v2238 = vpop.f32.mrf.mxu0
    %v2239 = vadd.f32 0.0, %v2238
    %v2240 = vpop.f32.mrf.mxu0
    %2241 = vdwg.mxu0
    %v2243 = vsel %vm2089, %v457, 0
    %v2246 = vsel %vm2089, %v1089, 0
    %2248 = vmatprep.subr.mxu0 0.0
    %2249 = vmatpush1.xpose.msra.mxu0 0.0
    %2250 = vmatprep.subr.mxu0 0.0
    %2251 = vmatpush1.xpose.msra.mxu0 0.0
    %2252 = vmatprep.subr.mxu0 0.0
    %2253 = vmatpush1.xpose.msra.mxu0 0.0
    %2254 = vmatprep.subr.mxu0 0.0
    %2255 = vmatpush1.xpose.msra.mxu0 0.0
    %2256 = vmatprep.subr.mxu0 0.0
    %2257 = vmatpush1.xpose.msra.mxu0 0.0
    %2258 = vmatprep.subr.mxu0 0.0
    %2259 = vmatpush1.xpose.msra.mxu0 0.0
    %2260 = vmatprep.subr.mxu0 0.0
    %2261 = vmatpush1.xpose.msra.mxu0 0.0
    %2262 = vmatprep.subr.mxu0 0.0
    %2263 = vmatpush1.xpose.msra.mxu0 0.0
    %2264 = vmatprep.subr.mxu0 0.0
    %2265 = vmatpush1.xpose.msra.mxu0 0.0
    %2266 = vmatprep.subr.mxu0 0.0
    %2267 = vmatpush1.xpose.msra.mxu0 0.0
    %2268 = vmatprep.subr.mxu0 0.0
    %2269 = vmatpush1.xpose.msra.mxu0 0.0
    %2270 = vmatprep.subr.mxu0 0.0
    %2271 = vmatpush1.xpose.msra.mxu0 0.0
    %2272 = vmatprep.subr.mxu0 0.0
    %2273 = vmatpush1.xpose.msra.mxu0 0.0
    %2274 = vmatprep.subr.mxu0 0.0
    %2275 = vmatpush1.xpose.msra.mxu0 0.0
    %2276 = vmatprep.subr.mxu0 0.0
    %2277 = vmatpush1.xpose.msra.mxu0 0.0
    %2278 = vmatprep.subr.mxu0 0.0
    %2279 = vmatpush1.xpose.msra.mxu0 %v2246
    %2280 = vmatprep.subr.mxu0 0.0
    %2281 = vmatpush2.xpose.msra.mxu0 0.0
    %2282 = vmatprep.subr.mxu0 0.0
    %2283 = vmatpush2.xpose.msra.mxu0 0.0
    %2284 = vmatprep.subr.mxu0 0.0
    %2285 = vmatpush2.xpose.msra.mxu0 0.0
    %2286 = vmatprep.subr.mxu0 0.0
    %2287 = vmatpush2.xpose.msra.mxu0 0.0
    %2288 = vmatprep.subr.mxu0 0.0
    %2289 = vmatpush2.xpose.msra.mxu0 0.0
    %2290 = vmatprep.subr.mxu0 0.0
    %2291 = vmatpush2.xpose.msra.mxu0 0.0
    %2292 = vmatprep.subr.mxu0 0.0
    %2293 = vmatpush2.xpose.msra.mxu0 0.0
    %2294 = vmatprep.subr.mxu0 0.0
    %2295 = vmatpush2.xpose.msra.mxu0 0.0
    %2296 = vmatprep.subr.mxu0 0.0
    %2297 = vmatpush2.xpose.msra.mxu0 0.0
    %2298 = vmatprep.subr.mxu0 0.0
    %2299 = vmatpush2.xpose.msra.mxu0 0.0
    %2300 = vmatprep.subr.mxu0 0.0
    %2301 = vmatpush2.xpose.msra.mxu0 0.0
    %2302 = vmatprep.subr.mxu0 0.0
    %2303 = vmatpush2.xpose.msra.mxu0 0.0
    %2304 = vmatprep.subr.mxu0 0.0
    %2305 = vmatpush2.xpose.msra.mxu0 0.0
    %2306 = vmatprep.subr.mxu0 0.0
    %2307 = vmatpush2.xpose.msra.mxu0 0.0
    %2308 = vmatprep.subr.mxu0 0.0
    %2309 = vmatpush2.xpose.msra.mxu0 0.0
    %2310 = vmatprep.subr.mxu0 0.0
    %2311 = vmatpush2.xpose.msra.mxu0 0.0
    %2312 = vmatprep.mubr.f32.mxu0 0.0
    %2313 = vmatmul.mubr.f32.gmra.mxu0 %v2243
    %v2314 = vpop.f32.mrf.mxu0
    %v2315 = vadd.f32 0.0, %v2314
    %v2316 = vpop.f32.mrf.mxu0
    %2317 = vdwg.mxu0
    %v2319 = vsel %vm2089, %v530, 0
    %v2322 = vsel %vm2089, %v1162, 0
    %2324 = vmatprep.subr.mxu0 0.0
    %2325 = vmatpush1.xpose.msra.mxu0 0.0
    %2326 = vmatprep.subr.mxu0 0.0
    %2327 = vmatpush1.xpose.msra.mxu0 0.0
    %2328 = vmatprep.subr.mxu0 0.0
    %2329 = vmatpush1.xpose.msra.mxu0 0.0
    %2330 = vmatprep.subr.mxu0 0.0
    %2331 = vmatpush1.xpose.msra.mxu0 0.0
    %2332 = vmatprep.subr.mxu0 0.0
    %2333 = vmatpush1.xpose.msra.mxu0 0.0
    %2334 = vmatprep.subr.mxu0 0.0
    %2335 = vmatpush1.xpose.msra.mxu0 0.0
    %2336 = vmatprep.subr.mxu0 0.0
    %2337 = vmatpush1.xpose.msra.mxu0 0.0
    %2338 = vmatprep.subr.mxu0 0.0
    %2339 = vmatpush1.xpose.msra.mxu0 0.0
    %2340 = vmatprep.subr.mxu0 0.0
    %2341 = vmatpush1.xpose.msra.mxu0 0.0
    %2342 = vmatprep.subr.mxu0 0.0
    %2343 = vmatpush1.xpose.msra.mxu0 0.0
    %2344 = vmatprep.subr.mxu0 0.0
    %2345 = vmatpush1.xpose.msra.mxu0 0.0
    %2346 = vmatprep.subr.mxu0 0.0
    %2347 = vmatpush1.xpose.msra.mxu0 0.0
    %2348 = vmatprep.subr.mxu0 0.0
    %2349 = vmatpush1.xpose.msra.mxu0 0.0
    %2350 = vmatprep.subr.mxu0 0.0
    %2351 = vmatpush1.xpose.msra.mxu0 0.0
    %2352 = vmatprep.subr.mxu0 0.0
    %2353 = vmatpush1.xpose.msra.mxu0 0.0
    %2354 = vmatprep.subr.mxu0 0.0
    %2355 = vmatpush1.xpose.msra.mxu0 %v2322
    %2356 = vmatprep.subr.mxu0 0.0
    %2357 = vmatpush2.xpose.msra.mxu0 0.0
    %2358 = vmatprep.subr.mxu0 0.0
    %2359 = vmatpush2.xpose.msra.mxu0 0.0
    %2360 = vmatprep.subr.mxu0 0.0
    %2361 = vmatpush2.xpose.msra.mxu0 0.0
    %2362 = vmatprep.subr.mxu0 0.0
    %2363 = vmatpush2.xpose.msra.mxu0 0.0
    %2364 = vmatprep.subr.mxu0 0.0
    %2365 = vmatpush2.xpose.msra.mxu0 0.0
    %2366 = vmatprep.subr.mxu0 0.0
    %2367 = vmatpush2.xpose.msra.mxu0 0.0
    %2368 = vmatprep.subr.mxu0 0.0
    %2369 = vmatpush2.xpose.msra.mxu0 0.0
    %2370 = vmatprep.subr.mxu0 0.0
    %2371 = vmatpush2.xpose.msra.mxu0 0.0
    %2372 = vmatprep.subr.mxu0 0.0
    %2373 = vmatpush2.xpose.msra.mxu0 0.0
    %2374 = vmatprep.subr.mxu0 0.0
    %2375 = vmatpush2.xpose.msra.mxu0 0.0
    %2376 = vmatprep.subr.mxu0 0.0
    %2377 = vmatpush2.xpose.msra.mxu0 0.0
    %2378 = vmatprep.subr.mxu0 0.0
    %2379 = vmatpush2.xpose.msra.mxu0 0.0
    %2380 = vmatprep.subr.mxu0 0.0
    %2381 = vmatpush2.xpose.msra.mxu0 0.0
    %2382 = vmatprep.subr.mxu0 0.0
    %2383 = vmatpush2.xpose.msra.mxu0 0.0
    %2384 = vmatprep.subr.mxu0 0.0
    %2385 = vmatpush2.xpose.msra.mxu0 0.0
    %2386 = vmatprep.subr.mxu0 0.0
    %2387 = vmatpush2.xpose.msra.mxu0 0.0
    %2388 = vmatprep.mubr.f32.mxu0 0.0
    %2389 = vmatmul.mubr.f32.gmra.mxu0 %v2319
    %v2390 = vpop.f32.mrf.mxu0
    %v2391 = vadd.f32 0.0, %v2390
    %v2392 = vpop.f32.mrf.mxu0
    %2393 = vdwg.mxu0
    %v2395 = vsel %vm2089, %v603, 0
    %v2398 = vsel %vm2089, %v1235, 0
    %2400 = vmatprep.subr.mxu0 0.0
    %2401 = vmatpush1.xpose.msra.mxu0 0.0
    %2402 = vmatprep.subr.mxu0 0.0
    %2403 = vmatpush1.xpose.msra.mxu0 0.0
    %2404 = vmatprep.subr.mxu0 0.0
    %2405 = vmatpush1.xpose.msra.mxu0 0.0
    %2406 = vmatprep.subr.mxu0 0.0
    %2407 = vmatpush1.xpose.msra.mxu0 0.0
    %2408 = vmatprep.subr.mxu0 0.0
    %2409 = vmatpush1.xpose.msra.mxu0 0.0
    %2410 = vmatprep.subr.mxu0 0.0
    %2411 = vmatpush1.xpose.msra.mxu0 0.0
    %2412 = vmatprep.subr.mxu0 0.0
    %2413 = vmatpush1.xpose.msra.mxu0 0.0
    %2414 = vmatprep.subr.mxu0 0.0
    %2415 = vmatpush1.xpose.msra.mxu0 0.0
    %2416 = vmatprep.subr.mxu0 0.0
    %2417 = vmatpush1.xpose.msra.mxu0 0.0
    %2418 = vmatprep.subr.mxu0 0.0
    %2419 = vmatpush1.xpose.msra.mxu0 0.0
    %2420 = vmatprep.subr.mxu0 0.0
    %2421 = vmatpush1.xpose.msra.mxu0 0.0
    %2422 = vmatprep.subr.mxu0 0.0
    %2423 = vmatpush1.xpose.msra.mxu0 0.0
    %2424 = vmatprep.subr.mxu0 0.0
    %2425 = vmatpush1.xpose.msra.mxu0 0.0
    %2426 = vmatprep.subr.mxu0 0.0
    %2427 = vmatpush1.xpose.msra.mxu0 0.0
    %2428 = vmatprep.subr.mxu0 0.0
    %2429 = vmatpush1.xpose.msra.mxu0 0.0
    %2430 = vmatprep.subr.mxu0 0.0
    %2431 = vmatpush1.xpose.msra.mxu0 %v2398
    %2432 = vmatprep.subr.mxu0 0.0
    %2433 = vmatpush2.xpose.msra.mxu0 0.0
    %2434 = vmatprep.subr.mxu0 0.0
    %2435 = vmatpush2.xpose.msra.mxu0 0.0
    %2436 = vmatprep.subr.mxu0 0.0
    %2437 = vmatpush2.xpose.msra.mxu0 0.0
    %2438 = vmatprep.subr.mxu0 0.0
    %2439 = vmatpush2.xpose.msra.mxu0 0.0
    %2440 = vmatprep.subr.mxu0 0.0
    %2441 = vmatpush2.xpose.msra.mxu0 0.0
    %2442 = vmatprep.subr.mxu0 0.0
    %2443 = vmatpush2.xpose.msra.mxu0 0.0
    %2444 = vmatprep.subr.mxu0 0.0
    %2445 = vmatpush2.xpose.msra.mxu0 0.0
    %2446 = vmatprep.subr.mxu0 0.0
    %2447 = vmatpush2.xpose.msra.mxu0 0.0
    %2448 = vmatprep.subr.mxu0 0.0
    %2449 = vmatpush2.xpose.msra.mxu0 0.0
    %2450 = vmatprep.subr.mxu0 0.0
    %2451 = vmatpush2.xpose.msra.mxu0 0.0
    %2452 = vmatprep.subr.mxu0 0.0
    %2453 = vmatpush2.xpose.msra.mxu0 0.0
    %2454 = vmatprep.subr.mxu0 0.0
    %2455 = vmatpush2.xpose.msra.mxu0 0.0
    %2456 = vmatprep.subr.mxu0 0.0
    %2457 = vmatpush2.xpose.msra.mxu0 0.0
    %2458 = vmatprep.subr.mxu0 0.0
    %2459 = vmatpush2.xpose.msra.mxu0 0.0
    %2460 = vmatprep.subr.mxu0 0.0
    %2461 = vmatpush2.xpose.msra.mxu0 0.0
    %2462 = vmatprep.subr.mxu0 0.0
    %2463 = vmatpush2.xpose.msra.mxu0 0.0
    %2464 = vmatprep.mubr.f32.mxu0 0.0
    %2465 = vmatmul.mubr.f32.gmra.mxu0 %v2395
    %v2466 = vpop.f32.mrf.mxu0
    %v2467 = vadd.f32 0.0, %v2466
    %v2468 = vpop.f32.mrf.mxu0
    %2469 = vdwg.mxu0
    %v2471 = vsel %vm2089, %v676, 0
    %v2474 = vsel %vm2089, %v1308, 0
    %2476 = vmatprep.subr.mxu0 0.0
    %2477 = vmatpush1.xpose.msra.mxu0 0.0
    %2478 = vmatprep.subr.mxu0 0.0
    %2479 = vmatpush1.xpose.msra.mxu0 0.0
    %2480 = vmatprep.subr.mxu0 0.0
    %2481 = vmatpush1.xpose.msra.mxu0 0.0
    %2482 = vmatprep.subr.mxu0 0.0
    %2483 = vmatpush1.xpose.msra.mxu0 0.0
    %2484 = vmatprep.subr.mxu0 0.0
    %2485 = vmatpush1.xpose.msra.mxu0 0.0
    %2486 = vmatprep.subr.mxu0 0.0
    %2487 = vmatpush1.xpose.msra.mxu0 0.0
    %2488 = vmatprep.subr.mxu0 0.0
    %2489 = vmatpush1.xpose.msra.mxu0 0.0
    %2490 = vmatprep.subr.mxu0 0.0
    %2491 = vmatpush1.xpose.msra.mxu0 0.0
    %2492 = vmatprep.subr.mxu0 0.0
    %2493 = vmatpush1.xpose.msra.mxu0 0.0
    %2494 = vmatprep.subr.mxu0 0.0
    %2495 = vmatpush1.xpose.msra.mxu0 0.0
    %2496 = vmatprep.subr.mxu0 0.0
    %2497 = vmatpush1.xpose.msra.mxu0 0.0
    %2498 = vmatprep.subr.mxu0 0.0
    %2499 = vmatpush1.xpose.msra.mxu0 0.0
    %2500 = vmatprep.subr.mxu0 0.0
    %2501 = vmatpush1.xpose.msra.mxu0 0.0
    %2502 = vmatprep.subr.mxu0 0.0
    %2503 = vmatpush1.xpose.msra.mxu0 0.0
    %2504 = vmatprep.subr.mxu0 0.0
    %2505 = vmatpush1.xpose.msra.mxu0 0.0
    %2506 = vmatprep.subr.mxu0 0.0
    %2507 = vmatpush1.xpose.msra.mxu0 %v2474
    %2508 = vmatprep.subr.mxu0 0.0
    %2509 = vmatpush2.xpose.msra.mxu0 0.0
    %2510 = vmatprep.subr.mxu0 0.0
    %2511 = vmatpush2.xpose.msra.mxu0 0.0
    %2512 = vmatprep.subr.mxu0 0.0
    %2513 = vmatpush2.xpose.msra.mxu0 0.0
    %2514 = vmatprep.subr.mxu0 0.0
    %2515 = vmatpush2.xpose.msra.mxu0 0.0
    %2516 = vmatprep.subr.mxu0 0.0
    %2517 = vmatpush2.xpose.msra.mxu0 0.0
    %2518 = vmatprep.subr.mxu0 0.0
    %2519 = vmatpush2.xpose.msra.mxu0 0.0
    %2520 = vmatprep.subr.mxu0 0.0
    %2521 = vmatpush2.xpose.msra.mxu0 0.0
    %2522 = vmatprep.subr.mxu0 0.0
    %2523 = vmatpush2.xpose.msra.mxu0 0.0
    %2524 = vmatprep.subr.mxu0 0.0
    %2525 = vmatpush2.xpose.msra.mxu0 0.0
    %2526 = vmatprep.subr.mxu0 0.0
    %2527 = vmatpush2.xpose.msra.mxu0 0.0
    %2528 = vmatprep.subr.mxu0 0.0
    %2529 = vmatpush2.xpose.msra.mxu0 0.0
    %2530 = vmatprep.subr.mxu0 0.0
    %2531 = vmatpush2.xpose.msra.mxu0 0.0
    %2532 = vmatprep.subr.mxu0 0.0
    %2533 = vmatpush2.xpose.msra.mxu0 0.0
    %2534 = vmatprep.subr.mxu0 0.0
    %2535 = vmatpush2.xpose.msra.mxu0 0.0
    %2536 = vmatprep.subr.mxu0 0.0
    %2537 = vmatpush2.xpose.msra.mxu0 0.0
    %2538 = vmatprep.subr.mxu0 0.0
    %2539 = vmatpush2.xpose.msra.mxu0 0.0
    %2540 = vmatprep.mubr.f32.mxu0 0.0
    %2541 = vmatmul.mubr.f32.gmra.mxu0 %v2471
    %v2542 = vpop.f32.mrf.mxu0
    %v2543 = vadd.f32 0.0, %v2542
    %v2544 = vpop.f32.mrf.mxu0
    %2545 = vdwg.mxu0
    %v2547 = vsel %vm2089, %v749, 0
    %v2550 = vsel %vm2089, %v1381, 0
    %2552 = vmatprep.subr.mxu0 0.0
    %2553 = vmatpush1.xpose.msra.mxu0 0.0
    %2554 = vmatprep.subr.mxu0 0.0
    %2555 = vmatpush1.xpose.msra.mxu0 0.0
    %2556 = vmatprep.subr.mxu0 0.0
    %2557 = vmatpush1.xpose.msra.mxu0 0.0
    %2558 = vmatprep.subr.mxu0 0.0
    %2559 = vmatpush1.xpose.msra.mxu0 0.0
    %2560 = vmatprep.subr.mxu0 0.0
    %2561 = vmatpush1.xpose.msra.mxu0 0.0
    %2562 = vmatprep.subr.mxu0 0.0
    %2563 = vmatpush1.xpose.msra.mxu0 0.0
    %2564 = vmatprep.subr.mxu0 0.0
    %2565 = vmatpush1.xpose.msra.mxu0 0.0
    %2566 = vmatprep.subr.mxu0 0.0
    %2567 = vmatpush1.xpose.msra.mxu0 0.0
    %2568 = vmatprep.subr.mxu0 0.0
    %2569 = vmatpush1.xpose.msra.mxu0 0.0
    %2570 = vmatprep.subr.mxu0 0.0
    %2571 = vmatpush1.xpose.msra.mxu0 0.0
    %2572 = vmatprep.subr.mxu0 0.0
    %2573 = vmatpush1.xpose.msra.mxu0 0.0
    %2574 = vmatprep.subr.mxu0 0.0
    %2575 = vmatpush1.xpose.msra.mxu0 0.0
    %2576 = vmatprep.subr.mxu0 0.0
    %2577 = vmatpush1.xpose.msra.mxu0 0.0
    %2578 = vmatprep.subr.mxu0 0.0
    %2579 = vmatpush1.xpose.msra.mxu0 0.0
    %2580 = vmatprep.subr.mxu0 0.0
    %2581 = vmatpush1.xpose.msra.mxu0 0.0
    %2582 = vmatprep.subr.mxu0 0.0
    %2583 = vmatpush1.xpose.msra.mxu0 %v2550
    %2584 = vmatprep.subr.mxu0 0.0
    %2585 = vmatpush2.xpose.msra.mxu0 0.0
    %2586 = vmatprep.subr.mxu0 0.0
    %2587 = vmatpush2.xpose.msra.mxu0 0.0
    %2588 = vmatprep.subr.mxu0 0.0
    %2589 = vmatpush2.xpose.msra.mxu0 0.0
    %2590 = vmatprep.subr.mxu0 0.0
    %2591 = vmatpush2.xpose.msra.mxu0 0.0
    %2592 = vmatprep.subr.mxu0 0.0
    %2593 = vmatpush2.xpose.msra.mxu0 0.0
    %2594 = vmatprep.subr.mxu0 0.0
    %2595 = vmatpush2.xpose.msra.mxu0 0.0
    %2596 = vmatprep.subr.mxu0 0.0
    %2597 = vmatpush2.xpose.msra.mxu0 0.0
    %2598 = vmatprep.subr.mxu0 0.0
    %2599 = vmatpush2.xpose.msra.mxu0 0.0
    %2600 = vmatprep.subr.mxu0 0.0
    %2601 = vmatpush2.xpose.msra.mxu0 0.0
    %2602 = vmatprep.subr.mxu0 0.0
    %2603 = vmatpush2.xpose.msra.mxu0 0.0
    %2604 = vmatprep.subr.mxu0 0.0
    %2605 = vmatpush2.xpose.msra.mxu0 0.0
    %2606 = vmatprep.subr.mxu0 0.0
    %2607 = vmatpush2.xpose.msra.mxu0 0.0
    %2608 = vmatprep.subr.mxu0 0.0
    %2609 = vmatpush2.xpose.msra.mxu0 0.0
    %2610 = vmatprep.subr.mxu0 0.0
    %2611 = vmatpush2.xpose.msra.mxu0 0.0
    %2612 = vmatprep.subr.mxu0 0.0
    %2613 = vmatpush2.xpose.msra.mxu0 0.0
    %2614 = vmatprep.subr.mxu0 0.0
    %2615 = vmatpush2.xpose.msra.mxu0 0.0
    %2616 = vmatprep.mubr.f32.mxu0 0.0
    %2617 = vmatmul.mubr.f32.gmra.mxu0 %v2547
    %v2618 = vpop.f32.mrf.mxu0
    %v2619 = vadd.f32 0.0, %v2618
    %v2620 = vpop.f32.mrf.mxu0
    %2621 = vdwg.mxu0
    %v2623 = vsel %vm2089, %v822, 0
    %v2626 = vsel %vm2089, %v1454, 0
    %2628 = vmatprep.subr.mxu0 0.0
    %2629 = vmatpush1.xpose.msra.mxu0 0.0
    %2630 = vmatprep.subr.mxu0 0.0
    %2631 = vmatpush1.xpose.msra.mxu0 0.0
    %2632 = vmatprep.subr.mxu0 0.0
    %2633 = vmatpush1.xpose.msra.mxu0 0.0
    %2634 = vmatprep.subr.mxu0 0.0
    %2635 = vmatpush1.xpose.msra.mxu0 0.0
    %2636 = vmatprep.subr.mxu0 0.0
    %2637 = vmatpush1.xpose.msra.mxu0 0.0
    %2638 = vmatprep.subr.mxu0 0.0
    %2639 = vmatpush1.xpose.msra.mxu0 0.0
    %2640 = vmatprep.subr.mxu0 0.0
    %2641 = vmatpush1.xpose.msra.mxu0 0.0
    %2642 = vmatprep.subr.mxu0 0.0
    %2643 = vmatpush1.xpose.msra.mxu0 0.0
    %2644 = vmatprep.subr.mxu0 0.0
    %2645 = vmatpush1.xpose.msra.mxu0 0.0
    %2646 = vmatprep.subr.mxu0 0.0
    %2647 = vmatpush1.xpose.msra.mxu0 0.0
    %2648 = vmatprep.subr.mxu0 0.0
    %2649 = vmatpush1.xpose.msra.mxu0 0.0
    %2650 = vmatprep.subr.mxu0 0.0
    %2651 = vmatpush1.xpose.msra.mxu0 0.0
    %2652 = vmatprep.subr.mxu0 0.0
    %2653 = vmatpush1.xpose.msra.mxu0 0.0
    %2654 = vmatprep.subr.mxu0 0.0
    %2655 = vmatpush1.xpose.msra.mxu0 0.0
    %2656 = vmatprep.subr.mxu0 0.0
    %2657 = vmatpush1.xpose.msra.mxu0 0.0
    %2658 = vmatprep.subr.mxu0 0.0
    %2659 = vmatpush1.xpose.msra.mxu0 %v2626
    %2660 = vmatprep.subr.mxu0 0.0
    %2661 = vmatpush2.xpose.msra.mxu0 0.0
    %2662 = vmatprep.subr.mxu0 0.0
    %2663 = vmatpush2.xpose.msra.mxu0 0.0
    %2664 = vmatprep.subr.mxu0 0.0
    %2665 = vmatpush2.xpose.msra.mxu0 0.0
    %2666 = vmatprep.subr.mxu0 0.0
    %2667 = vmatpush2.xpose.msra.mxu0 0.0
    %2668 = vmatprep.subr.mxu0 0.0
    %2669 = vmatpush2.xpose.msra.mxu0 0.0
    %2670 = vmatprep.subr.mxu0 0.0
    %2671 = vmatpush2.xpose.msra.mxu0 0.0
    %2672 = vmatprep.subr.mxu0 0.0
    %2673 = vmatpush2.xpose.msra.mxu0 0.0
    %2674 = vmatprep.subr.mxu0 0.0
    %2675 = vmatpush2.xpose.msra.mxu0 0.0
    %2676 = vmatprep.subr.mxu0 0.0
    %2677 = vmatpush2.xpose.msra.mxu0 0.0
    %2678 = vmatprep.subr.mxu0 0.0
    %2679 = vmatpush2.xpose.msra.mxu0 0.0
    %2680 = vmatprep.subr.mxu0 0.0
    %2681 = vmatpush2.xpose.msra.mxu0 0.0
    %2682 = vmatprep.subr.mxu0 0.0
    %2683 = vmatpush2.xpose.msra.mxu0 0.0
    %2684 = vmatprep.subr.mxu0 0.0
    %2685 = vmatpush2.xpose.msra.mxu0 0.0
    %2686 = vmatprep.subr.mxu0 0.0
    %2687 = vmatpush2.xpose.msra.mxu0 0.0
    %2688 = vmatprep.subr.mxu0 0.0
    %2689 = vmatpush2.xpose.msra.mxu0 0.0
    %2690 = vmatprep.subr.mxu0 0.0
    %2691 = vmatpush2.xpose.msra.mxu0 0.0
    %2692 = vmatprep.mubr.f32.mxu0 0.0
    %2693 = vmatmul.mubr.f32.gmra.mxu0 %v2623
    %v2694 = vpop.f32.mrf.mxu0
    %v2695 = vadd.f32 0.0, %v2694
    %v2696 = vpop.f32.mrf.mxu0
    %2697 = vdwg.mxu0
    %v2698 = vmul.f32 %v2163, 0.35355338
    %v2699 = vmul.f32 %v2239, 0.35355338
    %v2700 = vmul.f32 %v2315, 0.35355338
    %v2701 = vmul.f32 %v2391, 0.35355338
    %v2702 = vmul.f32 %v2467, 0.35355338
    %v2703 = vmul.f32 %v2543, 0.35355338
    %v2704 = vmul.f32 %v2619, 0.35355338
    %v2705 = vmul.f32 %v2695, 0.35355338
    %v2706 = vsel %vm2089, %v2698, -inf
    %2707 = vmax.xlane.f32.xlu0 %v2706
    %v2708 = vpop.xlane.xlu0 %2707
    %v2709 = vsel %vm2089, %v2699, -inf
    %2710 = vmax.xlane.f32.xlu0 %v2709
    %v2711 = vpop.xlane.xlu0 %2710
    %v2712 = vsel %vm2089, %v2700, -inf
    %2713 = vmax.xlane.f32.xlu0 %v2712
    %v2714 = vpop.xlane.xlu0 %2713
    %v2715 = vsel %vm2089, %v2701, -inf
    %2716 = vmax.xlane.f32.xlu0 %v2715
    %v2717 = vpop.xlane.xlu0 %2716
    %v2718 = vsel %vm2089, %v2702, -inf
    %2719 = vmax.xlane.f32.xlu0 %v2718
    %v2720 = vpop.xlane.xlu0 %2719
    %v2721 = vsel %vm2089, %v2703, -inf
    %2722 = vmax.xlane.f32.xlu0 %v2721
    %v2723 = vpop.xlane.xlu0 %2722
    %v2724 = vsel %vm2089, %v2704, -inf
    %2725 = vmax.xlane.f32.xlu0 %v2724
    %v2726 = vpop.xlane.xlu0 %2725
    %v2727 = vsel %vm2089, %v2705, -inf
    %2728 = vmax.xlane.f32.xlu0 %v2727
    %v2729 = vpop.xlane.xlu0 %2728
    %v2730 = vsub.f32 %v2698, %v2708
    %v2731 = vsub.f32 %v2699, %v2711
    %v2732 = vsub.f32 %v2700, %v2714
    %v2733 = vsub.f32 %v2701, %v2717
    %v2734 = vsub.f32 %v2702, %v2720
    %v2735 = vsub.f32 %v2703, %v2723
    %v2736 = vsub.f32 %v2704, %v2726
    %v2737 = vsub.f32 %v2705, %v2729
    %v2738 = vmul.f32 %v2730, 1.442695
    %v2739 = vpow.pop %v2738
    %v2740 = vmul.f32 %v2731, 1.442695
    %v2741 = vpow.pop %v2740
    %v2742 = vmul.f32 %v2732, 1.442695
    %v2743 = vpow.pop %v2742
    %v2744 = vmul.f32 %v2733, 1.442695
    %v2745 = vpow.pop %v2744
    %v2746 = vmul.f32 %v2734, 1.442695
    %v2747 = vpow.pop %v2746
    %v2748 = vmul.f32 %v2735, 1.442695
    %v2749 = vpow.pop %v2748
    %v2750 = vmul.f32 %v2736, 1.442695
    %v2751 = vpow.pop %v2750
    %v2752 = vmul.f32 %v2737, 1.442695
    %v2753 = vpow.pop %v2752
    %v2754 = vsel %vm2089, %v2739, 0.0
    %2755 = vadd.xlane.f32.xlu0 %v2754
    %v2756 = vpop.xlane.xlu0 %2755
    %v2757 = vsel %vm2089, %v2741, 0.0
    %2758 = vadd.xlane.f32.xlu0 %v2757
    %v2759 = vpop.xlane.xlu0 %2758
    %v2760 = vsel %vm2089, %v2743, 0.0
    %2761 = vadd.xlane.f32.xlu0 %v2760
    %v2762 = vpop.xlane.xlu0 %2761
    %v2763 = vsel %vm2089, %v2745, 0.0
    %2764 = vadd.xlane.f32.xlu0 %v2763
    %v2765 = vpop.xlane.xlu0 %2764
    %v2766 = vsel %vm2089, %v2747, 0.0
    %2767 = vadd.xlane.f32.xlu0 %v2766
    %v2768 = vpop.xlane.xlu0 %2767
    %v2769 = vsel %vm2089, %v2749, 0.0
    %2770 = vadd.xlane.f32.xlu0 %v2769
    %v2771 = vpop.xlane.xlu0 %2770
    %v2772 = vsel %vm2089, %v2751, 0.0
    %2773 = vadd.xlane.f32.xlu0 %v2772
    %v2774 = vpop.xlane.xlu0 %2773
    %v2775 = vsel %vm2089, %v2753, 0.0
    %2776 = vadd.xlane.f32.xlu0 %v2775
    %v2777 = vpop.xlane.xlu0 %2776
    %v2778 = vrcp.pop %v2756
    %v2779 = vrcp.pop %v2759
    %v2780 = vrcp.pop %v2762
    %v2781 = vrcp.pop %v2765
    %v2782 = vrcp.pop %v2768
    %v2783 = vrcp.pop %v2771
    %v2784 = vrcp.pop %v2774
    %v2785 = vrcp.pop %v2777
    %v2786 = vmul.f32 %v2739, %v2778
    %v2787 = vmul.f32 %v2741, %v2779
    %v2788 = vmul.f32 %v2743, %v2780
    %v2789 = vmul.f32 %v2745, %v2781
    %v2790 = vmul.f32 %v2747, %v2782
    %v2791 = vmul.f32 %v2749, %v2783
    %v2792 = vmul.f32 %v2751, %v2784
    %v2793 = vmul.f32 %v2753, %v2785
    %v2795 = vsel %vm2089, %v2786, 0
    %2797 = vmatprep.subr.mxu0 0.0
    %2798 = vmatpush1.msra.mxu0 0.0
    %2799 = vmatprep.subr.mxu0 0.0
    %2800 = vmatpush1.msra.mxu0 0.0
    %2801 = vmatprep.subr.mxu0 0.0
    %2802 = vmatpush1.msra.mxu0 0.0
    %2803 = vmatprep.subr.mxu0 0.0
    %2804 = vmatpush1.msra.mxu0 0.0
    %2805 = vmatprep.subr.mxu0 0.0
    %2806 = vmatpush1.msra.mxu0 0.0
    %2807 = vmatprep.subr.mxu0 0.0
    %2808 = vmatpush1.msra.mxu0 0.0
    %2809 = vmatprep.subr.mxu0 0.0
    %2810 = vmatpush1.msra.mxu0 0.0
    %2811 = vmatprep.subr.mxu0 0.0
    %2812 = vmatpush1.msra.mxu0 0.0
    %2813 = vmatprep.subr.mxu0 0.0
    %2814 = vmatpush1.msra.mxu0 0.0
    %2815 = vmatprep.subr.mxu0 0.0
    %2816 = vmatpush1.msra.mxu0 0.0
    %2817 = vmatprep.subr.mxu0 0.0
    %2818 = vmatpush1.msra.mxu0 0.0
    %2819 = vmatprep.subr.mxu0 0.0
    %2820 = vmatpush1.msra.mxu0 0.0
    %2821 = vmatprep.subr.mxu0 0.0
    %2822 = vmatpush1.msra.mxu0 0.0
    %2823 = vmatprep.subr.mxu0 0.0
    %2824 = vmatpush1.msra.mxu0 0.0
    %2825 = vmatprep.subr.mxu0 0.0
    %2826 = vmatpush1.msra.mxu0 0.0
    %2827 = vmatprep.subr.mxu0 0.0
    %2828 = vmatpush1.msra.mxu0 %v1575
    %2829 = vmatprep.subr.mxu0 0.0
    %2830 = vmatpush2.msra.mxu0 0.0
    %2831 = vmatprep.subr.mxu0 0.0
    %2832 = vmatpush2.msra.mxu0 0.0
    %2833 = vmatprep.subr.mxu0 0.0
    %2834 = vmatpush2.msra.mxu0 0.0
    %2835 = vmatprep.subr.mxu0 0.0
    %2836 = vmatpush2.msra.mxu0 0.0
    %2837 = vmatprep.subr.mxu0 0.0
    %2838 = vmatpush2.msra.mxu0 0.0
    %2839 = vmatprep.subr.mxu0 0.0
    %2840 = vmatpush2.msra.mxu0 0.0
    %2841 = vmatprep.subr.mxu0 0.0
    %2842 = vmatpush2.msra.mxu0 0.0
    %2843 = vmatprep.subr.mxu0 0.0
    %2844 = vmatpush2.msra.mxu0 0.0
    %2845 = vmatprep.subr.mxu0 0.0
    %2846 = vmatpush2.msra.mxu0 0.0
    %2847 = vmatprep.subr.mxu0 0.0
    %2848 = vmatpush2.msra.mxu0 0.0
    %2849 = vmatprep.subr.mxu0 0.0
    %2850 = vmatpush2.msra.mxu0 0.0
    %2851 = vmatprep.subr.mxu0 0.0
    %2852 = vmatpush2.msra.mxu0 0.0
    %2853 = vmatprep.subr.mxu0 0.0
    %2854 = vmatpush2.msra.mxu0 0.0
    %2855 = vmatprep.subr.mxu0 0.0
    %2856 = vmatpush2.msra.mxu0 0.0
    %2857 = vmatprep.subr.mxu0 0.0
    %2858 = vmatpush2.msra.mxu0 0.0
    %2859 = vmatprep.subr.mxu0 0.0
    %2860 = vmatpush2.msra.mxu0 0.0
    %2861 = vmatprep.mubr.f32.mxu0 0.0
    %2862 = vmatmul.mubr.f32.gmra.mxu0 %v2795
    %v2863 = vpop.f32.mrf.mxu0
    %v2864 = vadd.f32 0.0, %v2863
    %v2865 = vpop.f32.mrf.mxu0
    %2866 = vdwg.mxu0
    %v2868 = vsel %vm2089, %v2787, 0
    %2870 = vmatprep.subr.mxu0 0.0
    %2871 = vmatpush1.msra.mxu0 0.0
    %2872 = vmatprep.subr.mxu0 0.0
    %2873 = vmatpush1.msra.mxu0 0.0
    %2874 = vmatprep.subr.mxu0 0.0
    %2875 = vmatpush1.msra.mxu0 0.0
    %2876 = vmatprep.subr.mxu0 0.0
    %2877 = vmatpush1.msra.mxu0 0.0
    %2878 = vmatprep.subr.mxu0 0.0
    %2879 = vmatpush1.msra.mxu0 0.0
    %2880 = vmatprep.subr.mxu0 0.0
    %2881 = vmatpush1.msra.mxu0 0.0
    %2882 = vmatprep.subr.mxu0 0.0
    %2883 = vmatpush1.msra.mxu0 0.0
    %2884 = vmatprep.subr.mxu0 0.0
    %2885 = vmatpush1.msra.mxu0 0.0
    %2886 = vmatprep.subr.mxu0 0.0
    %2887 = vmatpush1.msra.mxu0 0.0
    %2888 = vmatprep.subr.mxu0 0.0
    %2889 = vmatpush1.msra.mxu0 0.0
    %2890 = vmatprep.subr.mxu0 0.0
    %2891 = vmatpush1.msra.mxu0 0.0
    %2892 = vmatprep.subr.mxu0 0.0
    %2893 = vmatpush1.msra.mxu0 0.0
    %2894 = vmatprep.subr.mxu0 0.0
    %2895 = vmatpush1.msra.mxu0 0.0
    %2896 = vmatprep.subr.mxu0 0.0
    %2897 = vmatpush1.msra.mxu0 0.0
    %2898 = vmatprep.subr.mxu0 0.0
    %2899 = vmatpush1.msra.mxu0 0.0
    %2900 = vmatprep.subr.mxu0 0.0
    %2901 = vmatpush1.msra.mxu0 %v1648
    %2902 = vmatprep.subr.mxu0 0.0
    %2903 = vmatpush2.msra.mxu0 0.0
    %2904 = vmatprep.subr.mxu0 0.0
    %2905 = vmatpush2.msra.mxu0 0.0
    %2906 = vmatprep.subr.mxu0 0.0
    %2907 = vmatpush2.msra.mxu0 0.0
    %2908 = vmatprep.subr.mxu0 0.0
    %2909 = vmatpush2.msra.mxu0 0.0
    %2910 = vmatprep.subr.mxu0 0.0
    %2911 = vmatpush2.msra.mxu0 0.0
    %2912 = vmatprep.subr.mxu0 0.0
    %2913 = vmatpush2.msra.mxu0 0.0
    %2914 = vmatprep.subr.mxu0 0.0
    %2915 = vmatpush2.msra.mxu0 0.0
    %2916 = vmatprep.subr.mxu0 0.0
    %2917 = vmatpush2.msra.mxu0 0.0
    %2918 = vmatprep.subr.mxu0 0.0
    %2919 = vmatpush2.msra.mxu0 0.0
    %2920 = vmatprep.subr.mxu0 0.0
    %2921 = vmatpush2.msra.mxu0 0.0
    %2922 = vmatprep.subr.mxu0 0.0
    %2923 = vmatpush2.msra.mxu0 0.0
    %2924 = vmatprep.subr.mxu0 0.0
    %2925 = vmatpush2.msra.mxu0 0.0
    %2926 = vmatprep.subr.mxu0 0.0
    %2927 = vmatpush2.msra.mxu0 0.0
    %2928 = vmatprep.subr.mxu0 0.0
    %2929 = vmatpush2.msra.mxu0 0.0
    %2930 = vmatprep.subr.mxu0 0.0
    %2931 = vmatpush2.msra.mxu0 0.0
    %2932 = vmatprep.subr.mxu0 0.0
    %2933 = vmatpush2.msra.mxu0 0.0
    %2934 = vmatprep.mubr.f32.mxu0 0.0
    %2935 = vmatmul.mubr.f32.gmra.mxu0 %v2868
    %v2936 = vpop.f32.mrf.mxu0
    %v2937 = vadd.f32 0.0, %v2936
    %v2938 = vpop.f32.mrf.mxu0
    %2939 = vdwg.mxu0
    %v2941 = vsel %vm2089, %v2788, 0
    %2943 = vmatprep.subr.mxu0 0.0
    %2944 = vmatpush1.msra.mxu0 0.0
    %2945 = vmatprep.subr.mxu0 0.0
    %2946 = vmatpush1.msra.mxu0 0.0
    %2947 = vmatprep.subr.mxu0 0.0
    %2948 = vmatpush1.msra.mxu0 0.0
    %2949 = vmatprep.subr.mxu0 0.0
    %2950 = vmatpush1.msra.mxu0 0.0
    %2951 = vmatprep.subr.mxu0 0.0
    %2952 = vmatpush1.msra.mxu0 0.0
    %2953 = vmatprep.subr.mxu0 0.0
    %2954 = vmatpush1.msra.mxu0 0.0
    %2955 = vmatprep.subr.mxu0 0.0
    %2956 = vmatpush1.msra.mxu0 0.0
    %2957 = vmatprep.subr.mxu0 0.0
    %2958 = vmatpush1.msra.mxu0 0.0
    %2959 = vmatprep.subr.mxu0 0.0
    %2960 = vmatpush1.msra.mxu0 0.0
    %2961 = vmatprep.subr.mxu0 0.0
    %2962 = vmatpush1.msra.mxu0 0.0
    %2963 = vmatprep.subr.mxu0 0.0
    %2964 = vmatpush1.msra.mxu0 0.0
    %2965 = vmatprep.subr.mxu0 0.0
    %2966 = vmatpush1.msra.mxu0 0.0
    %2967 = vmatprep.subr.mxu0 0.0
    %2968 = vmatpush1.msra.mxu0 0.0
    %2969 = vmatprep.subr.mxu0 0.0
    %2970 = vmatpush1.msra.mxu0 0.0
    %2971 = vmatprep.subr.mxu0 0.0
    %2972 = vmatpush1.msra.mxu0 0.0
    %2973 = vmatprep.subr.mxu0 0.0
    %2974 = vmatpush1.msra.mxu0 %v1721
    %2975 = vmatprep.subr.mxu0 0.0
    %2976 = vmatpush2.msra.mxu0 0.0
    %2977 = vmatprep.subr.mxu0 0.0
    %2978 = vmatpush2.msra.mxu0 0.0
    %2979 = vmatprep.subr.mxu0 0.0
    %2980 = vmatpush2.msra.mxu0 0.0
    %2981 = vmatprep.subr.mxu0 0.0
    %2982 = vmatpush2.msra.mxu0 0.0
    %2983 = vmatprep.subr.mxu0 0.0
    %2984 = vmatpush2.msra.mxu0 0.0
    %2985 = vmatprep.subr.mxu0 0.0
    %2986 = vmatpush2.msra.mxu0 0.0
    %2987 = vmatprep.subr.mxu0 0.0
    %2988 = vmatpush2.msra.mxu0 0.0
    %2989 = vmatprep.subr.mxu0 0.0
    %2990 = vmatpush2.msra.mxu0 0.0
    %2991 = vmatprep.subr.mxu0 0.0
    %2992 = vmatpush2.msra.mxu0 0.0
    %2993 = vmatprep.subr.mxu0 0.0
    %2994 = vmatpush2.msra.mxu0 0.0
    %2995 = vmatprep.subr.mxu0 0.0
    %2996 = vmatpush2.msra.mxu0 0.0
    %2997 = vmatprep.subr.mxu0 0.0
    %2998 = vmatpush2.msra.mxu0 0.0
    %2999 = vmatprep.subr.mxu0 0.0
    %3000 = vmatpush2.msra.mxu0 0.0
    %3001 = vmatprep.subr.mxu0 0.0
    %3002 = vmatpush2.msra.mxu0 0.0
    %3003 = vmatprep.subr.mxu0 0.0
    %3004 = vmatpush2.msra.mxu0 0.0
    %3005 = vmatprep.subr.mxu0 0.0
    %3006 = vmatpush2.msra.mxu0 0.0
    %3007 = vmatprep.mubr.f32.mxu0 0.0
    %3008 = vmatmul.mubr.f32.gmra.mxu0 %v2941
    %v3009 = vpop.f32.mrf.mxu0
    %v3010 = vadd.f32 0.0, %v3009
    %v3011 = vpop.f32.mrf.mxu0
    %3012 = vdwg.mxu0
    %v3014 = vsel %vm2089, %v2789, 0
    %3016 = vmatprep.subr.mxu0 0.0
    %3017 = vmatpush1.msra.mxu0 0.0
    %3018 = vmatprep.subr.mxu0 0.0
    %3019 = vmatpush1.msra.mxu0 0.0
    %3020 = vmatprep.subr.mxu0 0.0
    %3021 = vmatpush1.msra.mxu0 0.0
    %3022 = vmatprep.subr.mxu0 0.0
    %3023 = vmatpush1.msra.mxu0 0.0
    %3024 = vmatprep.subr.mxu0 0.0
    %3025 = vmatpush1.msra.mxu0 0.0
    %3026 = vmatprep.subr.mxu0 0.0
    %3027 = vmatpush1.msra.mxu0 0.0
    %3028 = vmatprep.subr.mxu0 0.0
    %3029 = vmatpush1.msra.mxu0 0.0
    %3030 = vmatprep.subr.mxu0 0.0
    %3031 = vmatpush1.msra.mxu0 0.0
    %3032 = vmatprep.subr.mxu0 0.0
    %3033 = vmatpush1.msra.mxu0 0.0
    %3034 = vmatprep.subr.mxu0 0.0
    %3035 = vmatpush1.msra.mxu0 0.0
    %3036 = vmatprep.subr.mxu0 0.0
    %3037 = vmatpush1.msra.mxu0 0.0
    %3038 = vmatprep.subr.mxu0 0.0
    %3039 = vmatpush1.msra.mxu0 0.0
    %3040 = vmatprep.subr.mxu0 0.0
    %3041 = vmatpush1.msra.mxu0 0.0
    %3042 = vmatprep.subr.mxu0 0.0
    %3043 = vmatpush1.msra.mxu0 0.0
    %3044 = vmatprep.subr.mxu0 0.0
    %3045 = vmatpush1.msra.mxu0 0.0
    %3046 = vmatprep.subr.mxu0 0.0
    %3047 = vmatpush1.msra.mxu0 %v1794
    %3048 = vmatprep.subr.mxu0 0.0
    %3049 = vmatpush2.msra.mxu0 0.0
    %3050 = vmatprep.subr.mxu0 0.0
    %3051 = vmatpush2.msra.mxu0 0.0
    %3052 = vmatprep.subr.mxu0 0.0
    %3053 = vmatpush2.msra.mxu0 0.0
    %3054 = vmatprep.subr.mxu0 0.0
    %3055 = vmatpush2.msra.mxu0 0.0
    %3056 = vmatprep.subr.mxu0 0.0
    %3057 = vmatpush2.msra.mxu0 0.0
    %3058 = vmatprep.subr.mxu0 0.0
    %3059 = vmatpush2.msra.mxu0 0.0
    %3060 = vmatprep.subr.mxu0 0.0
    %3061 = vmatpush2.msra.mxu0 0.0
    %3062 = vmatprep.subr.mxu0 0.0
    %3063 = vmatpush2.msra.mxu0 0.0
    %3064 = vmatprep.subr.mxu0 0.0
    %3065 = vmatpush2.msra.mxu0 0.0
    %3066 = vmatprep.subr.mxu0 0.0
    %3067 = vmatpush2.msra.mxu0 0.0
    %3068 = vmatprep.subr.mxu0 0.0
    %3069 = vmatpush2.msra.mxu0 0.0
    %3070 = vmatprep.subr.mxu0 0.0
    %3071 = vmatpush2.msra.mxu0 0.0
    %3072 = vmatprep.subr.mxu0 0.0
    %3073 = vmatpush2.msra.mxu0 0.0
    %3074 = vmatprep.subr.mxu0 0.0
    %3075 = vmatpush2.msra.mxu0 0.0
    %3076 = vmatprep.subr.mxu0 0.0
    %3077 = vmatpush2.msra.mxu0 0.0
    %3078 = vmatprep.subr.mxu0 0.0
    %3079 = vmatpush2.msra.mxu0 0.0
    %3080 = vmatprep.mubr.f32.mxu0 0.0
    %3081 = vmatmul.mubr.f32.gmra.mxu0 %v3014
    %v3082 = vpop.f32.mrf.mxu0
    %v3083 = vadd.f32 0.0, %v3082
    %v3084 = vpop.f32.mrf.mxu0
    %3085 = vdwg.mxu0
    %v3087 = vsel %vm2089, %v2790, 0
    %3089 = vmatprep.subr.mxu0 0.0
    %3090 = vmatpush1.msra.mxu0 0.0
    %3091 = vmatprep.subr.mxu0 0.0
    %3092 = vmatpush1.msra.mxu0 0.0
    %3093 = vmatprep.subr.mxu0 0.0
    %3094 = vmatpush1.msra.mxu0 0.0
    %3095 = vmatprep.subr.mxu0 0.0
    %3096 = vmatpush1.msra.mxu0 0.0
    %3097 = vmatprep.subr.mxu0 0.0
    %3098 = vmatpush1.msra.mxu0 0.0
    %3099 = vmatprep.subr.mxu0 0.0
    %3100 = vmatpush1.msra.mxu0 0.0
    %3101 = vmatprep.subr.mxu0 0.0
    %3102 = vmatpush1.msra.mxu0 0.0
    %3103 = vmatprep.subr.mxu0 0.0
    %3104 = vmatpush1.msra.mxu0 0.0
    %3105 = vmatprep.subr.mxu0 0.0
    %3106 = vmatpush1.msra.mxu0 0.0
    %3107 = vmatprep.subr.mxu0 0.0
    %3108 = vmatpush1.msra.mxu0 0.0
    %3109 = vmatprep.subr.mxu0 0.0
    %3110 = vmatpush1.msra.mxu0 0.0
    %3111 = vmatprep.subr.mxu0 0.0
    %3112 = vmatpush1.msra.mxu0 0.0
    %3113 = vmatprep.subr.mxu0 0.0
    %3114 = vmatpush1.msra.mxu0 0.0
    %3115 = vmatprep.subr.mxu0 0.0
    %3116 = vmatpush1.msra.mxu0 0.0
    %3117 = vmatprep.subr.mxu0 0.0
    %3118 = vmatpush1.msra.mxu0 0.0
    %3119 = vmatprep.subr.mxu0 0.0
    %3120 = vmatpush1.msra.mxu0 %v1867
    %3121 = vmatprep.subr.mxu0 0.0
    %3122 = vmatpush2.msra.mxu0 0.0
    %3123 = vmatprep.subr.mxu0 0.0
    %3124 = vmatpush2.msra.mxu0 0.0
    %3125 = vmatprep.subr.mxu0 0.0
    %3126 = vmatpush2.msra.mxu0 0.0
    %3127 = vmatprep.subr.mxu0 0.0
    %3128 = vmatpush2.msra.mxu0 0.0
    %3129 = vmatprep.subr.mxu0 0.0
    %3130 = vmatpush2.msra.mxu0 0.0
    %3131 = vmatprep.subr.mxu0 0.0
    %3132 = vmatpush2.msra.mxu0 0.0
    %3133 = vmatprep.subr.mxu0 0.0
    %3134 = vmatpush2.msra.mxu0 0.0
    %3135 = vmatprep.subr.mxu0 0.0
    %3136 = vmatpush2.msra.mxu0 0.0
    %3137 = vmatprep.subr.mxu0 0.0
    %3138 = vmatpush2.msra.mxu0 0.0
    %3139 = vmatprep.subr.mxu0 0.0
    %3140 = vmatpush2.msra.mxu0 0.0
    %3141 = vmatprep.subr.mxu0 0.0
    %3142 = vmatpush2.msra.mxu0 0.0
    %3143 = vmatprep.subr.mxu0 0.0
    %3144 = vmatpush2.msra.mxu0 0.0
    %3145 = vmatprep.subr.mxu0 0.0
    %3146 = vmatpush2.msra.mxu0 0.0
    %3147 = vmatprep.subr.mxu0 0.0
    %3148 = vmatpush2.msra.mxu0 0.0
    %3149 = vmatprep.subr.mxu0 0.0
    %3150 = vmatpush2.msra.mxu0 0.0
    %3151 = vmatprep.subr.mxu0 0.0
    %3152 = vmatpush2.msra.mxu0 0.0
    %3153 = vmatprep.mubr.f32.mxu0 0.0
    %3154 = vmatmul.mubr.f32.gmra.mxu0 %v3087
    %v3155 = vpop.f32.mrf.mxu0
    %v3156 = vadd.f32 0.0, %v3155
    %v3157 = vpop.f32.mrf.mxu0
    %3158 = vdwg.mxu0
    %v3160 = vsel %vm2089, %v2791, 0
    %3162 = vmatprep.subr.mxu0 0.0
    %3163 = vmatpush1.msra.mxu0 0.0
    %3164 = vmatprep.subr.mxu0 0.0
    %3165 = vmatpush1.msra.mxu0 0.0
    %3166 = vmatprep.subr.mxu0 0.0
    %3167 = vmatpush1.msra.mxu0 0.0
    %3168 = vmatprep.subr.mxu0 0.0
    %3169 = vmatpush1.msra.mxu0 0.0
    %3170 = vmatprep.subr.mxu0 0.0
    %3171 = vmatpush1.msra.mxu0 0.0
    %3172 = vmatprep.subr.mxu0 0.0
    %3173 = vmatpush1.msra.mxu0 0.0
    %3174 = vmatprep.subr.mxu0 0.0
    %3175 = vmatpush1.msra.mxu0 0.0
    %3176 = vmatprep.subr.mxu0 0.0
    %3177 = vmatpush1.msra.mxu0 0.0
    %3178 = vmatprep.subr.mxu0 0.0
    %3179 = vmatpush1.msra.mxu0 0.0
    %3180 = vmatprep.subr.mxu0 0.0
    %3181 = vmatpush1.msra.mxu0 0.0
    %3182 = vmatprep.subr.mxu0 0.0
    %3183 = vmatpush1.msra.mxu0 0.0
    %3184 = vmatprep.subr.mxu0 0.0
    %3185 = vmatpush1.msra.mxu0 0.0
    %3186 = vmatprep.subr.mxu0 0.0
    %3187 = vmatpush1.msra.mxu0 0.0
    %3188 = vmatprep.subr.mxu0 0.0
    %3189 = vmatpush1.msra.mxu0 0.0
    %3190 = vmatprep.subr.mxu0 0.0
    %3191 = vmatpush1.msra.mxu0 0.0
    %3192 = vmatprep.subr.mxu0 0.0
    %3193 = vmatpush1.msra.mxu0 %v1940
    %3194 = vmatprep.subr.mxu0 0.0
    %3195 = vmatpush2.msra.mxu0 0.0
    %3196 = vmatprep.subr.mxu0 0.0
    %3197 = vmatpush2.msra.mxu0 0.0
    %3198 = vmatprep.subr.mxu0 0.0
    %3199 = vmatpush2.msra.mxu0 0.0
    %3200 = vmatprep.subr.mxu0 0.0
    %3201 = vmatpush2.msra.mxu0 0.0
    %3202 = vmatprep.subr.mxu0 0.0
    %3203 = vmatpush2.msra.mxu0 0.0
    %3204 = vmatprep.subr.mxu0 0.0
    %3205 = vmatpush2.msra.mxu0 0.0
    %3206 = vmatprep.subr.mxu0 0.0
    %3207 = vmatpush2.msra.mxu0 0.0
    %3208 = vmatprep.subr.mxu0 0.0
    %3209 = vmatpush2.msra.mxu0 0.0
    %3210 = vmatprep.subr.mxu0 0.0
    %3211 = vmatpush2.msra.mxu0 0.0
    %3212 = vmatprep.subr.mxu0 0.0
    %3213 = vmatpush2.msra.mxu0 0.0
    %3214 = vmatprep.subr.mxu0 0.0
    %3215 = vmatpush2.msra.mxu0 0.0
    %3216 = vmatprep.subr.mxu0 0.0
    %3217 = vmatpush2.msra.mxu0 0.0
    %3218 = vmatprep.subr.mxu0 0.0
    %3219 = vmatpush2.msra.mxu0 0.0
    %3220 = vmatprep.subr.mxu0 0.0
    %3221 = vmatpush2.msra.mxu0 0.0
    %3222 = vmatprep.subr.mxu0 0.0
    %3223 = vmatpush2.msra.mxu0 0.0
    %3224 = vmatprep.subr.mxu0 0.0
    %3225 = vmatpush2.msra.mxu0 0.0
    %3226 = vmatprep.mubr.f32.mxu0 0.0
    %3227 = vmatmul.mubr.f32.gmra.mxu0 %v3160
    %v3228 = vpop.f32.mrf.mxu0
    %v3229 = vadd.f32 0.0, %v3228
    %v3230 = vpop.f32.mrf.mxu0
    %3231 = vdwg.mxu0
    %v3233 = vsel %vm2089, %v2792, 0
    %3235 = vmatprep.subr.mxu0 0.0
    %3236 = vmatpush1.msra.mxu0 0.0
    %3237 = vmatprep.subr.mxu0 0.0
    %3238 = vmatpush1.msra.mxu0 0.0
    %3239 = vmatprep.subr.mxu0 0.0
    %3240 = vmatpush1.msra.mxu0 0.0
    %3241 = vmatprep.subr.mxu0 0.0
    %3242 = vmatpush1.msra.mxu0 0.0
    %3243 = vmatprep.subr.mxu0 0.0
    %3244 = vmatpush1.msra.mxu0 0.0
    %3245 = vmatprep.subr.mxu0 0.0
    %3246 = vmatpush1.msra.mxu0 0.0
    %3247 = vmatprep.subr.mxu0 0.0
    %3248 = vmatpush1.msra.mxu0 0.0
    %3249 = vmatprep.subr.mxu0 0.0
    %3250 = vmatpush1.msra.mxu0 0.0
    %3251 = vmatprep.subr.mxu0 0.0
    %3252 = vmatpush1.msra.mxu0 0.0
    %3253 = vmatprep.subr.mxu0 0.0
    %3254 = vmatpush1.msra.mxu0 0.0
    %3255 = vmatprep.subr.mxu0 0.0
    %3256 = vmatpush1.msra.mxu0 0.0
    %3257 = vmatprep.subr.mxu0 0.0
    %3258 = vmatpush1.msra.mxu0 0.0
    %3259 = vmatprep.subr.mxu0 0.0
    %3260 = vmatpush1.msra.mxu0 0.0
    %3261 = vmatprep.subr.mxu0 0.0
    %3262 = vmatpush1.msra.mxu0 0.0
    %3263 = vmatprep.subr.mxu0 0.0
    %3264 = vmatpush1.msra.mxu0 0.0
    %3265 = vmatprep.subr.mxu0 0.0
    %3266 = vmatpush1.msra.mxu0 %v2013
    %3267 = vmatprep.subr.mxu0 0.0
    %3268 = vmatpush2.msra.mxu0 0.0
    %3269 = vmatprep.subr.mxu0 0.0
    %3270 = vmatpush2.msra.mxu0 0.0
    %3271 = vmatprep.subr.mxu0 0.0
    %3272 = vmatpush2.msra.mxu0 0.0
    %3273 = vmatprep.subr.mxu0 0.0
    %3274 = vmatpush2.msra.mxu0 0.0
    %3275 = vmatprep.subr.mxu0 0.0
    %3276 = vmatpush2.msra.mxu0 0.0
    %3277 = vmatprep.subr.mxu0 0.0
    %3278 = vmatpush2.msra.mxu0 0.0
    %3279 = vmatprep.subr.mxu0 0.0
    %3280 = vmatpush2.msra.mxu0 0.0
    %3281 = vmatprep.subr.mxu0 0.0
    %3282 = vmatpush2.msra.mxu0 0.0
    %3283 = vmatprep.subr.mxu0 0.0
    %3284 = vmatpush2.msra.mxu0 0.0
    %3285 = vmatprep.subr.mxu0 0.0
    %3286 = vmatpush2.msra.mxu0 0.0
    %3287 = vmatprep.subr.mxu0 0.0
    %3288 = vmatpush2.msra.mxu0 0.0
    %3289 = vmatprep.subr.mxu0 0.0
    %3290 = vmatpush2.msra.mxu0 0.0
    %3291 = vmatprep.subr.mxu0 0.0
    %3292 = vmatpush2.msra.mxu0 0.0
    %3293 = vmatprep.subr.mxu0 0.0
    %3294 = vmatpush2.msra.mxu0 0.0
    %3295 = vmatprep.subr.mxu0 0.0
    %3296 = vmatpush2.msra.mxu0 0.0
    %3297 = vmatprep.subr.mxu0 0.0
    %3298 = vmatpush2.msra.mxu0 0.0
    %3299 = vmatprep.mubr.f32.mxu0 0.0
    %3300 = vmatmul.mubr.f32.gmra.mxu0 %v3233
    %v3301 = vpop.f32.mrf.mxu0
    %v3302 = vadd.f32 0.0, %v3301
    %v3303 = vpop.f32.mrf.mxu0
    %3304 = vdwg.mxu0
    %v3306 = vsel %vm2089, %v2793, 0
    %3308 = vmatprep.subr.mxu0 0.0
    %3309 = vmatpush1.msra.mxu0 0.0
    %3310 = vmatprep.subr.mxu0 0.0
    %3311 = vmatpush1.msra.mxu0 0.0
    %3312 = vmatprep.subr.mxu0 0.0
    %3313 = vmatpush1.msra.mxu0 0.0
    %3314 = vmatprep.subr.mxu0 0.0
    %3315 = vmatpush1.msra.mxu0 0.0
    %3316 = vmatprep.subr.mxu0 0.0
    %3317 = vmatpush1.msra.mxu0 0.0
    %3318 = vmatprep.subr.mxu0 0.0
    %3319 = vmatpush1.msra.mxu0 0.0
    %3320 = vmatprep.subr.mxu0 0.0
    %3321 = vmatpush1.msra.mxu0 0.0
    %3322 = vmatprep.subr.mxu0 0.0
    %3323 = vmatpush1.msra.mxu0 0.0
    %3324 = vmatprep.subr.mxu0 0.0
    %3325 = vmatpush1.msra.mxu0 0.0
    %3326 = vmatprep.subr.mxu0 0.0
    %3327 = vmatpush1.msra.mxu0 0.0
    %3328 = vmatprep.subr.mxu0 0.0
    %3329 = vmatpush1.msra.mxu0 0.0
    %3330 = vmatprep.subr.mxu0 0.0
    %3331 = vmatpush1.msra.mxu0 0.0
    %3332 = vmatprep.subr.mxu0 0.0
    %3333 = vmatpush1.msra.mxu0 0.0
    %3334 = vmatprep.subr.mxu0 0.0
    %3335 = vmatpush1.msra.mxu0 0.0
    %3336 = vmatprep.subr.mxu0 0.0
    %3337 = vmatpush1.msra.mxu0 0.0
    %3338 = vmatprep.subr.mxu0 0.0
    %3339 = vmatpush1.msra.mxu0 %v2086
    %3340 = vmatprep.subr.mxu0 0.0
    %3341 = vmatpush2.msra.mxu0 0.0
    %3342 = vmatprep.subr.mxu0 0.0
    %3343 = vmatpush2.msra.mxu0 0.0
    %3344 = vmatprep.subr.mxu0 0.0
    %3345 = vmatpush2.msra.mxu0 0.0
    %3346 = vmatprep.subr.mxu0 0.0
    %3347 = vmatpush2.msra.mxu0 0.0
    %3348 = vmatprep.subr.mxu0 0.0
    %3349 = vmatpush2.msra.mxu0 0.0
    %3350 = vmatprep.subr.mxu0 0.0
    %3351 = vmatpush2.msra.mxu0 0.0
    %3352 = vmatprep.subr.mxu0 0.0
    %3353 = vmatpush2.msra.mxu0 0.0
    %3354 = vmatprep.subr.mxu0 0.0
    %3355 = vmatpush2.msra.mxu0 0.0
    %3356 = vmatprep.subr.mxu0 0.0
    %3357 = vmatpush2.msra.mxu0 0.0
    %3358 = vmatprep.subr.mxu0 0.0
    %3359 = vmatpush2.msra.mxu0 0.0
    %3360 = vmatprep.subr.mxu0 0.0
    %3361 = vmatpush2.msra.mxu0 0.0
    %3362 = vmatprep.subr.mxu0 0.0
    %3363 = vmatpush2.msra.mxu0 0.0
    %3364 = vmatprep.subr.mxu0 0.0
    %3365 = vmatpush2.msra.mxu0 0.0
    %3366 = vmatprep.subr.mxu0 0.0
    %3367 = vmatpush2.msra.mxu0 0.0
    %3368 = vmatprep.subr.mxu0 0.0
    %3369 = vmatpush2.msra.mxu0 0.0
    %3370 = vmatprep.subr.mxu0 0.0
    %3371 = vmatpush2.msra.mxu0 0.0
    %3372 = vmatprep.mubr.f32.mxu0 0.0
    %3373 = vmatmul.mubr.f32.gmra.mxu0 %v3306
    %v3374 = vpop.f32.mrf.mxu0
    %v3375 = vadd.f32 0.0, %v3374
    %v3376 = vpop.f32.mrf.mxu0
    %3377 = vdwg.mxu0
    %v3379 = vsel %vm2089, %v2864, 0
    %3381 = vmatprep.subr.mxu0 0.0
    %3382 = vmatpush1.msra.mxu0 0.0
    %3383 = vmatprep.subr.mxu0 0.0
    %3384 = vmatpush1.msra.mxu0 0.0
    %3385 = vmatprep.subr.mxu0 0.0
    %3386 = vmatpush1.msra.mxu0 0.0
    %3387 = vmatprep.subr.mxu0 0.0
    %3388 = vmatpush1.msra.mxu0 0.0
    %3389 = vmatprep.subr.mxu0 0.0
    %3390 = vmatpush1.msra.mxu0 0.0
    %3391 = vmatprep.subr.mxu0 0.0
    %3392 = vmatpush1.msra.mxu0 0.0
    %3393 = vmatprep.subr.mxu0 0.0
    %3394 = vmatpush1.msra.mxu0 0.0
    %3395 = vmatprep.subr.mxu0 0.0
    %3396 = vmatpush1.msra.mxu0 0.0
    %3397 = vmatprep.subr.mxu0 0.0
    %3398 = vmatpush1.msra.mxu0 0.0
    %3399 = vmatprep.subr.mxu0 0.0
    %3400 = vmatpush1.msra.mxu0 0.0
    %3401 = vmatprep.subr.mxu0 0.0
    %3402 = vmatpush1.msra.mxu0 0.0
    %3403 = vmatprep.subr.mxu0 0.0
    %3404 = vmatpush1.msra.mxu0 0.0
    %3405 = vmatprep.subr.mxu0 0.0
    %3406 = vmatpush1.msra.mxu0 0.0
    %3407 = vmatprep.subr.mxu0 0.0
    %3408 = vmatpush1.msra.mxu0 0.0
    %3409 = vmatprep.subr.mxu0 0.0
    %3410 = vmatpush1.msra.mxu0 0.0
    %3411 = vmatprep.subr.mxu0 0.0
    %3412 = vmatpush1.msra.mxu0 %v183
    %3413 = vmatprep.subr.mxu0 0.0
    %3414 = vmatpush2.msra.mxu0 0.0
    %3415 = vmatprep.subr.mxu0 0.0
    %3416 = vmatpush2.msra.mxu0 0.0
    %3417 = vmatprep.subr.mxu0 0.0
    %3418 = vmatpush2.msra.mxu0 0.0
    %3419 = vmatprep.subr.mxu0 0.0
    %3420 = vmatpush2.msra.mxu0 0.0
    %3421 = vmatprep.subr.mxu0 0.0
    %3422 = vmatpush2.msra.mxu0 0.0
    %3423 = vmatprep.subr.mxu0 0.0
    %3424 = vmatpush2.msra.mxu0 0.0
    %3425 = vmatprep.subr.mxu0 0.0
    %3426 = vmatpush2.msra.mxu0 0.0
    %3427 = vmatprep.subr.mxu0 0.0
    %3428 = vmatpush2.msra.mxu0 0.0
    %3429 = vmatprep.subr.mxu0 0.0
    %3430 = vmatpush2.msra.mxu0 0.0
    %3431 = vmatprep.subr.mxu0 0.0
    %3432 = vmatpush2.msra.mxu0 0.0
    %3433 = vmatprep.subr.mxu0 0.0
    %3434 = vmatpush2.msra.mxu0 0.0
    %3435 = vmatprep.subr.mxu0 0.0
    %3436 = vmatpush2.msra.mxu0 0.0
    %3437 = vmatprep.subr.mxu0 0.0
    %3438 = vmatpush2.msra.mxu0 0.0
    %3439 = vmatprep.subr.mxu0 0.0
    %3440 = vmatpush2.msra.mxu0 0.0
    %3441 = vmatprep.subr.mxu0 0.0
    %3442 = vmatpush2.msra.mxu0 0.0
    %3443 = vmatprep.subr.mxu0 0.0
    %3444 = vmatpush2.msra.mxu0 0.0
    %3445 = vmatprep.mubr.f32.mxu0 0.0
    %3446 = vmatmul.mubr.f32.gmra.mxu0 %v3379
    %v3447 = vpop.f32.mrf.mxu0
    %v3448 = vadd.f32 0.0, %v3447
    %v3449 = vpop.f32.mrf.mxu0
    %3450 = vdwg.mxu0
    %v3452 = vsel %vm2089, %v2937, 0
    %3454 = vmatprep.subr.mxu0 0.0
    %3455 = vmatpush1.msra.mxu0 0.0
    %3456 = vmatprep.subr.mxu0 0.0
    %3457 = vmatpush1.msra.mxu0 0.0
    %3458 = vmatprep.subr.mxu0 0.0
    %3459 = vmatpush1.msra.mxu0 0.0
    %3460 = vmatprep.subr.mxu0 0.0
    %3461 = vmatpush1.msra.mxu0 0.0
    %3462 = vmatprep.subr.mxu0 0.0
    %3463 = vmatpush1.msra.mxu0 0.0
    %3464 = vmatprep.subr.mxu0 0.0
    %3465 = vmatpush1.msra.mxu0 0.0
    %3466 = vmatprep.subr.mxu0 0.0
    %3467 = vmatpush1.msra.mxu0 0.0
    %3468 = vmatprep.subr.mxu0 0.0
    %3469 = vmatpush1.msra.mxu0 0.0
    %3470 = vmatprep.subr.mxu0 0.0
    %3471 = vmatpush1.msra.mxu0 0.0
    %3472 = vmatprep.subr.mxu0 0.0
    %3473 = vmatpush1.msra.mxu0 0.0
    %3474 = vmatprep.subr.mxu0 0.0
    %3475 = vmatpush1.msra.mxu0 0.0
    %3476 = vmatprep.subr.mxu0 0.0
    %3477 = vmatpush1.msra.mxu0 0.0
    %3478 = vmatprep.subr.mxu0 0.0
    %3479 = vmatpush1.msra.mxu0 0.0
    %3480 = vmatprep.subr.mxu0 0.0
    %3481 = vmatpush1.msra.mxu0 0.0
    %3482 = vmatprep.subr.mxu0 0.0
    %3483 = vmatpush1.msra.mxu0 0.0
    %3484 = vmatprep.subr.mxu0 0.0
    %3485 = vmatpush1.msra.mxu0 %v184
    %3486 = vmatprep.subr.mxu0 0.0
    %3487 = vmatpush2.msra.mxu0 0.0
    %3488 = vmatprep.subr.mxu0 0.0
    %3489 = vmatpush2.msra.mxu0 0.0
    %3490 = vmatprep.subr.mxu0 0.0
    %3491 = vmatpush2.msra.mxu0 0.0
    %3492 = vmatprep.subr.mxu0 0.0
    %3493 = vmatpush2.msra.mxu0 0.0
    %3494 = vmatprep.subr.mxu0 0.0
    %3495 = vmatpush2.msra.mxu0 0.0
    %3496 = vmatprep.subr.mxu0 0.0
    %3497 = vmatpush2.msra.mxu0 0.0
    %3498 = vmatprep.subr.mxu0 0.0
    %3499 = vmatpush2.msra.mxu0 0.0
    %3500 = vmatprep.subr.mxu0 0.0
    %3501 = vmatpush2.msra.mxu0 0.0
    %3502 = vmatprep.subr.mxu0 0.0
    %3503 = vmatpush2.msra.mxu0 0.0
    %3504 = vmatprep.subr.mxu0 0.0
    %3505 = vmatpush2.msra.mxu0 0.0
    %3506 = vmatprep.subr.mxu0 0.0
    %3507 = vmatpush2.msra.mxu0 0.0
    %3508 = vmatprep.subr.mxu0 0.0
    %3509 = vmatpush2.msra.mxu0 0.0
    %3510 = vmatprep.subr.mxu0 0.0
    %3511 = vmatpush2.msra.mxu0 0.0
    %3512 = vmatprep.subr.mxu0 0.0
    %3513 = vmatpush2.msra.mxu0 0.0
    %3514 = vmatprep.subr.mxu0 0.0
    %3515 = vmatpush2.msra.mxu0 0.0
    %3516 = vmatprep.subr.mxu0 0.0
    %3517 = vmatpush2.msra.mxu0 0.0
    %3518 = vmatprep.mubr.f32.mxu0 0.0
    %3519 = vmatmul.mubr.f32.gmra.mxu0 %v3452
    %v3520 = vpop.f32.mrf.mxu0
    %v3521 = vadd.f32 0.0, %v3520
    %v3522 = vpop.f32.mrf.mxu0
    %3523 = vdwg.mxu0
    %v3525 = vsel %vm2089, %v3010, 0
    %3527 = vmatprep.subr.mxu0 0.0
    %3528 = vmatpush1.msra.mxu0 0.0
    %3529 = vmatprep.subr.mxu0 0.0
    %3530 = vmatpush1.msra.mxu0 0.0
    %3531 = vmatprep.subr.mxu0 0.0
    %3532 = vmatpush1.msra.mxu0 0.0
    %3533 = vmatprep.subr.mxu0 0.0
    %3534 = vmatpush1.msra.mxu0 0.0
    %3535 = vmatprep.subr.mxu0 0.0
    %3536 = vmatpush1.msra.mxu0 0.0
    %3537 = vmatprep.subr.mxu0 0.0
    %3538 = vmatpush1.msra.mxu0 0.0
    %3539 = vmatprep.subr.mxu0 0.0
    %3540 = vmatpush1.msra.mxu0 0.0
    %3541 = vmatprep.subr.mxu0 0.0
    %3542 = vmatpush1.msra.mxu0 0.0
    %3543 = vmatprep.subr.mxu0 0.0
    %3544 = vmatpush1.msra.mxu0 0.0
    %3545 = vmatprep.subr.mxu0 0.0
    %3546 = vmatpush1.msra.mxu0 0.0
    %3547 = vmatprep.subr.mxu0 0.0
    %3548 = vmatpush1.msra.mxu0 0.0
    %3549 = vmatprep.subr.mxu0 0.0
    %3550 = vmatpush1.msra.mxu0 0.0
    %3551 = vmatprep.subr.mxu0 0.0
    %3552 = vmatpush1.msra.mxu0 0.0
    %3553 = vmatprep.subr.mxu0 0.0
    %3554 = vmatpush1.msra.mxu0 0.0
    %3555 = vmatprep.subr.mxu0 0.0
    %3556 = vmatpush1.msra.mxu0 0.0
    %3557 = vmatprep.subr.mxu0 0.0
    %3558 = vmatpush1.msra.mxu0 %v185
    %3559 = vmatprep.subr.mxu0 0.0
    %3560 = vmatpush2.msra.mxu0 0.0
    %3561 = vmatprep.subr.mxu0 0.0
    %3562 = vmatpush2.msra.mxu0 0.0
    %3563 = vmatprep.subr.mxu0 0.0
    %3564 = vmatpush2.msra.mxu0 0.0
    %3565 = vmatprep.subr.mxu0 0.0
    %3566 = vmatpush2.msra.mxu0 0.0
    %3567 = vmatprep.subr.mxu0 0.0
    %3568 = vmatpush2.msra.mxu0 0.0
    %3569 = vmatprep.subr.mxu0 0.0
    %3570 = vmatpush2.msra.mxu0 0.0
    %3571 = vmatprep.subr.mxu0 0.0
    %3572 = vmatpush2.msra.mxu0 0.0
    %3573 = vmatprep.subr.mxu0 0.0
    %3574 = vmatpush2.msra.mxu0 0.0
    %3575 = vmatprep.subr.mxu0 0.0
    %3576 = vmatpush2.msra.mxu0 0.0
    %3577 = vmatprep.subr.mxu0 0.0
    %3578 = vmatpush2.msra.mxu0 0.0
    %3579 = vmatprep.subr.mxu0 0.0
    %3580 = vmatpush2.msra.mxu0 0.0
    %3581 = vmatprep.subr.mxu0 0.0
    %3582 = vmatpush2.msra.mxu0 0.0
    %3583 = vmatprep.subr.mxu0 0.0
    %3584 = vmatpush2.msra.mxu0 0.0
    %3585 = vmatprep.subr.mxu0 0.0
    %3586 = vmatpush2.msra.mxu0 0.0
    %3587 = vmatprep.subr.mxu0 0.0
    %3588 = vmatpush2.msra.mxu0 0.0
    %3589 = vmatprep.subr.mxu0 0.0
    %3590 = vmatpush2.msra.mxu0 0.0
    %3591 = vmatprep.mubr.f32.mxu0 0.0
    %3592 = vmatmul.mubr.f32.gmra.mxu0 %v3525
    %v3593 = vpop.f32.mrf.mxu0
    %v3594 = vadd.f32 0.0, %v3593
    %v3595 = vpop.f32.mrf.mxu0
    %3596 = vdwg.mxu0
    %v3598 = vsel %vm2089, %v3083, 0
    %3600 = vmatprep.subr.mxu0 0.0
    %3601 = vmatpush1.msra.mxu0 0.0
    %3602 = vmatprep.subr.mxu0 0.0
    %3603 = vmatpush1.msra.mxu0 0.0
    %3604 = vmatprep.subr.mxu0 0.0
    %3605 = vmatpush1.msra.mxu0 0.0
    %3606 = vmatprep.subr.mxu0 0.0
    %3607 = vmatpush1.msra.mxu0 0.0
    %3608 = vmatprep.subr.mxu0 0.0
    %3609 = vmatpush1.msra.mxu0 0.0
    %3610 = vmatprep.subr.mxu0 0.0
    %3611 = vmatpush1.msra.mxu0 0.0
    %3612 = vmatprep.subr.mxu0 0.0
    %3613 = vmatpush1.msra.mxu0 0.0
    %3614 = vmatprep.subr.mxu0 0.0
    %3615 = vmatpush1.msra.mxu0 0.0
    %3616 = vmatprep.subr.mxu0 0.0
    %3617 = vmatpush1.msra.mxu0 0.0
    %3618 = vmatprep.subr.mxu0 0.0
    %3619 = vmatpush1.msra.mxu0 0.0
    %3620 = vmatprep.subr.mxu0 0.0
    %3621 = vmatpush1.msra.mxu0 0.0
    %3622 = vmatprep.subr.mxu0 0.0
    %3623 = vmatpush1.msra.mxu0 0.0
    %3624 = vmatprep.subr.mxu0 0.0
    %3625 = vmatpush1.msra.mxu0 0.0
    %3626 = vmatprep.subr.mxu0 0.0
    %3627 = vmatpush1.msra.mxu0 0.0
    %3628 = vmatprep.subr.mxu0 0.0
    %3629 = vmatpush1.msra.mxu0 0.0
    %3630 = vmatprep.subr.mxu0 0.0
    %3631 = vmatpush1.msra.mxu0 %v186
    %3632 = vmatprep.subr.mxu0 0.0
    %3633 = vmatpush2.msra.mxu0 0.0
    %3634 = vmatprep.subr.mxu0 0.0
    %3635 = vmatpush2.msra.mxu0 0.0
    %3636 = vmatprep.subr.mxu0 0.0
    %3637 = vmatpush2.msra.mxu0 0.0
    %3638 = vmatprep.subr.mxu0 0.0
    %3639 = vmatpush2.msra.mxu0 0.0
    %3640 = vmatprep.subr.mxu0 0.0
    %3641 = vmatpush2.msra.mxu0 0.0
    %3642 = vmatprep.subr.mxu0 0.0
    %3643 = vmatpush2.msra.mxu0 0.0
    %3644 = vmatprep.subr.mxu0 0.0
    %3645 = vmatpush2.msra.mxu0 0.0
    %3646 = vmatprep.subr.mxu0 0.0
    %3647 = vmatpush2.msra.mxu0 0.0
    %3648 = vmatprep.subr.mxu0 0.0
    %3649 = vmatpush2.msra.mxu0 0.0
    %3650 = vmatprep.subr.mxu0 0.0
    %3651 = vmatpush2.msra.mxu0 0.0
    %3652 = vmatprep.subr.mxu0 0.0
    %3653 = vmatpush2.msra.mxu0 0.0
    %3654 = vmatprep.subr.mxu0 0.0
    %3655 = vmatpush2.msra.mxu0 0.0
    %3656 = vmatprep.subr.mxu0 0.0
    %3657 = vmatpush2.msra.mxu0 0.0
    %3658 = vmatprep.subr.mxu0 0.0
    %3659 = vmatpush2.msra.mxu0 0.0
    %3660 = vmatprep.subr.mxu0 0.0
    %3661 = vmatpush2.msra.mxu0 0.0
    %3662 = vmatprep.subr.mxu0 0.0
    %3663 = vmatpush2.msra.mxu0 0.0
    %3664 = vmatprep.mubr.f32.mxu0 0.0
    %3665 = vmatmul.mubr.f32.gmra.mxu0 %v3598
    %v3666 = vpop.f32.mrf.mxu0
    %v3667 = vadd.f32 0.0, %v3666
    %v3668 = vpop.f32.mrf.mxu0
    %3669 = vdwg.mxu0
    %v3671 = vsel %vm2089, %v3156, 0
    %3673 = vmatprep.subr.mxu0 0.0
    %3674 = vmatpush1.msra.mxu0 0.0
    %3675 = vmatprep.subr.mxu0 0.0
    %3676 = vmatpush1.msra.mxu0 0.0
    %3677 = vmatprep.subr.mxu0 0.0
    %3678 = vmatpush1.msra.mxu0 0.0
    %3679 = vmatprep.subr.mxu0 0.0
    %3680 = vmatpush1.msra.mxu0 0.0
    %3681 = vmatprep.subr.mxu0 0.0
    %3682 = vmatpush1.msra.mxu0 0.0
    %3683 = vmatprep.subr.mxu0 0.0
    %3684 = vmatpush1.msra.mxu0 0.0
    %3685 = vmatprep.subr.mxu0 0.0
    %3686 = vmatpush1.msra.mxu0 0.0
    %3687 = vmatprep.subr.mxu0 0.0
    %3688 = vmatpush1.msra.mxu0 0.0
    %3689 = vmatprep.subr.mxu0 0.0
    %3690 = vmatpush1.msra.mxu0 0.0
    %3691 = vmatprep.subr.mxu0 0.0
    %3692 = vmatpush1.msra.mxu0 0.0
    %3693 = vmatprep.subr.mxu0 0.0
    %3694 = vmatpush1.msra.mxu0 0.0
    %3695 = vmatprep.subr.mxu0 0.0
    %3696 = vmatpush1.msra.mxu0 0.0
    %3697 = vmatprep.subr.mxu0 0.0
    %3698 = vmatpush1.msra.mxu0 0.0
    %3699 = vmatprep.subr.mxu0 0.0
    %3700 = vmatpush1.msra.mxu0 0.0
    %3701 = vmatprep.subr.mxu0 0.0
    %3702 = vmatpush1.msra.mxu0 0.0
    %3703 = vmatprep.subr.mxu0 0.0
    %3704 = vmatpush1.msra.mxu0 %v187
    %3705 = vmatprep.subr.mxu0 0.0
    %3706 = vmatpush2.msra.mxu0 0.0
    %3707 = vmatprep.subr.mxu0 0.0
    %3708 = vmatpush2.msra.mxu0 0.0
    %3709 = vmatprep.subr.mxu0 0.0
    %3710 = vmatpush2.msra.mxu0 0.0
    %3711 = vmatprep.subr.mxu0 0.0
    %3712 = vmatpush2.msra.mxu0 0.0
    %3713 = vmatprep.subr.mxu0 0.0
    %3714 = vmatpush2.msra.mxu0 0.0
    %3715 = vmatprep.subr.mxu0 0.0
    %3716 = vmatpush2.msra.mxu0 0.0
    %3717 = vmatprep.subr.mxu0 0.0
    %3718 = vmatpush2.msra.mxu0 0.0
    %3719 = vmatprep.subr.mxu0 0.0
    %3720 = vmatpush2.msra.mxu0 0.0
    %3721 = vmatprep.subr.mxu0 0.0
    %3722 = vmatpush2.msra.mxu0 0.0
    %3723 = vmatprep.subr.mxu0 0.0
    %3724 = vmatpush2.msra.mxu0 0.0
    %3725 = vmatprep.subr.mxu0 0.0
    %3726 = vmatpush2.msra.mxu0 0.0
    %3727 = vmatprep.subr.mxu0 0.0
    %3728 = vmatpush2.msra.mxu0 0.0
    %3729 = vmatprep.subr.mxu0 0.0
    %3730 = vmatpush2.msra.mxu0 0.0
    %3731 = vmatprep.subr.mxu0 0.0
    %3732 = vmatpush2.msra.mxu0 0.0
    %3733 = vmatprep.subr.mxu0 0.0
    %3734 = vmatpush2.msra.mxu0 0.0
    %3735 = vmatprep.subr.mxu0 0.0
    %3736 = vmatpush2.msra.mxu0 0.0
    %3737 = vmatprep.mubr.f32.mxu0 0.0
    %3738 = vmatmul.mubr.f32.gmra.mxu0 %v3671
    %v3739 = vpop.f32.mrf.mxu0
    %v3740 = vadd.f32 0.0, %v3739
    %v3741 = vpop.f32.mrf.mxu0
    %3742 = vdwg.mxu0
    %v3744 = vsel %vm2089, %v3229, 0
    %3746 = vmatprep.subr.mxu0 0.0
    %3747 = vmatpush1.msra.mxu0 0.0
    %3748 = vmatprep.subr.mxu0 0.0
    %3749 = vmatpush1.msra.mxu0 0.0
    %3750 = vmatprep.subr.mxu0 0.0
    %3751 = vmatpush1.msra.mxu0 0.0
    %3752 = vmatprep.subr.mxu0 0.0
    %3753 = vmatpush1.msra.mxu0 0.0
    %3754 = vmatprep.subr.mxu0 0.0
    %3755 = vmatpush1.msra.mxu0 0.0
    %3756 = vmatprep.subr.mxu0 0.0
    %3757 = vmatpush1.msra.mxu0 0.0
    %3758 = vmatprep.subr.mxu0 0.0
    %3759 = vmatpush1.msra.mxu0 0.0
    %3760 = vmatprep.subr.mxu0 0.0
    %3761 = vmatpush1.msra.mxu0 0.0
    %3762 = vmatprep.subr.mxu0 0.0
    %3763 = vmatpush1.msra.mxu0 0.0
    %3764 = vmatprep.subr.mxu0 0.0
    %3765 = vmatpush1.msra.mxu0 0.0
    %3766 = vmatprep.subr.mxu0 0.0
    %3767 = vmatpush1.msra.mxu0 0.0
    %3768 = vmatprep.subr.mxu0 0.0
    %3769 = vmatpush1.msra.mxu0 0.0
    %3770 = vmatprep.subr.mxu0 0.0
    %3771 = vmatpush1.msra.mxu0 0.0
    %3772 = vmatprep.subr.mxu0 0.0
    %3773 = vmatpush1.msra.mxu0 0.0
    %3774 = vmatprep.subr.mxu0 0.0
    %3775 = vmatpush1.msra.mxu0 0.0
    %3776 = vmatprep.subr.mxu0 0.0
    %3777 = vmatpush1.msra.mxu0 %v188
    %3778 = vmatprep.subr.mxu0 0.0
    %3779 = vmatpush2.msra.mxu0 0.0
    %3780 = vmatprep.subr.mxu0 0.0
    %3781 = vmatpush2.msra.mxu0 0.0
    %3782 = vmatprep.subr.mxu0 0.0
    %3783 = vmatpush2.msra.mxu0 0.0
    %3784 = vmatprep.subr.mxu0 0.0
    %3785 = vmatpush2.msra.mxu0 0.0
    %3786 = vmatprep.subr.mxu0 0.0
    %3787 = vmatpush2.msra.mxu0 0.0
    %3788 = vmatprep.subr.mxu0 0.0
    %3789 = vmatpush2.msra.mxu0 0.0
    %3790 = vmatprep.subr.mxu0 0.0
    %3791 = vmatpush2.msra.mxu0 0.0
    %3792 = vmatprep.subr.mxu0 0.0
    %3793 = vmatpush2.msra.mxu0 0.0
    %3794 = vmatprep.subr.mxu0 0.0
    %3795 = vmatpush2.msra.mxu0 0.0
    %3796 = vmatprep.subr.mxu0 0.0
    %3797 = vmatpush2.msra.mxu0 0.0
    %3798 = vmatprep.subr.mxu0 0.0
    %3799 = vmatpush2.msra.mxu0 0.0
    %3800 = vmatprep.subr.mxu0 0.0
    %3801 = vmatpush2.msra.mxu0 0.0
    %3802 = vmatprep.subr.mxu0 0.0
    %3803 = vmatpush2.msra.mxu0 0.0
    %3804 = vmatprep.subr.mxu0 0.0
    %3805 = vmatpush2.msra.mxu0 0.0
    %3806 = vmatprep.subr.mxu0 0.0
    %3807 = vmatpush2.msra.mxu0 0.0
    %3808 = vmatprep.subr.mxu0 0.0
    %3809 = vmatpush2.msra.mxu0 0.0
    %3810 = vmatprep.mubr.f32.mxu0 0.0
    %3811 = vmatmul.mubr.f32.gmra.mxu0 %v3744
    %v3812 = vpop.f32.mrf.mxu0
    %v3813 = vadd.f32 0.0, %v3812
    %v3814 = vpop.f32.mrf.mxu0
    %3815 = vdwg.mxu0
    %v3817 = vsel %vm2089, %v3302, 0
    %3819 = vmatprep.subr.mxu0 0.0
    %3820 = vmatpush1.msra.mxu0 0.0
    %3821 = vmatprep.subr.mxu0 0.0
    %3822 = vmatpush1.msra.mxu0 0.0
    %3823 = vmatprep.subr.mxu0 0.0
    %3824 = vmatpush1.msra.mxu0 0.0
    %3825 = vmatprep.subr.mxu0 0.0
    %3826 = vmatpush1.msra.mxu0 0.0
    %3827 = vmatprep.subr.mxu0 0.0
    %3828 = vmatpush1.msra.mxu0 0.0
    %3829 = vmatprep.subr.mxu0 0.0
    %3830 = vmatpush1.msra.mxu0 0.0
    %3831 = vmatprep.subr.mxu0 0.0
    %3832 = vmatpush1.msra.mxu0 0.0
    %3833 = vmatprep.subr.mxu0 0.0
    %3834 = vmatpush1.msra.mxu0 0.0
    %3835 = vmatprep.subr.mxu0 0.0
    %3836 = vmatpush1.msra.mxu0 0.0
    %3837 = vmatprep.subr.mxu0 0.0
    %3838 = vmatpush1.msra.mxu0 0.0
    %3839 = vmatprep.subr.mxu0 0.0
    %3840 = vmatpush1.msra.mxu0 0.0
    %3841 = vmatprep.subr.mxu0 0.0
    %3842 = vmatpush1.msra.mxu0 0.0
    %3843 = vmatprep.subr.mxu0 0.0
    %3844 = vmatpush1.msra.mxu0 0.0
    %3845 = vmatprep.subr.mxu0 0.0
    %3846 = vmatpush1.msra.mxu0 0.0
    %3847 = vmatprep.subr.mxu0 0.0
    %3848 = vmatpush1.msra.mxu0 0.0
    %3849 = vmatprep.subr.mxu0 0.0
    %3850 = vmatpush1.msra.mxu0 %v189
    %3851 = vmatprep.subr.mxu0 0.0
    %3852 = vmatpush2.msra.mxu0 0.0
    %3853 = vmatprep.subr.mxu0 0.0
    %3854 = vmatpush2.msra.mxu0 0.0
    %3855 = vmatprep.subr.mxu0 0.0
    %3856 = vmatpush2.msra.mxu0 0.0
    %3857 = vmatprep.subr.mxu0 0.0
    %3858 = vmatpush2.msra.mxu0 0.0
    %3859 = vmatprep.subr.mxu0 0.0
    %3860 = vmatpush2.msra.mxu0 0.0
    %3861 = vmatprep.subr.mxu0 0.0
    %3862 = vmatpush2.msra.mxu0 0.0
    %3863 = vmatprep.subr.mxu0 0.0
    %3864 = vmatpush2.msra.mxu0 0.0
    %3865 = vmatprep.subr.mxu0 0.0
    %3866 = vmatpush2.msra.mxu0 0.0
    %3867 = vmatprep.subr.mxu0 0.0
    %3868 = vmatpush2.msra.mxu0 0.0
    %3869 = vmatprep.subr.mxu0 0.0
    %3870 = vmatpush2.msra.mxu0 0.0
    %3871 = vmatprep.subr.mxu0 0.0
    %3872 = vmatpush2.msra.mxu0 0.0
    %3873 = vmatprep.subr.mxu0 0.0
    %3874 = vmatpush2.msra.mxu0 0.0
    %3875 = vmatprep.subr.mxu0 0.0
    %3876 = vmatpush2.msra.mxu0 0.0
    %3877 = vmatprep.subr.mxu0 0.0
    %3878 = vmatpush2.msra.mxu0 0.0
    %3879 = vmatprep.subr.mxu0 0.0
    %3880 = vmatpush2.msra.mxu0 0.0
    %3881 = vmatprep.subr.mxu0 0.0
    %3882 = vmatpush2.msra.mxu0 0.0
    %3883 = vmatprep.mubr.f32.mxu0 0.0
    %3884 = vmatmul.mubr.f32.gmra.mxu0 %v3817
    %v3885 = vpop.f32.mrf.mxu0
    %v3886 = vadd.f32 0.0, %v3885
    %v3887 = vpop.f32.mrf.mxu0
    %3888 = vdwg.mxu0
    %v3890 = vsel %vm2089, %v3375, 0
    %3892 = vmatprep.subr.mxu0 0.0
    %3893 = vmatpush1.msra.mxu0 0.0
    %3894 = vmatprep.subr.mxu0 0.0
    %3895 = vmatpush1.msra.mxu0 0.0
    %3896 = vmatprep.subr.mxu0 0.0
    %3897 = vmatpush1.msra.mxu0 0.0
    %3898 = vmatprep.subr.mxu0 0.0
    %3899 = vmatpush1.msra.mxu0 0.0
    %3900 = vmatprep.subr.mxu0 0.0
    %3901 = vmatpush1.msra.mxu0 0.0
    %3902 = vmatprep.subr.mxu0 0.0
    %3903 = vmatpush1.msra.mxu0 0.0
    %3904 = vmatprep.subr.mxu0 0.0
    %3905 = vmatpush1.msra.mxu0 0.0
    %3906 = vmatprep.subr.mxu0 0.0
    %3907 = vmatpush1.msra.mxu0 0.0
    %3908 = vmatprep.subr.mxu0 0.0
    %3909 = vmatpush1.msra.mxu0 0.0
    %3910 = vmatprep.subr.mxu0 0.0
    %3911 = vmatpush1.msra.mxu0 0.0
    %3912 = vmatprep.subr.mxu0 0.0
    %3913 = vmatpush1.msra.mxu0 0.0
    %3914 = vmatprep.subr.mxu0 0.0
    %3915 = vmatpush1.msra.mxu0 0.0
    %3916 = vmatprep.subr.mxu0 0.0
    %3917 = vmatpush1.msra.mxu0 0.0
    %3918 = vmatprep.subr.mxu0 0.0
    %3919 = vmatpush1.msra.mxu0 0.0
    %3920 = vmatprep.subr.mxu0 0.0
    %3921 = vmatpush1.msra.mxu0 0.0
    %3922 = vmatprep.subr.mxu0 0.0
    %3923 = vmatpush1.msra.mxu0 %v190
    %3924 = vmatprep.subr.mxu0 0.0
    %3925 = vmatpush2.msra.mxu0 0.0
    %3926 = vmatprep.subr.mxu0 0.0
    %3927 = vmatpush2.msra.mxu0 0.0
    %3928 = vmatprep.subr.mxu0 0.0
    %3929 = vmatpush2.msra.mxu0 0.0
    %3930 = vmatprep.subr.mxu0 0.0
    %3931 = vmatpush2.msra.mxu0 0.0
    %3932 = vmatprep.subr.mxu0 0.0
    %3933 = vmatpush2.msra.mxu0 0.0
    %3934 = vmatprep.subr.mxu0 0.0
    %3935 = vmatpush2.msra.mxu0 0.0
    %3936 = vmatprep.subr.mxu0 0.0
    %3937 = vmatpush2.msra.mxu0 0.0
    %3938 = vmatprep.subr.mxu0 0.0
    %3939 = vmatpush2.msra.mxu0 0.0
    %3940 = vmatprep.subr.mxu0 0.0
    %3941 = vmatpush2.msra.mxu0 0.0
    %3942 = vmatprep.subr.mxu0 0.0
    %3943 = vmatpush2.msra.mxu0 0.0
    %3944 = vmatprep.subr.mxu0 0.0
    %3945 = vmatpush2.msra.mxu0 0.0
    %3946 = vmatprep.subr.mxu0 0.0
    %3947 = vmatpush2.msra.mxu0 0.0
    %3948 = vmatprep.subr.mxu0 0.0
    %3949 = vmatpush2.msra.mxu0 0.0
    %3950 = vmatprep.subr.mxu0 0.0
    %3951 = vmatpush2.msra.mxu0 0.0
    %3952 = vmatprep.subr.mxu0 0.0
    %3953 = vmatpush2.msra.mxu0 0.0
    %3954 = vmatprep.subr.mxu0 0.0
    %3955 = vmatpush2.msra.mxu0 0.0
    %3956 = vmatprep.mubr.f32.mxu0 0.0
    %3957 = vmatmul.mubr.f32.gmra.mxu0 %v3890
    %v3958 = vpop.f32.mrf.mxu0
    %v3959 = vadd.f32 0.0, %v3958
    %v3960 = vpop.f32.mrf.mxu0
    %3961 = vdwg.mxu0
    %v3962 = vsel %vm240, %v3448, 0.0
    %v3963 = vsel %vm240, %v3521, 0.0
    %v3964 = vadd.f32 %v3962, %v3963
    %v3965 = vsel %vm240, %v3594, 0.0
    %v3966 = vadd.f32 %v3964, %v3965
    %v3967 = vsel %vm240, %v3667, 0.0
    %v3968 = vadd.f32 %v3966, %v3967
    %v3969 = vsel %vm240, %v3740, 0.0
    %v3970 = vsel %vm240, %v3813, 0.0
    %v3971 = vadd.f32 %v3969, %v3970
    %v3972 = vsel %vm240, %v3886, 0.0
    %v3973 = vadd.f32 %v3971, %v3972
    %v3974 = vsel %vm240, %v3959, 0.0
    %v3975 = vadd.f32 %v3973, %v3974
    %v3977 = vlaneseq
    %v3978 = vshrl.u32 %v3977, 7
    %v3979 = vsub.s32 0, %v3978
    %v3980 = vrot.slane %v191, %v3979
    %v3982 = vadd.f32 %v3968, %v3980
    %v3983 = vadd.f32 %v3975, %v3980
    %3984 = vst.msk [vmem:[#allocation2] sm:$0xff] %vm240, %v3982
    %3985 = vst.msk [vmem:[#allocation2 + $0x8] sm:$0xff] %vm240, %v3983
    // Predicated region
    $region46: #{tpu_custom_call.1} parent=1 // pred_check
      _
    $region47: #{tpu_custom_call.1} parent=1 // pred_check_branch
      %3987 = sbr.rel (0) target = $region49
    $region48: #{tpu_custom_call.1} parent=1 // pred_region
      %s3989 = ssub.s32 256, 256
      %3990 = vsyncadd [#allocation3], %s3989
      %s3991 = sshll.u32 [#allocation2], 4
      %s3992 = int_to_ptr.vmem [resolvable:$true] %s3991
      %3997 = dma.vmem_to_hbm [thread:$0]  %s3992, 256, %s11, [#allocation3], 128, 128, 8
    $region49: #{tpu_custom_call.1} parent=1 // pred_fallthru
      _
    // Predicated region
    $region50: #{tpu_custom_call.1} parent=1 // pred_check
      _
    $region51: #{tpu_custom_call.1} parent=1 // pred_check_branch
      %3999 = sbr.rel (0) target = $region53
    $region52: #{tpu_custom_call.1} parent=1 // pred_region
      %4000 = dma.done [#allocation3], 256
    $region53: #{tpu_custom_call.1} parent=1 // pred_fallthru
      _
    %4001 = vsyncpa [#allocation3], 1

</llo_original>
